<compile_context>
chip_gen: v7x
topology: tpu7x:2x2x1
jax: 0.10.0
libtpu: 0.0.40
codegen_flags: <defaults>
</compile_context>

<pallas_src>
import jax
import jax.numpy as jnp
from jax.experimental import pallas as pl
from jax.experimental.pallas import tpu as pltpu


def _make_rb_kernel(Wp):
    """Build the RB kernel for images whose padded width is Wp (static)."""

    def conv3x3(a, w, C, NL):
        # a: (C, NL)  padded-flat activations (zero border per image, zero lane filler)
        # w: (C_out, 9*C_in), column k = (dy*3 + dx)*C_in + c_in
        # returns (C_out, NL); only interior lanes are meaningful (caller masks/crops).
        offs = [(dy - 1) * Wp + (dx - 1) for dy in range(3) for dx in range(3)]

        if C >= 32:
            # Large-C path: one K=9*C MXU contraction (single matmul per conv).
            taps = [a if o == 0 else pltpu.roll(a, (-o) % NL, axis=1) for o in offs]
            rmat = jnp.concatenate(taps, axis=0)                       # (9*C, NL)
            return jnp.dot(w, rmat, preferred_element_type=jnp.float32)

        # Small-C path: VPU broadcast-multiply-accumulate (skip the MXU entirely).
        acc = None
        for t, o in enumerate(offs):
            # lane shift by `o`: rolled[i] == a[i + o] for all valid (interior) lanes
            xs = a if o == 0 else pltpu.roll(a, (-o) % NL, axis=1)     # (C, NL), XLU
            for cin in range(C):
                k = t * C + cin
                term = w[:, k:k + 1] * xs[cin:cin + 1, :]              # (C,1)*(1,NL)->(C,NL)
                acc = term if acc is None else acc + term
        return acc

    def kernel(x_ref, w1_ref, w2_ref, mask_ref, out_ref):
        # x_ref   : (C, NL)   padded-flat input, NL % 128 == 0 (lane-dense)
        # w1_ref  : (C, 9*C)  conv01 weights
        # w2_ref  : (C, 9*C)  conv02 weights
        # mask_ref: (1, NL)   1.0 at interior pixels, 0.0 at borders / lane filler
        # out_ref : (C, NL)   conv2(lrelu(conv1(x))) + x on the padded-flat grid
        C, NL = x_ref.shape
        x = x_ref[...].astype(jnp.float32)
        w1 = w1_ref[...].astype(jnp.float32)
        w2 = w2_ref[...].astype(jnp.float32)
        mask = mask_ref[...].astype(jnp.float32)

        h = conv3x3(x, w1, C, NL)
        h = jnp.where(h > 0, h, 0.1 * h)   # LeakyReLU(0.1), f32 on the VPU (v5e-safe)
        h = h * mask                       # re-establish zero padding for conv2 in-register
        y = conv3x3(h, w2, C, NL)
        # residual add straight from the already-loaded input slab; border lanes are
        # garbage but get cropped in the wrapper.
        out_ref[...] = (y + x).astype(out_ref.dtype)

    return kernel


def rb_forward(x_nchw, w1, w2):
    """x_nchw: (N, C, H, W) float32; w1, w2: (3, 3, C, C) HWIO (bias-free 3x3 convs)."""
    N, C, H, W = x_nchw.shape
    Hp, Wp = H + 2, W + 2
    L = Hp * Wp
    Lp = ((L + 127) // 128) * 128          # lane-dense per-image stride

    # ---- layout plumbing (wrapper side): NCHW -> (C, N*Lp) channel rows / flat lanes
    xpad = jnp.pad(x_nchw, ((0, 0), (0, 0), (1, 1), (1, 1)))        # (N, C, Hp, Wp)
    xflat = xpad.reshape(N, C, L)
    xflat = jnp.pad(xflat, ((0, 0), (0, 0), (0, Lp - L)))           # (N, C, Lp)
    xflat = jnp.transpose(xflat, (1, 0, 2)).reshape(C, N * Lp)      # (C, N*Lp)

    # weights: HWIO (3,3,Cin,Cout) -> (Cout, 9*Cin), column k = (dy*3+dx)*Cin + cin
    w1m = jnp.transpose(w1.reshape(9 * C, C), (1, 0))
    w2m = jnp.transpose(w2.reshape(9 * C, C), (1, 0))

    # interior-pixel mask on the padded-flat grid (1.0 inside, 0.0 on border / filler)
    pos = jnp.arange(Lp)
    yy, xx = pos // Wp, pos % Wp
    m = ((pos < L) & (yy >= 1) & (yy <= H) & (xx >= 1) & (xx <= W)).astype(x_nchw.dtype)
    mask = jnp.tile(m, N).reshape(1, N * Lp)

    # Fold the whole (tiny) batch into the lane axis of a single grid step.
    # TODO(synk): for large N / large images, chunk the batch (NB | N) and/or tile rows
    # with a 2-row halo along the lane axis to respect v7x's 64 MiB VMEM.
    NB = N
    NL = NB * Lp
    grid = (N // NB,)

    out_flat = pl.pallas_call(
        _make_rb_kernel(Wp),
        out_shape=jax.ShapeDtypeStruct((C, N * Lp), x_nchw.dtype),
        grid_spec=pltpu.PrefetchScalarGridSpec(
            num_scalar_prefetch=0,
            grid=grid,
            in_specs=[
                pl.BlockSpec((C, NL), lambda i: (0, i)),          # activations
                pl.BlockSpec((C, 9 * C), lambda i: (0, 0)),       # conv01 weights
                pl.BlockSpec((C, 9 * C), lambda i: (0, 0)),       # conv02 weights
                pl.BlockSpec((1, NL), lambda i: (0, i)),          # interior mask
            ],
            out_specs=pl.BlockSpec((C, NL), lambda i: (0, i)),    # lane-dense output slab
        ),
        compiler_params=pltpu.CompilerParams(
            dimension_semantics=("parallel",),
            vmem_limit_bytes=16 * 1024 * 1024,
        ),
    )(xflat, w1m, w2m, mask)

    # unpack: drop lane filler, drop the 1-px border, back to NCHW
    out = out_flat.reshape(C, N, Lp)[:, :, :L].reshape(C, N, Hp, Wp)
    out = out[:, :, 1:1 + H, 1:1 + W]
    return jnp.transpose(out, (1, 0, 2, 3))


def rb_reference(x_nchw, w1, w2):
    """Pure-JAX reference (lax conv) for correctness checking."""
    x = jnp.transpose(x_nchw, (0, 2, 3, 1))
    dn = jax.lax.conv_dimension_numbers(x.shape, w1.shape, ("NHWC", "HWIO", "NHWC"))
    b = jax.lax.conv_general_dilated(x, w1, (1, 1), "SAME", dimension_numbers=dn)
    b = jnp.where(b > 0, b, 0.1 * b)
    b = jax.lax.conv_general_dilated(b, w2, (1, 1), "SAME", dimension_numbers=dn)
    out = b + x
    return jnp.transpose(out, (0, 3, 1, 2))


if __name__ == "__main__":
    N, C, H, W = 2, 4, 16, 16
    key = jax.random.PRNGKey(0)
    kx, k1, k2 = jax.random.split(key, 3)

    x = jax.random.normal(kx, (N, C, H, W), dtype=jnp.float32)
    # deterministic synthetic weights (~kaiming-ish scale), HWIO layout, no bias
    scale = 1.0 / jnp.sqrt(9.0 * C)
    w1 = jax.random.normal(k1, (3, 3, C, C), dtype=jnp.float32) * scale
    w2 = jax.random.normal(k2, (3, 3, C, C), dtype=jnp.float32) * scale

    out = jax.block_until_ready(rb_forward(x, w1, w2))
    ref = rb_reference(x, w1, w2)

    assert out.shape == (N, C, H, W)
    assert jnp.allclose(out, ref, rtol=1e-4, atol=1e-4), "mismatch vs reference"

    print("KERNEL_OK")
</pallas_src>

<mosaic_0001>
module attributes {stable_mosaic.version = 11 : i64} {
  func.func @kernel(%arg0: i32, %arg1: memref<4x768xf32, #tpu.memory_space<vmem>>, %arg2: memref<4x36xf32, #tpu.memory_space<vmem>>, %arg3: memref<4x36xf32, #tpu.memory_space<vmem>>, %arg4: memref<1x768xf32, #tpu.memory_space<vmem>>, %arg5: memref<4x768xf32, #tpu.memory_space<vmem>>) attributes {dimension_semantics = [#tpu.dimension_semantics<parallel>], iteration_bounds = array<i64: 1>, scalar_prefetch = 0 : i64, scratch_operands = 0 : i64, tpu.core_type = #tpu.core_type<tc>, window_params = [{transform_indices = @transform_0, window_bounds = array<i64: 4, 768>}, {pipeline_mode = #tpu.pipeline_mode<synchronous>, transform_indices = @transform_1, window_bounds = array<i64: 4, 36>}, {pipeline_mode = #tpu.pipeline_mode<synchronous>, transform_indices = @transform_2, window_bounds = array<i64: 4, 36>}, {transform_indices = @transform_3, window_bounds = array<i64: 1, 768>}, {transform_indices = @transform_4, window_bounds = array<i64: 4, 768>}]} {
    %c0 = arith.constant 0 : index
    %c0_0 = arith.constant 0 : index
    %0 = vector.load %arg1[%c0, %c0_0] : memref<4x768xf32, #tpu.memory_space<vmem>>, vector<4x768xf32>
    %c0_1 = arith.constant 0 : index
    %c0_2 = arith.constant 0 : index
    %1 = vector.load %arg2[%c0_1, %c0_2] : memref<4x36xf32, #tpu.memory_space<vmem>>, vector<4x36xf32>
    %c0_3 = arith.constant 0 : index
    %c0_4 = arith.constant 0 : index
    %2 = vector.load %arg3[%c0_3, %c0_4] : memref<4x36xf32, #tpu.memory_space<vmem>>, vector<4x36xf32>
    %c0_5 = arith.constant 0 : index
    %c0_6 = arith.constant 0 : index
    %3 = vector.load %arg4[%c0_5, %c0_6] : memref<1x768xf32, #tpu.memory_space<vmem>>, vector<1x768xf32>
    %c19_i32 = arith.constant 19 : i32
    %4 = tpu.dynamic_rotate %0 by %c19_i32 dim 1 : vector<4x768xf32>, i32 -> vector<4x768xf32>
    %5 = vector.extract_strided_slice %1 {offsets = [0, 0], sizes = [4, 1], strides = [1, 1]} : vector<4x36xf32> to vector<4x1xf32>
    %6 = vector.extract_strided_slice %4 {offsets = [0, 0], sizes = [1, 768], strides = [1, 1]} : vector<4x768xf32> to vector<1x768xf32>
    %7 = vector.broadcast %5 : vector<4x1xf32> to vector<4x768xf32>
    %8 = vector.broadcast %6 : vector<1x768xf32> to vector<4x768xf32>
    %9 = arith.mulf %7, %8 : vector<4x768xf32>
    %10 = vector.extract_strided_slice %1 {offsets = [0, 1], sizes = [4, 1], strides = [1, 1]} : vector<4x36xf32> to vector<4x1xf32>
    %11 = vector.extract_strided_slice %4 {offsets = [1, 0], sizes = [1, 768], strides = [1, 1]} : vector<4x768xf32> to vector<1x768xf32>
    %12 = vector.broadcast %10 : vector<4x1xf32> to vector<4x768xf32>
    %13 = vector.broadcast %11 : vector<1x768xf32> to vector<4x768xf32>
    %14 = arith.mulf %12, %13 : vector<4x768xf32>
    %15 = arith.addf %9, %14 : vector<4x768xf32>
    %16 = vector.extract_strided_slice %1 {offsets = [0, 2], sizes = [4, 1], strides = [1, 1]} : vector<4x36xf32> to vector<4x1xf32>
    %17 = vector.extract_strided_slice %4 {offsets = [2, 0], sizes = [1, 768], strides = [1, 1]} : vector<4x768xf32> to vector<1x768xf32>
    %18 = vector.broadcast %16 : vector<4x1xf32> to vector<4x768xf32>
    %19 = vector.broadcast %17 : vector<1x768xf32> to vector<4x768xf32>
    %20 = arith.mulf %18, %19 : vector<4x768xf32>
    %21 = arith.addf %15, %20 : vector<4x768xf32>
    %22 = vector.extract_strided_slice %1 {offsets = [0, 3], sizes = [4, 1], strides = [1, 1]} : vector<4x36xf32> to vector<4x1xf32>
    %23 = vector.extract_strided_slice %4 {offsets = [3, 0], sizes = [1, 768], strides = [1, 1]} : vector<4x768xf32> to vector<1x768xf32>
    %24 = vector.broadcast %22 : vector<4x1xf32> to vector<4x768xf32>
    %25 = vector.broadcast %23 : vector<1x768xf32> to vector<4x768xf32>
    %26 = arith.mulf %24, %25 : vector<4x768xf32>
    %27 = arith.addf %21, %26 : vector<4x768xf32>
    %c18_i32 = arith.constant 18 : i32
    %28 = tpu.dynamic_rotate %0 by %c18_i32 dim 1 : vector<4x768xf32>, i32 -> vector<4x768xf32>
    %29 = vector.extract_strided_slice %1 {offsets = [0, 4], sizes = [4, 1], strides = [1, 1]} : vector<4x36xf32> to vector<4x1xf32>
    %30 = vector.extract_strided_slice %28 {offsets = [0, 0], sizes = [1, 768], strides = [1, 1]} : vector<4x768xf32> to vector<1x768xf32>
    %31 = vector.broadcast %29 : vector<4x1xf32> to vector<4x768xf32>
    %32 = vector.broadcast %30 : vector<1x768xf32> to vector<4x768xf32>
    %33 = arith.mulf %31, %32 : vector<4x768xf32>
    %34 = arith.addf %27, %33 : vector<4x768xf32>
    %35 = vector.extract_strided_slice %1 {offsets = [0, 5], sizes = [4, 1], strides = [1, 1]} : vector<4x36xf32> to vector<4x1xf32>
    %36 = vector.extract_strided_slice %28 {offsets = [1, 0], sizes = [1, 768], strides = [1, 1]} : vector<4x768xf32> to vector<1x768xf32>
    %37 = vector.broadcast %35 : vector<4x1xf32> to vector<4x768xf32>
    %38 = vector.broadcast %36 : vector<1x768xf32> to vector<4x768xf32>
    %39 = arith.mulf %37, %38 : vector<4x768xf32>
    %40 = arith.addf %34, %39 : vector<4x768xf32>
    %41 = vector.extract_strided_slice %1 {offsets = [0, 6], sizes = [4, 1], strides = [1, 1]} : vector<4x36xf32> to vector<4x1xf32>
    %42 = vector.extract_strided_slice %28 {offsets = [2, 0], sizes = [1, 768], strides = [1, 1]} : vector<4x768xf32> to vector<1x768xf32>
    %43 = vector.broadcast %41 : vector<4x1xf32> to vector<4x768xf32>
    %44 = vector.broadcast %42 : vector<1x768xf32> to vector<4x768xf32>
    %45 = arith.mulf %43, %44 : vector<4x768xf32>
    %46 = arith.addf %40, %45 : vector<4x768xf32>
    %47 = vector.extract_strided_slice %1 {offsets = [0, 7], sizes = [4, 1], strides = [1, 1]} : vector<4x36xf32> to vector<4x1xf32>
    %48 = vector.extract_strided_slice %28 {offsets = [3, 0], sizes = [1, 768], strides = [1, 1]} : vector<4x768xf32> to vector<1x768xf32>
    %49 = vector.broadcast %47 : vector<4x1xf32> to vector<4x768xf32>
    %50 = vector.broadcast %48 : vector<1x768xf32> to vector<4x768xf32>
    %51 = arith.mulf %49, %50 : vector<4x768xf32>
    %52 = arith.addf %46, %51 : vector<4x768xf32>
    %c17_i32 = arith.constant 17 : i32
    %53 = tpu.dynamic_rotate %0 by %c17_i32 dim 1 : vector<4x768xf32>, i32 -> vector<4x768xf32>
    %54 = vector.extract_strided_slice %1 {offsets = [0, 8], sizes = [4, 1], strides = [1, 1]} : vector<4x36xf32> to vector<4x1xf32>
    %55 = vector.extract_strided_slice %53 {offsets = [0, 0], sizes = [1, 768], strides = [1, 1]} : vector<4x768xf32> to vector<1x768xf32>
    %56 = vector.broadcast %54 : vector<4x1xf32> to vector<4x768xf32>
    %57 = vector.broadcast %55 : vector<1x768xf32> to vector<4x768xf32>
    %58 = arith.mulf %56, %57 : vector<4x768xf32>
    %59 = arith.addf %52, %58 : vector<4x768xf32>
    %60 = vector.extract_strided_slice %1 {offsets = [0, 9], sizes = [4, 1], strides = [1, 1]} : vector<4x36xf32> to vector<4x1xf32>
    %61 = vector.extract_strided_slice %53 {offsets = [1, 0], sizes = [1, 768], strides = [1, 1]} : vector<4x768xf32> to vector<1x768xf32>
    %62 = vector.broadcast %60 : vector<4x1xf32> to vector<4x768xf32>
    %63 = vector.broadcast %61 : vector<1x768xf32> to vector<4x768xf32>
    %64 = arith.mulf %62, %63 : vector<4x768xf32>
    %65 = arith.addf %59, %64 : vector<4x768xf32>
    %66 = vector.extract_strided_slice %1 {offsets = [0, 10], sizes = [4, 1], strides = [1, 1]} : vector<4x36xf32> to vector<4x1xf32>
    %67 = vector.extract_strided_slice %53 {offsets = [2, 0], sizes = [1, 768], strides = [1, 1]} : vector<4x768xf32> to vector<1x768xf32>
    %68 = vector.broadcast %66 : vector<4x1xf32> to vector<4x768xf32>
    %69 = vector.broadcast %67 : vector<1x768xf32> to vector<4x768xf32>
    %70 = arith.mulf %68, %69 : vector<4x768xf32>
    %71 = arith.addf %65, %70 : vector<4x768xf32>
    %72 = vector.extract_strided_slice %1 {offsets = [0, 11], sizes = [4, 1], strides = [1, 1]} : vector<4x36xf32> to vector<4x1xf32>
    %73 = vector.extract_strided_slice %53 {offsets = [3, 0], sizes = [1, 768], strides = [1, 1]} : vector<4x768xf32> to vector<1x768xf32>
    %74 = vector.broadcast %72 : vector<4x1xf32> to vector<4x768xf32>
    %75 = vector.broadcast %73 : vector<1x768xf32> to vector<4x768xf32>
    %76 = arith.mulf %74, %75 : vector<4x768xf32>
    %77 = arith.addf %71, %76 : vector<4x768xf32>
    %c1_i32 = arith.constant 1 : i32
    %78 = tpu.dynamic_rotate %0 by %c1_i32 dim 1 : vector<4x768xf32>, i32 -> vector<4x768xf32>
    %79 = vector.extract_strided_slice %1 {offsets = [0, 12], sizes = [4, 1], strides = [1, 1]} : vector<4x36xf32> to vector<4x1xf32>
    %80 = vector.extract_strided_slice %78 {offsets = [0, 0], sizes = [1, 768], strides = [1, 1]} : vector<4x768xf32> to vector<1x768xf32>
    %81 = vector.broadcast %79 : vector<4x1xf32> to vector<4x768xf32>
    %82 = vector.broadcast %80 : vector<1x768xf32> to vector<4x768xf32>
    %83 = arith.mulf %81, %82 : vector<4x768xf32>
    %84 = arith.addf %77, %83 : vector<4x768xf32>
    %85 = vector.extract_strided_slice %1 {offsets = [0, 13], sizes = [4, 1], strides = [1, 1]} : vector<4x36xf32> to vector<4x1xf32>
    %86 = vector.extract_strided_slice %78 {offsets = [1, 0], sizes = [1, 768], strides = [1, 1]} : vector<4x768xf32> to vector<1x768xf32>
    %87 = vector.broadcast %85 : vector<4x1xf32> to vector<4x768xf32>
    %88 = vector.broadcast %86 : vector<1x768xf32> to vector<4x768xf32>
    %89 = arith.mulf %87, %88 : vector<4x768xf32>
    %90 = arith.addf %84, %89 : vector<4x768xf32>
    %91 = vector.extract_strided_slice %1 {offsets = [0, 14], sizes = [4, 1], strides = [1, 1]} : vector<4x36xf32> to vector<4x1xf32>
    %92 = vector.extract_strided_slice %78 {offsets = [2, 0], sizes = [1, 768], strides = [1, 1]} : vector<4x768xf32> to vector<1x768xf32>
    %93 = vector.broadcast %91 : vector<4x1xf32> to vector<4x768xf32>
    %94 = vector.broadcast %92 : vector<1x768xf32> to vector<4x768xf32>
    %95 = arith.mulf %93, %94 : vector<4x768xf32>
    %96 = arith.addf %90, %95 : vector<4x768xf32>
    %97 = vector.extract_strided_slice %1 {offsets = [0, 15], sizes = [4, 1], strides = [1, 1]} : vector<4x36xf32> to vector<4x1xf32>
    %98 = vector.extract_strided_slice %78 {offsets = [3, 0], sizes = [1, 768], strides = [1, 1]} : vector<4x768xf32> to vector<1x768xf32>
    %99 = vector.broadcast %97 : vector<4x1xf32> to vector<4x768xf32>
    %100 = vector.broadcast %98 : vector<1x768xf32> to vector<4x768xf32>
    %101 = arith.mulf %99, %100 : vector<4x768xf32>
    %102 = arith.addf %96, %101 : vector<4x768xf32>
    %103 = vector.extract_strided_slice %1 {offsets = [0, 16], sizes = [4, 1], strides = [1, 1]} : vector<4x36xf32> to vector<4x1xf32>
    %104 = vector.extract_strided_slice %0 {offsets = [0, 0], sizes = [1, 768], strides = [1, 1]} : vector<4x768xf32> to vector<1x768xf32>
    %105 = vector.broadcast %103 : vector<4x1xf32> to vector<4x768xf32>
    %106 = vector.broadcast %104 : vector<1x768xf32> to vector<4x768xf32>
    %107 = arith.mulf %105, %106 : vector<4x768xf32>
    %108 = arith.addf %102, %107 : vector<4x768xf32>
    %109 = vector.extract_strided_slice %1 {offsets = [0, 17], sizes = [4, 1], strides = [1, 1]} : vector<4x36xf32> to vector<4x1xf32>
    %110 = vector.extract_strided_slice %0 {offsets = [1, 0], sizes = [1, 768], strides = [1, 1]} : vector<4x768xf32> to vector<1x768xf32>
    %111 = vector.broadcast %109 : vector<4x1xf32> to vector<4x768xf32>
    %112 = vector.broadcast %110 : vector<1x768xf32> to vector<4x768xf32>
    %113 = arith.mulf %111, %112 : vector<4x768xf32>
    %114 = arith.addf %108, %113 : vector<4x768xf32>
    %115 = vector.extract_strided_slice %1 {offsets = [0, 18], sizes = [4, 1], strides = [1, 1]} : vector<4x36xf32> to vector<4x1xf32>
    %116 = vector.extract_strided_slice %0 {offsets = [2, 0], sizes = [1, 768], strides = [1, 1]} : vector<4x768xf32> to vector<1x768xf32>
    %117 = vector.broadcast %115 : vector<4x1xf32> to vector<4x768xf32>
    %118 = vector.broadcast %116 : vector<1x768xf32> to vector<4x768xf32>
    %119 = arith.mulf %117, %118 : vector<4x768xf32>
    %120 = arith.addf %114, %119 : vector<4x768xf32>
    %121 = vector.extract_strided_slice %1 {offsets = [0, 19], sizes = [4, 1], strides = [1, 1]} : vector<4x36xf32> to vector<4x1xf32>
    %122 = vector.extract_strided_slice %0 {offsets = [3, 0], sizes = [1, 768], strides = [1, 1]} : vector<4x768xf32> to vector<1x768xf32>
    %123 = vector.broadcast %121 : vector<4x1xf32> to vector<4x768xf32>
    %124 = vector.broadcast %122 : vector<1x768xf32> to vector<4x768xf32>
    %125 = arith.mulf %123, %124 : vector<4x768xf32>
    %126 = arith.addf %120, %125 : vector<4x768xf32>
    %c767_i32 = arith.constant 767 : i32
    %127 = tpu.dynamic_rotate %0 by %c767_i32 dim 1 : vector<4x768xf32>, i32 -> vector<4x768xf32>
    %128 = vector.extract_strided_slice %1 {offsets = [0, 20], sizes = [4, 1], strides = [1, 1]} : vector<4x36xf32> to vector<4x1xf32>
    %129 = vector.extract_strided_slice %127 {offsets = [0, 0], sizes = [1, 768], strides = [1, 1]} : vector<4x768xf32> to vector<1x768xf32>
    %130 = vector.broadcast %128 : vector<4x1xf32> to vector<4x768xf32>
    %131 = vector.broadcast %129 : vector<1x768xf32> to vector<4x768xf32>
    %132 = arith.mulf %130, %131 : vector<4x768xf32>
    %133 = arith.addf %126, %132 : vector<4x768xf32>
    %134 = vector.extract_strided_slice %1 {offsets = [0, 21], sizes = [4, 1], strides = [1, 1]} : vector<4x36xf32> to vector<4x1xf32>
    %135 = vector.extract_strided_slice %127 {offsets = [1, 0], sizes = [1, 768], strides = [1, 1]} : vector<4x768xf32> to vector<1x768xf32>
    %136 = vector.broadcast %134 : vector<4x1xf32> to vector<4x768xf32>
    %137 = vector.broadcast %135 : vector<1x768xf32> to vector<4x768xf32>
    %138 = arith.mulf %136, %137 : vector<4x768xf32>
    %139 = arith.addf %133, %138 : vector<4x768xf32>
    %140 = vector.extract_strided_slice %1 {offsets = [0, 22], sizes = [4, 1], strides = [1, 1]} : vector<4x36xf32> to vector<4x1xf32>
    %141 = vector.extract_strided_slice %127 {offsets = [2, 0], sizes = [1, 768], strides = [1, 1]} : vector<4x768xf32> to vector<1x768xf32>
    %142 = vector.broadcast %140 : vector<4x1xf32> to vector<4x768xf32>
    %143 = vector.broadcast %141 : vector<1x768xf32> to vector<4x768xf32>
    %144 = arith.mulf %142, %143 : vector<4x768xf32>
    %145 = arith.addf %139, %144 : vector<4x768xf32>
    %146 = vector.extract_strided_slice %1 {offsets = [0, 23], sizes = [4, 1], strides = [1, 1]} : vector<4x36xf32> to vector<4x1xf32>
    %147 = vector.extract_strided_slice %127 {offsets = [3, 0], sizes = [1, 768], strides = [1, 1]} : vector<4x768xf32> to vector<1x768xf32>
    %148 = vector.broadcast %146 : vector<4x1xf32> to vector<4x768xf32>
    %149 = vector.broadcast %147 : vector<1x768xf32> to vector<4x768xf32>
    %150 = arith.mulf %148, %149 : vector<4x768xf32>
    %151 = arith.addf %145, %150 : vector<4x768xf32>
    %c751_i32 = arith.constant 751 : i32
    %152 = tpu.dynamic_rotate %0 by %c751_i32 dim 1 : vector<4x768xf32>, i32 -> vector<4x768xf32>
    %153 = vector.extract_strided_slice %1 {offsets = [0, 24], sizes = [4, 1], strides = [1, 1]} : vector<4x36xf32> to vector<4x1xf32>
    %154 = vector.extract_strided_slice %152 {offsets = [0, 0], sizes = [1, 768], strides = [1, 1]} : vector<4x768xf32> to vector<1x768xf32>
    %155 = vector.broadcast %153 : vector<4x1xf32> to vector<4x768xf32>
    %156 = vector.broadcast %154 : vector<1x768xf32> to vector<4x768xf32>
    %157 = arith.mulf %155, %156 : vector<4x768xf32>
    %158 = arith.addf %151, %157 : vector<4x768xf32>
    %159 = vector.extract_strided_slice %1 {offsets = [0, 25], sizes = [4, 1], strides = [1, 1]} : vector<4x36xf32> to vector<4x1xf32>
    %160 = vector.extract_strided_slice %152 {offsets = [1, 0], sizes = [1, 768], strides = [1, 1]} : vector<4x768xf32> to vector<1x768xf32>
    %161 = vector.broadcast %159 : vector<4x1xf32> to vector<4x768xf32>
    %162 = vector.broadcast %160 : vector<1x768xf32> to vector<4x768xf32>
    %163 = arith.mulf %161, %162 : vector<4x768xf32>
    %164 = arith.addf %158, %163 : vector<4x768xf32>
    %165 = vector.extract_strided_slice %1 {offsets = [0, 26], sizes = [4, 1], strides = [1, 1]} : vector<4x36xf32> to vector<4x1xf32>
    %166 = vector.extract_strided_slice %152 {offsets = [2, 0], sizes = [1, 768], strides = [1, 1]} : vector<4x768xf32> to vector<1x768xf32>
    %167 = vector.broadcast %165 : vector<4x1xf32> to vector<4x768xf32>
    %168 = vector.broadcast %166 : vector<1x768xf32> to vector<4x768xf32>
    %169 = arith.mulf %167, %168 : vector<4x768xf32>
    %170 = arith.addf %164, %169 : vector<4x768xf32>
    %171 = vector.extract_strided_slice %1 {offsets = [0, 27], sizes = [4, 1], strides = [1, 1]} : vector<4x36xf32> to vector<4x1xf32>
    %172 = vector.extract_strided_slice %152 {offsets = [3, 0], sizes = [1, 768], strides = [1, 1]} : vector<4x768xf32> to vector<1x768xf32>
    %173 = vector.broadcast %171 : vector<4x1xf32> to vector<4x768xf32>
    %174 = vector.broadcast %172 : vector<1x768xf32> to vector<4x768xf32>
    %175 = arith.mulf %173, %174 : vector<4x768xf32>
    %176 = arith.addf %170, %175 : vector<4x768xf32>
    %c750_i32 = arith.constant 750 : i32
    %177 = tpu.dynamic_rotate %0 by %c750_i32 dim 1 : vector<4x768xf32>, i32 -> vector<4x768xf32>
    %178 = vector.extract_strided_slice %1 {offsets = [0, 28], sizes = [4, 1], strides = [1, 1]} : vector<4x36xf32> to vector<4x1xf32>
    %179 = vector.extract_strided_slice %177 {offsets = [0, 0], sizes = [1, 768], strides = [1, 1]} : vector<4x768xf32> to vector<1x768xf32>
    %180 = vector.broadcast %178 : vector<4x1xf32> to vector<4x768xf32>
    %181 = vector.broadcast %179 : vector<1x768xf32> to vector<4x768xf32>
    %182 = arith.mulf %180, %181 : vector<4x768xf32>
    %183 = arith.addf %176, %182 : vector<4x768xf32>
    %184 = vector.extract_strided_slice %1 {offsets = [0, 29], sizes = [4, 1], strides = [1, 1]} : vector<4x36xf32> to vector<4x1xf32>
    %185 = vector.extract_strided_slice %177 {offsets = [1, 0], sizes = [1, 768], strides = [1, 1]} : vector<4x768xf32> to vector<1x768xf32>
    %186 = vector.broadcast %184 : vector<4x1xf32> to vector<4x768xf32>
    %187 = vector.broadcast %185 : vector<1x768xf32> to vector<4x768xf32>
    %188 = arith.mulf %186, %187 : vector<4x768xf32>
    %189 = arith.addf %183, %188 : vector<4x768xf32>
    %190 = vector.extract_strided_slice %1 {offsets = [0, 30], sizes = [4, 1], strides = [1, 1]} : vector<4x36xf32> to vector<4x1xf32>
    %191 = vector.extract_strided_slice %177 {offsets = [2, 0], sizes = [1, 768], strides = [1, 1]} : vector<4x768xf32> to vector<1x768xf32>
    %192 = vector.broadcast %190 : vector<4x1xf32> to vector<4x768xf32>
    %193 = vector.broadcast %191 : vector<1x768xf32> to vector<4x768xf32>
    %194 = arith.mulf %192, %193 : vector<4x768xf32>
    %195 = arith.addf %189, %194 : vector<4x768xf32>
    %196 = vector.extract_strided_slice %1 {offsets = [0, 31], sizes = [4, 1], strides = [1, 1]} : vector<4x36xf32> to vector<4x1xf32>
    %197 = vector.extract_strided_slice %177 {offsets = [3, 0], sizes = [1, 768], strides = [1, 1]} : vector<4x768xf32> to vector<1x768xf32>
    %198 = vector.broadcast %196 : vector<4x1xf32> to vector<4x768xf32>
    %199 = vector.broadcast %197 : vector<1x768xf32> to vector<4x768xf32>
    %200 = arith.mulf %198, %199 : vector<4x768xf32>
    %201 = arith.addf %195, %200 : vector<4x768xf32>
    %c749_i32 = arith.constant 749 : i32
    %202 = tpu.dynamic_rotate %0 by %c749_i32 dim 1 : vector<4x768xf32>, i32 -> vector<4x768xf32>
    %203 = vector.extract_strided_slice %1 {offsets = [0, 32], sizes = [4, 1], strides = [1, 1]} : vector<4x36xf32> to vector<4x1xf32>
    %204 = vector.extract_strided_slice %202 {offsets = [0, 0], sizes = [1, 768], strides = [1, 1]} : vector<4x768xf32> to vector<1x768xf32>
    %205 = vector.broadcast %203 : vector<4x1xf32> to vector<4x768xf32>
    %206 = vector.broadcast %204 : vector<1x768xf32> to vector<4x768xf32>
    %207 = arith.mulf %205, %206 : vector<4x768xf32>
    %208 = arith.addf %201, %207 : vector<4x768xf32>
    %209 = vector.extract_strided_slice %1 {offsets = [0, 33], sizes = [4, 1], strides = [1, 1]} : vector<4x36xf32> to vector<4x1xf32>
    %210 = vector.extract_strided_slice %202 {offsets = [1, 0], sizes = [1, 768], strides = [1, 1]} : vector<4x768xf32> to vector<1x768xf32>
    %211 = vector.broadcast %209 : vector<4x1xf32> to vector<4x768xf32>
    %212 = vector.broadcast %210 : vector<1x768xf32> to vector<4x768xf32>
    %213 = arith.mulf %211, %212 : vector<4x768xf32>
    %214 = arith.addf %208, %213 : vector<4x768xf32>
    %215 = vector.extract_strided_slice %1 {offsets = [0, 34], sizes = [4, 1], strides = [1, 1]} : vector<4x36xf32> to vector<4x1xf32>
    %216 = vector.extract_strided_slice %202 {offsets = [2, 0], sizes = [1, 768], strides = [1, 1]} : vector<4x768xf32> to vector<1x768xf32>
    %217 = vector.broadcast %215 : vector<4x1xf32> to vector<4x768xf32>
    %218 = vector.broadcast %216 : vector<1x768xf32> to vector<4x768xf32>
    %219 = arith.mulf %217, %218 : vector<4x768xf32>
    %220 = arith.addf %214, %219 : vector<4x768xf32>
    %221 = vector.extract_strided_slice %1 {offsets = [0, 35], sizes = [4, 1], strides = [1, 1]} : vector<4x36xf32> to vector<4x1xf32>
    %222 = vector.extract_strided_slice %202 {offsets = [3, 0], sizes = [1, 768], strides = [1, 1]} : vector<4x768xf32> to vector<1x768xf32>
    %223 = vector.broadcast %221 : vector<4x1xf32> to vector<4x768xf32>
    %224 = vector.broadcast %222 : vector<1x768xf32> to vector<4x768xf32>
    %225 = arith.mulf %223, %224 : vector<4x768xf32>
    %226 = arith.addf %220, %225 : vector<4x768xf32>
    %cst = arith.constant 0.000000e+00 : f32
    %227 = vector.broadcast %cst : f32 to vector<4x768xf32>
    %228 = arith.cmpf ogt, %226, %227 : vector<4x768xf32>
    %cst_7 = arith.constant 1.000000e-01 : f32
    %229 = vector.broadcast %cst_7 : f32 to vector<4x768xf32>
    %230 = arith.mulf %229, %226 : vector<4x768xf32>
    %231 = arith.select %228, %226, %230 : vector<4x768xi1>, vector<4x768xf32>
    %232 = vector.broadcast %3 : vector<1x768xf32> to vector<4x768xf32>
    %233 = arith.mulf %231, %232 : vector<4x768xf32>
    %c19_i32_8 = arith.constant 19 : i32
    %234 = tpu.dynamic_rotate %233 by %c19_i32_8 dim 1 : vector<4x768xf32>, i32 -> vector<4x768xf32>
    %235 = vector.extract_strided_slice %2 {offsets = [0, 0], sizes = [4, 1], strides = [1, 1]} : vector<4x36xf32> to vector<4x1xf32>
    %236 = vector.extract_strided_slice %234 {offsets = [0, 0], sizes = [1, 768], strides = [1, 1]} : vector<4x768xf32> to vector<1x768xf32>
    %237 = vector.broadcast %235 : vector<4x1xf32> to vector<4x768xf32>
    %238 = vector.broadcast %236 : vector<1x768xf32> to vector<4x768xf32>
    %239 = arith.mulf %237, %238 : vector<4x768xf32>
    %240 = vector.extract_strided_slice %2 {offsets = [0, 1], sizes = [4, 1], strides = [1, 1]} : vector<4x36xf32> to vector<4x1xf32>
    %241 = vector.extract_strided_slice %234 {offsets = [1, 0], sizes = [1, 768], strides = [1, 1]} : vector<4x768xf32> to vector<1x768xf32>
    %242 = vector.broadcast %240 : vector<4x1xf32> to vector<4x768xf32>
    %243 = vector.broadcast %241 : vector<1x768xf32> to vector<4x768xf32>
    %244 = arith.mulf %242, %243 : vector<4x768xf32>
    %245 = arith.addf %239, %244 : vector<4x768xf32>
    %246 = vector.extract_strided_slice %2 {offsets = [0, 2], sizes = [4, 1], strides = [1, 1]} : vector<4x36xf32> to vector<4x1xf32>
    %247 = vector.extract_strided_slice %234 {offsets = [2, 0], sizes = [1, 768], strides = [1, 1]} : vector<4x768xf32> to vector<1x768xf32>
    %248 = vector.broadcast %246 : vector<4x1xf32> to vector<4x768xf32>
    %249 = vector.broadcast %247 : vector<1x768xf32> to vector<4x768xf32>
    %250 = arith.mulf %248, %249 : vector<4x768xf32>
    %251 = arith.addf %245, %250 : vector<4x768xf32>
    %252 = vector.extract_strided_slice %2 {offsets = [0, 3], sizes = [4, 1], strides = [1, 1]} : vector<4x36xf32> to vector<4x1xf32>
    %253 = vector.extract_strided_slice %234 {offsets = [3, 0], sizes = [1, 768], strides = [1, 1]} : vector<4x768xf32> to vector<1x768xf32>
    %254 = vector.broadcast %252 : vector<4x1xf32> to vector<4x768xf32>
    %255 = vector.broadcast %253 : vector<1x768xf32> to vector<4x768xf32>
    %256 = arith.mulf %254, %255 : vector<4x768xf32>
    %257 = arith.addf %251, %256 : vector<4x768xf32>
    %c18_i32_9 = arith.constant 18 : i32
    %258 = tpu.dynamic_rotate %233 by %c18_i32_9 dim 1 : vector<4x768xf32>, i32 -> vector<4x768xf32>
    %259 = vector.extract_strided_slice %2 {offsets = [0, 4], sizes = [4, 1], strides = [1, 1]} : vector<4x36xf32> to vector<4x1xf32>
    %260 = vector.extract_strided_slice %258 {offsets = [0, 0], sizes = [1, 768], strides = [1, 1]} : vector<4x768xf32> to vector<1x768xf32>
    %261 = vector.broadcast %259 : vector<4x1xf32> to vector<4x768xf32>
    %262 = vector.broadcast %260 : vector<1x768xf32> to vector<4x768xf32>
    %263 = arith.mulf %261, %262 : vector<4x768xf32>
    %264 = arith.addf %257, %263 : vector<4x768xf32>
    %265 = vector.extract_strided_slice %2 {offsets = [0, 5], sizes = [4, 1], strides = [1, 1]} : vector<4x36xf32> to vector<4x1xf32>
    %266 = vector.extract_strided_slice %258 {offsets = [1, 0], sizes = [1, 768], strides = [1, 1]} : vector<4x768xf32> to vector<1x768xf32>
    %267 = vector.broadcast %265 : vector<4x1xf32> to vector<4x768xf32>
    %268 = vector.broadcast %266 : vector<1x768xf32> to vector<4x768xf32>
    %269 = arith.mulf %267, %268 : vector<4x768xf32>
    %270 = arith.addf %264, %269 : vector<4x768xf32>
    %271 = vector.extract_strided_slice %2 {offsets = [0, 6], sizes = [4, 1], strides = [1, 1]} : vector<4x36xf32> to vector<4x1xf32>
    %272 = vector.extract_strided_slice %258 {offsets = [2, 0], sizes = [1, 768], strides = [1, 1]} : vector<4x768xf32> to vector<1x768xf32>
    %273 = vector.broadcast %271 : vector<4x1xf32> to vector<4x768xf32>
    %274 = vector.broadcast %272 : vector<1x768xf32> to vector<4x768xf32>
    %275 = arith.mulf %273, %274 : vector<4x768xf32>
    %276 = arith.addf %270, %275 : vector<4x768xf32>
    %277 = vector.extract_strided_slice %2 {offsets = [0, 7], sizes = [4, 1], strides = [1, 1]} : vector<4x36xf32> to vector<4x1xf32>
    %278 = vector.extract_strided_slice %258 {offsets = [3, 0], sizes = [1, 768], strides = [1, 1]} : vector<4x768xf32> to vector<1x768xf32>
    %279 = vector.broadcast %277 : vector<4x1xf32> to vector<4x768xf32>
    %280 = vector.broadcast %278 : vector<1x768xf32> to vector<4x768xf32>
    %281 = arith.mulf %279, %280 : vector<4x768xf32>
    %282 = arith.addf %276, %281 : vector<4x768xf32>
    %c17_i32_10 = arith.constant 17 : i32
    %283 = tpu.dynamic_rotate %233 by %c17_i32_10 dim 1 : vector<4x768xf32>, i32 -> vector<4x768xf32>
    %284 = vector.extract_strided_slice %2 {offsets = [0, 8], sizes = [4, 1], strides = [1, 1]} : vector<4x36xf32> to vector<4x1xf32>
    %285 = vector.extract_strided_slice %283 {offsets = [0, 0], sizes = [1, 768], strides = [1, 1]} : vector<4x768xf32> to vector<1x768xf32>
    %286 = vector.broadcast %284 : vector<4x1xf32> to vector<4x768xf32>
    %287 = vector.broadcast %285 : vector<1x768xf32> to vector<4x768xf32>
    %288 = arith.mulf %286, %287 : vector<4x768xf32>
    %289 = arith.addf %282, %288 : vector<4x768xf32>
    %290 = vector.extract_strided_slice %2 {offsets = [0, 9], sizes = [4, 1], strides = [1, 1]} : vector<4x36xf32> to vector<4x1xf32>
    %291 = vector.extract_strided_slice %283 {offsets = [1, 0], sizes = [1, 768], strides = [1, 1]} : vector<4x768xf32> to vector<1x768xf32>
    %292 = vector.broadcast %290 : vector<4x1xf32> to vector<4x768xf32>
    %293 = vector.broadcast %291 : vector<1x768xf32> to vector<4x768xf32>
    %294 = arith.mulf %292, %293 : vector<4x768xf32>
    %295 = arith.addf %289, %294 : vector<4x768xf32>
    %296 = vector.extract_strided_slice %2 {offsets = [0, 10], sizes = [4, 1], strides = [1, 1]} : vector<4x36xf32> to vector<4x1xf32>
    %297 = vector.extract_strided_slice %283 {offsets = [2, 0], sizes = [1, 768], strides = [1, 1]} : vector<4x768xf32> to vector<1x768xf32>
    %298 = vector.broadcast %296 : vector<4x1xf32> to vector<4x768xf32>
    %299 = vector.broadcast %297 : vector<1x768xf32> to vector<4x768xf32>
    %300 = arith.mulf %298, %299 : vector<4x768xf32>
    %301 = arith.addf %295, %300 : vector<4x768xf32>
    %302 = vector.extract_strided_slice %2 {offsets = [0, 11], sizes = [4, 1], strides = [1, 1]} : vector<4x36xf32> to vector<4x1xf32>
    %303 = vector.extract_strided_slice %283 {offsets = [3, 0], sizes = [1, 768], strides = [1, 1]} : vector<4x768xf32> to vector<1x768xf32>
    %304 = vector.broadcast %302 : vector<4x1xf32> to vector<4x768xf32>
    %305 = vector.broadcast %303 : vector<1x768xf32> to vector<4x768xf32>
    %306 = arith.mulf %304, %305 : vector<4x768xf32>
    %307 = arith.addf %301, %306 : vector<4x768xf32>
    %c1_i32_11 = arith.constant 1 : i32
    %308 = tpu.dynamic_rotate %233 by %c1_i32_11 dim 1 : vector<4x768xf32>, i32 -> vector<4x768xf32>
    %309 = vector.extract_strided_slice %2 {offsets = [0, 12], sizes = [4, 1], strides = [1, 1]} : vector<4x36xf32> to vector<4x1xf32>
    %310 = vector.extract_strided_slice %308 {offsets = [0, 0], sizes = [1, 768], strides = [1, 1]} : vector<4x768xf32> to vector<1x768xf32>
    %311 = vector.broadcast %309 : vector<4x1xf32> to vector<4x768xf32>
    %312 = vector.broadcast %310 : vector<1x768xf32> to vector<4x768xf32>
    %313 = arith.mulf %311, %312 : vector<4x768xf32>
    %314 = arith.addf %307, %313 : vector<4x768xf32>
    %315 = vector.extract_strided_slice %2 {offsets = [0, 13], sizes = [4, 1], strides = [1, 1]} : vector<4x36xf32> to vector<4x1xf32>
    %316 = vector.extract_strided_slice %308 {offsets = [1, 0], sizes = [1, 768], strides = [1, 1]} : vector<4x768xf32> to vector<1x768xf32>
    %317 = vector.broadcast %315 : vector<4x1xf32> to vector<4x768xf32>
    %318 = vector.broadcast %316 : vector<1x768xf32> to vector<4x768xf32>
    %319 = arith.mulf %317, %318 : vector<4x768xf32>
    %320 = arith.addf %314, %319 : vector<4x768xf32>
    %321 = vector.extract_strided_slice %2 {offsets = [0, 14], sizes = [4, 1], strides = [1, 1]} : vector<4x36xf32> to vector<4x1xf32>
    %322 = vector.extract_strided_slice %308 {offsets = [2, 0], sizes = [1, 768], strides = [1, 1]} : vector<4x768xf32> to vector<1x768xf32>
    %323 = vector.broadcast %321 : vector<4x1xf32> to vector<4x768xf32>
    %324 = vector.broadcast %322 : vector<1x768xf32> to vector<4x768xf32>
    %325 = arith.mulf %323, %324 : vector<4x768xf32>
    %326 = arith.addf %320, %325 : vector<4x768xf32>
    %327 = vector.extract_strided_slice %2 {offsets = [0, 15], sizes = [4, 1], strides = [1, 1]} : vector<4x36xf32> to vector<4x1xf32>
    %328 = vector.extract_strided_slice %308 {offsets = [3, 0], sizes = [1, 768], strides = [1, 1]} : vector<4x768xf32> to vector<1x768xf32>
    %329 = vector.broadcast %327 : vector<4x1xf32> to vector<4x768xf32>
    %330 = vector.broadcast %328 : vector<1x768xf32> to vector<4x768xf32>
    %331 = arith.mulf %329, %330 : vector<4x768xf32>
    %332 = arith.addf %326, %331 : vector<4x768xf32>
    %333 = vector.extract_strided_slice %2 {offsets = [0, 16], sizes = [4, 1], strides = [1, 1]} : vector<4x36xf32> to vector<4x1xf32>
    %334 = vector.extract_strided_slice %233 {offsets = [0, 0], sizes = [1, 768], strides = [1, 1]} : vector<4x768xf32> to vector<1x768xf32>
    %335 = vector.broadcast %333 : vector<4x1xf32> to vector<4x768xf32>
    %336 = vector.broadcast %334 : vector<1x768xf32> to vector<4x768xf32>
    %337 = arith.mulf %335, %336 : vector<4x768xf32>
    %338 = arith.addf %332, %337 : vector<4x768xf32>
    %339 = vector.extract_strided_slice %2 {offsets = [0, 17], sizes = [4, 1], strides = [1, 1]} : vector<4x36xf32> to vector<4x1xf32>
    %340 = vector.extract_strided_slice %233 {offsets = [1, 0], sizes = [1, 768], strides = [1, 1]} : vector<4x768xf32> to vector<1x768xf32>
    %341 = vector.broadcast %339 : vector<4x1xf32> to vector<4x768xf32>
    %342 = vector.broadcast %340 : vector<1x768xf32> to vector<4x768xf32>
    %343 = arith.mulf %341, %342 : vector<4x768xf32>
    %344 = arith.addf %338, %343 : vector<4x768xf32>
    %345 = vector.extract_strided_slice %2 {offsets = [0, 18], sizes = [4, 1], strides = [1, 1]} : vector<4x36xf32> to vector<4x1xf32>
    %346 = vector.extract_strided_slice %233 {offsets = [2, 0], sizes = [1, 768], strides = [1, 1]} : vector<4x768xf32> to vector<1x768xf32>
    %347 = vector.broadcast %345 : vector<4x1xf32> to vector<4x768xf32>
    %348 = vector.broadcast %346 : vector<1x768xf32> to vector<4x768xf32>
    %349 = arith.mulf %347, %348 : vector<4x768xf32>
    %350 = arith.addf %344, %349 : vector<4x768xf32>
    %351 = vector.extract_strided_slice %2 {offsets = [0, 19], sizes = [4, 1], strides = [1, 1]} : vector<4x36xf32> to vector<4x1xf32>
    %352 = vector.extract_strided_slice %233 {offsets = [3, 0], sizes = [1, 768], strides = [1, 1]} : vector<4x768xf32> to vector<1x768xf32>
    %353 = vector.broadcast %351 : vector<4x1xf32> to vector<4x768xf32>
    %354 = vector.broadcast %352 : vector<1x768xf32> to vector<4x768xf32>
    %355 = arith.mulf %353, %354 : vector<4x768xf32>
    %356 = arith.addf %350, %355 : vector<4x768xf32>
    %c767_i32_12 = arith.constant 767 : i32
    %357 = tpu.dynamic_rotate %233 by %c767_i32_12 dim 1 : vector<4x768xf32>, i32 -> vector<4x768xf32>
    %358 = vector.extract_strided_slice %2 {offsets = [0, 20], sizes = [4, 1], strides = [1, 1]} : vector<4x36xf32> to vector<4x1xf32>
    %359 = vector.extract_strided_slice %357 {offsets = [0, 0], sizes = [1, 768], strides = [1, 1]} : vector<4x768xf32> to vector<1x768xf32>
    %360 = vector.broadcast %358 : vector<4x1xf32> to vector<4x768xf32>
    %361 = vector.broadcast %359 : vector<1x768xf32> to vector<4x768xf32>
    %362 = arith.mulf %360, %361 : vector<4x768xf32>
    %363 = arith.addf %356, %362 : vector<4x768xf32>
    %364 = vector.extract_strided_slice %2 {offsets = [0, 21], sizes = [4, 1], strides = [1, 1]} : vector<4x36xf32> to vector<4x1xf32>
    %365 = vector.extract_strided_slice %357 {offsets = [1, 0], sizes = [1, 768], strides = [1, 1]} : vector<4x768xf32> to vector<1x768xf32>
    %366 = vector.broadcast %364 : vector<4x1xf32> to vector<4x768xf32>
    %367 = vector.broadcast %365 : vector<1x768xf32> to vector<4x768xf32>
    %368 = arith.mulf %366, %367 : vector<4x768xf32>
    %369 = arith.addf %363, %368 : vector<4x768xf32>
    %370 = vector.extract_strided_slice %2 {offsets = [0, 22], sizes = [4, 1], strides = [1, 1]} : vector<4x36xf32> to vector<4x1xf32>
    %371 = vector.extract_strided_slice %357 {offsets = [2, 0], sizes = [1, 768], strides = [1, 1]} : vector<4x768xf32> to vector<1x768xf32>
    %372 = vector.broadcast %370 : vector<4x1xf32> to vector<4x768xf32>
    %373 = vector.broadcast %371 : vector<1x768xf32> to vector<4x768xf32>
    %374 = arith.mulf %372, %373 : vector<4x768xf32>
    %375 = arith.addf %369, %374 : vector<4x768xf32>
    %376 = vector.extract_strided_slice %2 {offsets = [0, 23], sizes = [4, 1], strides = [1, 1]} : vector<4x36xf32> to vector<4x1xf32>
    %377 = vector.extract_strided_slice %357 {offsets = [3, 0], sizes = [1, 768], strides = [1, 1]} : vector<4x768xf32> to vector<1x768xf32>
    %378 = vector.broadcast %376 : vector<4x1xf32> to vector<4x768xf32>
    %379 = vector.broadcast %377 : vector<1x768xf32> to vector<4x768xf32>
    %380 = arith.mulf %378, %379 : vector<4x768xf32>
    %381 = arith.addf %375, %380 : vector<4x768xf32>
    %c751_i32_13 = arith.constant 751 : i32
    %382 = tpu.dynamic_rotate %233 by %c751_i32_13 dim 1 : vector<4x768xf32>, i32 -> vector<4x768xf32>
    %383 = vector.extract_strided_slice %2 {offsets = [0, 24], sizes = [4, 1], strides = [1, 1]} : vector<4x36xf32> to vector<4x1xf32>
    %384 = vector.extract_strided_slice %382 {offsets = [0, 0], sizes = [1, 768], strides = [1, 1]} : vector<4x768xf32> to vector<1x768xf32>
    %385 = vector.broadcast %383 : vector<4x1xf32> to vector<4x768xf32>
    %386 = vector.broadcast %384 : vector<1x768xf32> to vector<4x768xf32>
    %387 = arith.mulf %385, %386 : vector<4x768xf32>
    %388 = arith.addf %381, %387 : vector<4x768xf32>
    %389 = vector.extract_strided_slice %2 {offsets = [0, 25], sizes = [4, 1], strides = [1, 1]} : vector<4x36xf32> to vector<4x1xf32>
    %390 = vector.extract_strided_slice %382 {offsets = [1, 0], sizes = [1, 768], strides = [1, 1]} : vector<4x768xf32> to vector<1x768xf32>
    %391 = vector.broadcast %389 : vector<4x1xf32> to vector<4x768xf32>
    %392 = vector.broadcast %390 : vector<1x768xf32> to vector<4x768xf32>
    %393 = arith.mulf %391, %392 : vector<4x768xf32>
    %394 = arith.addf %388, %393 : vector<4x768xf32>
    %395 = vector.extract_strided_slice %2 {offsets = [0, 26], sizes = [4, 1], strides = [1, 1]} : vector<4x36xf32> to vector<4x1xf32>
    %396 = vector.extract_strided_slice %382 {offsets = [2, 0], sizes = [1, 768], strides = [1, 1]} : vector<4x768xf32> to vector<1x768xf32>
    %397 = vector.broadcast %395 : vector<4x1xf32> to vector<4x768xf32>
    %398 = vector.broadcast %396 : vector<1x768xf32> to vector<4x768xf32>
    %399 = arith.mulf %397, %398 : vector<4x768xf32>
    %400 = arith.addf %394, %399 : vector<4x768xf32>
    %401 = vector.extract_strided_slice %2 {offsets = [0, 27], sizes = [4, 1], strides = [1, 1]} : vector<4x36xf32> to vector<4x1xf32>
    %402 = vector.extract_strided_slice %382 {offsets = [3, 0], sizes = [1, 768], strides = [1, 1]} : vector<4x768xf32> to vector<1x768xf32>
    %403 = vector.broadcast %401 : vector<4x1xf32> to vector<4x768xf32>
    %404 = vector.broadcast %402 : vector<1x768xf32> to vector<4x768xf32>
    %405 = arith.mulf %403, %404 : vector<4x768xf32>
    %406 = arith.addf %400, %405 : vector<4x768xf32>
    %c750_i32_14 = arith.constant 750 : i32
    %407 = tpu.dynamic_rotate %233 by %c750_i32_14 dim 1 : vector<4x768xf32>, i32 -> vector<4x768xf32>
    %408 = vector.extract_strided_slice %2 {offsets = [0, 28], sizes = [4, 1], strides = [1, 1]} : vector<4x36xf32> to vector<4x1xf32>
    %409 = vector.extract_strided_slice %407 {offsets = [0, 0], sizes = [1, 768], strides = [1, 1]} : vector<4x768xf32> to vector<1x768xf32>
    %410 = vector.broadcast %408 : vector<4x1xf32> to vector<4x768xf32>
    %411 = vector.broadcast %409 : vector<1x768xf32> to vector<4x768xf32>
    %412 = arith.mulf %410, %411 : vector<4x768xf32>
    %413 = arith.addf %406, %412 : vector<4x768xf32>
    %414 = vector.extract_strided_slice %2 {offsets = [0, 29], sizes = [4, 1], strides = [1, 1]} : vector<4x36xf32> to vector<4x1xf32>
    %415 = vector.extract_strided_slice %407 {offsets = [1, 0], sizes = [1, 768], strides = [1, 1]} : vector<4x768xf32> to vector<1x768xf32>
    %416 = vector.broadcast %414 : vector<4x1xf32> to vector<4x768xf32>
    %417 = vector.broadcast %415 : vector<1x768xf32> to vector<4x768xf32>
    %418 = arith.mulf %416, %417 : vector<4x768xf32>
    %419 = arith.addf %413, %418 : vector<4x768xf32>
    %420 = vector.extract_strided_slice %2 {offsets = [0, 30], sizes = [4, 1], strides = [1, 1]} : vector<4x36xf32> to vector<4x1xf32>
    %421 = vector.extract_strided_slice %407 {offsets = [2, 0], sizes = [1, 768], strides = [1, 1]} : vector<4x768xf32> to vector<1x768xf32>
    %422 = vector.broadcast %420 : vector<4x1xf32> to vector<4x768xf32>
    %423 = vector.broadcast %421 : vector<1x768xf32> to vector<4x768xf32>
    %424 = arith.mulf %422, %423 : vector<4x768xf32>
    %425 = arith.addf %419, %424 : vector<4x768xf32>
    %426 = vector.extract_strided_slice %2 {offsets = [0, 31], sizes = [4, 1], strides = [1, 1]} : vector<4x36xf32> to vector<4x1xf32>
    %427 = vector.extract_strided_slice %407 {offsets = [3, 0], sizes = [1, 768], strides = [1, 1]} : vector<4x768xf32> to vector<1x768xf32>
    %428 = vector.broadcast %426 : vector<4x1xf32> to vector<4x768xf32>
    %429 = vector.broadcast %427 : vector<1x768xf32> to vector<4x768xf32>
    %430 = arith.mulf %428, %429 : vector<4x768xf32>
    %431 = arith.addf %425, %430 : vector<4x768xf32>
    %c749_i32_15 = arith.constant 749 : i32
    %432 = tpu.dynamic_rotate %233 by %c749_i32_15 dim 1 : vector<4x768xf32>, i32 -> vector<4x768xf32>
    %433 = vector.extract_strided_slice %2 {offsets = [0, 32], sizes = [4, 1], strides = [1, 1]} : vector<4x36xf32> to vector<4x1xf32>
    %434 = vector.extract_strided_slice %432 {offsets = [0, 0], sizes = [1, 768], strides = [1, 1]} : vector<4x768xf32> to vector<1x768xf32>
    %435 = vector.broadcast %433 : vector<4x1xf32> to vector<4x768xf32>
    %436 = vector.broadcast %434 : vector<1x768xf32> to vector<4x768xf32>
    %437 = arith.mulf %435, %436 : vector<4x768xf32>
    %438 = arith.addf %431, %437 : vector<4x768xf32>
    %439 = vector.extract_strided_slice %2 {offsets = [0, 33], sizes = [4, 1], strides = [1, 1]} : vector<4x36xf32> to vector<4x1xf32>
    %440 = vector.extract_strided_slice %432 {offsets = [1, 0], sizes = [1, 768], strides = [1, 1]} : vector<4x768xf32> to vector<1x768xf32>
    %441 = vector.broadcast %439 : vector<4x1xf32> to vector<4x768xf32>
    %442 = vector.broadcast %440 : vector<1x768xf32> to vector<4x768xf32>
    %443 = arith.mulf %441, %442 : vector<4x768xf32>
    %444 = arith.addf %438, %443 : vector<4x768xf32>
    %445 = vector.extract_strided_slice %2 {offsets = [0, 34], sizes = [4, 1], strides = [1, 1]} : vector<4x36xf32> to vector<4x1xf32>
    %446 = vector.extract_strided_slice %432 {offsets = [2, 0], sizes = [1, 768], strides = [1, 1]} : vector<4x768xf32> to vector<1x768xf32>
    %447 = vector.broadcast %445 : vector<4x1xf32> to vector<4x768xf32>
    %448 = vector.broadcast %446 : vector<1x768xf32> to vector<4x768xf32>
    %449 = arith.mulf %447, %448 : vector<4x768xf32>
    %450 = arith.addf %444, %449 : vector<4x768xf32>
    %451 = vector.extract_strided_slice %2 {offsets = [0, 35], sizes = [4, 1], strides = [1, 1]} : vector<4x36xf32> to vector<4x1xf32>
    %452 = vector.extract_strided_slice %432 {offsets = [3, 0], sizes = [1, 768], strides = [1, 1]} : vector<4x768xf32> to vector<1x768xf32>
    %453 = vector.broadcast %451 : vector<4x1xf32> to vector<4x768xf32>
    %454 = vector.broadcast %452 : vector<1x768xf32> to vector<4x768xf32>
    %455 = arith.mulf %453, %454 : vector<4x768xf32>
    %456 = arith.addf %450, %455 : vector<4x768xf32>
    %457 = arith.addf %456, %0 : vector<4x768xf32>
    %c0_16 = arith.constant 0 : index
    %c0_17 = arith.constant 0 : index
    %458 = vector.load %arg5[%c0_16, %c0_17] : memref<4x768xf32, #tpu.memory_space<vmem>>, vector<4x768xf32>
    tpu.vector_store %arg5[%c0_16, %c0_17], %457 {strides = array<i32>} : memref<4x768xf32, #tpu.memory_space<vmem>>, vector<4x768xf32>,
    return
  }
  func.func @transform_0(%arg0: i32) -> (i32, i32) {
    %c0_i32 = arith.constant 0 : i32
    %c0_i32_0 = arith.constant 0 : i32
    return %c0_i32, %arg0 : i32, i32
  }
  func.func @transform_1(%arg0: i32) -> (i32, i32) {
    %c0_i32 = arith.constant 0 : i32
    %c0_i32_0 = arith.constant 0 : i32
    %c0_i32_1 = arith.constant 0 : i32
    return %c0_i32, %c0_i32_0 : i32, i32
  }
  func.func @transform_2(%arg0: i32) -> (i32, i32) {
    %c0_i32 = arith.constant 0 : i32
    %c0_i32_0 = arith.constant 0 : i32
    %c0_i32_1 = arith.constant 0 : i32
    return %c0_i32, %c0_i32_0 : i32, i32
  }
  func.func @transform_3(%arg0: i32) -> (i32, i32) {
    %c0_i32 = arith.constant 0 : i32
    %c0_i32_0 = arith.constant 0 : i32
    return %c0_i32, %arg0 : i32, i32
  }
  func.func @transform_4(%arg0: i32) -> (i32, i32) {
    %c0_i32 = arith.constant 0 : i32
    %c0_i32_0 = arith.constant 0 : i32
    return %c0_i32, %arg0 : i32, i32
  }
}

</mosaic_0001>

<llo_original>
// kernel: tpu_custom_call.1
$region0: #{tpu_custom_call.1}
  #allocation0 [shape = 'u32[]', space=smem, size = 0x4, offset = 0x4, fixed_abs, tag = 'smem constant byte address 0x4 - core index']
  #allocation1 [shape = 'u32[144,128]{1,0:T(1,128)}', space=vmem, size = 0x12000, scoped, tag = 'internal scratch']
  %s0 = inlined_call_operand.hbm [shape: f32[4,768], index: 0, kind: input, shape index: {}]
  %s1 = inlined_call_operand.hbm [shape: f32[4,36], index: 1, kind: input, shape index: {}]
  %s2 = inlined_call_operand.vmem [shape: f32[4,36], index: 2, kind: input, shape index: {}]
  %s3 = inlined_call_operand.vmem [shape: f32[1,768], index: 3, kind: input, shape index: {}]
  %s4 = inlined_call_operand.hbm [shape: f32[4,768], index: 4, kind: output, shape index: {}]
  %s5 = sld [smem:[#allocation0]]
  $region34: #{tpu_custom_call.1} parent=0
    _
  %s7 = ssub.s32 1, %s5
  %s8 = scalar_select 0, %s7, %s5
  $region1: #{tpu_custom_call.1} parent=0
    #allocation2 [shape = 'u8[12288]{0}', space=vmem, size = 0x3000, scoped, tag = 'input window, operand 0, single buffered']
    #allocation3 [shape = 's32[1]{0}', space=sflag, size = 0x4, scoped, tag = 'scoped memory for tpu_custom_call.1']
    #allocation4 [shape = 's32[1]{0}', space=sflag, size = 0x4, scoped, tag = 'scoped memory for tpu_custom_call.1']
    #allocation5 [shape = 'u8[2048]{0}', space=vmem, size = 0x800, scoped, tag = 'input window, operand 1, single buffered']
    #allocation6 [shape = 's32[1]{0}', space=sflag, size = 0x4, scoped, tag = 'scoped memory for tpu_custom_call.1']
    #allocation7 [shape = 'u8[12288]{0}', space=vmem, size = 0x3000, scoped, tag = 'output window, operand 0, single buffered']
    %9 = vsyncpa [#allocation3], 0
    %10 = vsyncpa [#allocation6], 0
    %11 = vsyncpa [#allocation4], 0
    // Predicated region
    $region2: #{tpu_custom_call.1} parent=1 // pred_check
      _
    $region3: #{tpu_custom_call.1} parent=1 // pred_check_branch
      %13 = sbr.rel (0) target = $region5
    $region4: #{tpu_custom_call.1} parent=1 // pred_region
      %s15 = ssub.s32 384, 384
      %16 = vsyncadd [#allocation3], %s15
      %s18 = sshll.u32 [#allocation2], 4
      %s19 = int_to_ptr.vmem [resolvable:$true] %s18
      %21 = dma.hbm_to_vmem [thread:$0]  %s0, 384, %s19, [#allocation3]
    $region5: #{tpu_custom_call.1} parent=1 // pred_fallthru
      _
    // Predicated region
    $region6: #{tpu_custom_call.1} parent=1 // pred_check
      _
    $region7: #{tpu_custom_call.1} parent=1 // pred_check_branch
      %23 = sbr.rel (0) target = $region9
    $region8: #{tpu_custom_call.1} parent=1 // pred_region
      %s25 = ssub.s32 64, 64
      %26 = vsyncadd [#allocation6], %s25
      %s28 = sshll.u32 [#allocation5], 4
      %s29 = int_to_ptr.vmem [resolvable:$true] %s28
      %31 = dma.hbm_to_vmem [thread:$0]  %s1, 64, %s29, [#allocation6]
    $region9: #{tpu_custom_call.1} parent=1 // pred_fallthru
      _
    // Predicated region
    $region10: #{tpu_custom_call.1} parent=1 // pred_check
      _
    $region11: #{tpu_custom_call.1} parent=1 // pred_check_branch
      %33 = sbr.rel (0) target = $region13
    $region12: #{tpu_custom_call.1} parent=1 // pred_region
      _
    $region13: #{tpu_custom_call.1} parent=1 // pred_fallthru
      _
    // Predicated region
    $region14: #{tpu_custom_call.1} parent=1 // pred_check
      _
    $region15: #{tpu_custom_call.1} parent=1 // pred_check_branch
      %35 = sbr.rel (0) target = $region17
    $region16: #{tpu_custom_call.1} parent=1 // pred_region
      _
    $region17: #{tpu_custom_call.1} parent=1 // pred_fallthru
      _
    // Predicated region
    $region18: #{tpu_custom_call.1} parent=1 // pred_check
      _
    $region19: #{tpu_custom_call.1} parent=1 // pred_check_branch
      %37 = sbr.rel (0) target = $region21
    $region20: #{tpu_custom_call.1} parent=1 // pred_region
      %38 = dma.done [#allocation3], 384
    $region21: #{tpu_custom_call.1} parent=1 // pred_fallthru
      _
    // Predicated region
    $region22: #{tpu_custom_call.1} parent=1 // pred_check
      _
    $region23: #{tpu_custom_call.1} parent=1 // pred_check_branch
      %40 = sbr.rel (0) target = $region25
    $region24: #{tpu_custom_call.1} parent=1 // pred_region
      %41 = dma.done [#allocation6], 64
    $region25: #{tpu_custom_call.1} parent=1 // pred_fallthru
      _
    %v42 = vld [vmem:[#allocation2] sm:$0xff]
    %v43 = vld [vmem:[#allocation2 + $0x8] sm:$0xff]
    %v44 = vld [vmem:[#allocation2 + $0x10] sm:$0xff]
    %v45 = vld [vmem:[#allocation5] sm:$0xf]
    %v46 = vld [vmem:[%s2] sm:$0xf]
    %v47 = vld [vmem:[%s3] sm:$0x3f]
    %v51 = vcombine.high %v42, %v42
    %v52 = vcombine.high %v43, %v43
    %v53 = vcombine.high %v44, %v44
    %57 = vrot.lane.b32.xlu0 %v42, 19
    %v58 = vpop.permute.xlu0 %57
    %59 = vrot.lane.b32.xlu0 %v51, 19
    %v60 = vpop.permute.xlu0 %59
    %61 = vrot.lane.b32.xlu0 %v43, 19
    %v62 = vpop.permute.xlu0 %61
    %63 = vrot.lane.b32.xlu0 %v52, 19
    %v64 = vpop.permute.xlu0 %63
    %65 = vrot.lane.b32.xlu0 %v44, 19
    %v66 = vpop.permute.xlu0 %65
    %67 = vrot.lane.b32.xlu0 %v53, 19
    %v68 = vpop.permute.xlu0 %67
    %v69 = vlaneseq
    %v70 = vand.u32 %v69, 127
    %vm71 = vcmp.lt.s32.totalorder %v70, 19
    %v72 = vsel %vm71, %v66, %v68
    %v73 = vsel %vm71, %v64, %v66
    %v74 = vsel %vm71, %v62, %v64
    %v75 = vsel %vm71, %v60, %v62
    %v76 = vsel %vm71, %v58, %v60
    %v77 = vsel %vm71, %v68, %v58
    %79 = vset.pattern.permute.xlu0 0
    %80 = vperm.xlu0 %79, %v45
    %v81 = vpop.permute.xlu0 %80
    %v83 = vlaneseq
    %v84 = vshrl.u32 %v83, 7
    %v85 = vsub.s32 0, %v84
    %v86 = vrot.slane %v77, %v85
    %v87 = vlaneseq
    %v88 = vshrl.u32 %v87, 7
    %v89 = vsub.s32 0, %v88
    %v90 = vrot.slane %v76, %v89
    %v91 = vlaneseq
    %v92 = vshrl.u32 %v91, 7
    %v93 = vsub.s32 0, %v92
    %v94 = vrot.slane %v75, %v93
    %v95 = vlaneseq
    %v96 = vshrl.u32 %v95, 7
    %v97 = vsub.s32 0, %v96
    %v98 = vrot.slane %v74, %v97
    %v99 = vlaneseq
    %v100 = vshrl.u32 %v99, 7
    %v101 = vsub.s32 0, %v100
    %v102 = vrot.slane %v73, %v101
    %v103 = vlaneseq
    %v104 = vshrl.u32 %v103, 7
    %v105 = vsub.s32 0, %v104
    %v106 = vrot.slane %v72, %v105
    %v107 = vmul.f32 %v81, %v86
    %v108 = vmul.f32 %v81, %v90
    %v109 = vmul.f32 %v81, %v94
    %v110 = vmul.f32 %v81, %v98
    %v111 = vmul.f32 %v81, %v102
    %v112 = vmul.f32 %v81, %v106
    %113 = vset.pattern.permute.xlu0 1
    %114 = vperm.xlu0 %113, %v45
    %v115 = vpop.permute.xlu0 %114
    %v117 = vlaneseq
    %v118 = vshrl.u32 %v117, 7
    %v119 = vsub.s32 1, %v118
    %v120 = vrot.slane %v77, %v119
    %v121 = vlaneseq
    %v122 = vshrl.u32 %v121, 7
    %v123 = vsub.s32 1, %v122
    %v124 = vrot.slane %v76, %v123
    %v125 = vlaneseq
    %v126 = vshrl.u32 %v125, 7
    %v127 = vsub.s32 1, %v126
    %v128 = vrot.slane %v75, %v127
    %v129 = vlaneseq
    %v130 = vshrl.u32 %v129, 7
    %v131 = vsub.s32 1, %v130
    %v132 = vrot.slane %v74, %v131
    %v133 = vlaneseq
    %v134 = vshrl.u32 %v133, 7
    %v135 = vsub.s32 1, %v134
    %v136 = vrot.slane %v73, %v135
    %v137 = vlaneseq
    %v138 = vshrl.u32 %v137, 7
    %v139 = vsub.s32 1, %v138
    %v140 = vrot.slane %v72, %v139
    %v141 = vmul.f32 %v115, %v120
    %v142 = vmul.f32 %v115, %v124
    %v143 = vmul.f32 %v115, %v128
    %v144 = vmul.f32 %v115, %v132
    %v145 = vmul.f32 %v115, %v136
    %v146 = vmul.f32 %v115, %v140
    %v147 = vadd.f32 %v107, %v141
    %v148 = vadd.f32 %v108, %v142
    %v149 = vadd.f32 %v109, %v143
    %v150 = vadd.f32 %v110, %v144
    %v151 = vadd.f32 %v111, %v145
    %v152 = vadd.f32 %v112, %v146
    %153 = vset.pattern.permute.xlu0 2
    %154 = vperm.xlu0 %153, %v45
    %v155 = vpop.permute.xlu0 %154
    %v157 = vlaneseq
    %v158 = vshrl.u32 %v157, 7
    %v159 = vsub.s32 2, %v158
    %v160 = vrot.slane %v77, %v159
    %v161 = vlaneseq
    %v162 = vshrl.u32 %v161, 7
    %v163 = vsub.s32 2, %v162
    %v164 = vrot.slane %v76, %v163
    %v165 = vlaneseq
    %v166 = vshrl.u32 %v165, 7
    %v167 = vsub.s32 2, %v166
    %v168 = vrot.slane %v75, %v167
    %v169 = vlaneseq
    %v170 = vshrl.u32 %v169, 7
    %v171 = vsub.s32 2, %v170
    %v172 = vrot.slane %v74, %v171
    %v173 = vlaneseq
    %v174 = vshrl.u32 %v173, 7
    %v175 = vsub.s32 2, %v174
    %v176 = vrot.slane %v73, %v175
    %v177 = vlaneseq
    %v178 = vshrl.u32 %v177, 7
    %v179 = vsub.s32 2, %v178
    %v180 = vrot.slane %v72, %v179
    %v181 = vmul.f32 %v155, %v160
    %v182 = vmul.f32 %v155, %v164
    %v183 = vmul.f32 %v155, %v168
    %v184 = vmul.f32 %v155, %v172
    %v185 = vmul.f32 %v155, %v176
    %v186 = vmul.f32 %v155, %v180
    %v187 = vadd.f32 %v147, %v181
    %v188 = vadd.f32 %v148, %v182
    %v189 = vadd.f32 %v149, %v183
    %v190 = vadd.f32 %v150, %v184
    %v191 = vadd.f32 %v151, %v185
    %v192 = vadd.f32 %v152, %v186
    %193 = vset.pattern.permute.xlu0 3
    %194 = vperm.xlu0 %193, %v45
    %v195 = vpop.permute.xlu0 %194
    %v197 = vlaneseq
    %v198 = vshrl.u32 %v197, 7
    %v199 = vsub.s32 3, %v198
    %v200 = vrot.slane %v77, %v199
    %v201 = vlaneseq
    %v202 = vshrl.u32 %v201, 7
    %v203 = vsub.s32 3, %v202
    %v204 = vrot.slane %v76, %v203
    %v205 = vlaneseq
    %v206 = vshrl.u32 %v205, 7
    %v207 = vsub.s32 3, %v206
    %v208 = vrot.slane %v75, %v207
    %v209 = vlaneseq
    %v210 = vshrl.u32 %v209, 7
    %v211 = vsub.s32 3, %v210
    %v212 = vrot.slane %v74, %v211
    %v213 = vlaneseq
    %v214 = vshrl.u32 %v213, 7
    %v215 = vsub.s32 3, %v214
    %v216 = vrot.slane %v73, %v215
    %v217 = vlaneseq
    %v218 = vshrl.u32 %v217, 7
    %v219 = vsub.s32 3, %v218
    %v220 = vrot.slane %v72, %v219
    %v221 = vmul.f32 %v195, %v200
    %v222 = vmul.f32 %v195, %v204
    %v223 = vmul.f32 %v195, %v208
    %v224 = vmul.f32 %v195, %v212
    %v225 = vmul.f32 %v195, %v216
    %v226 = vmul.f32 %v195, %v220
    %v227 = vadd.f32 %v187, %v221
    %v228 = vadd.f32 %v188, %v222
    %v229 = vadd.f32 %v189, %v223
    %v230 = vadd.f32 %v190, %v224
    %v231 = vadd.f32 %v191, %v225
    %v232 = vadd.f32 %v192, %v226
    %233 = vrot.lane.b32.xlu0 %v42, 18
    %v234 = vpop.permute.xlu0 %233
    %235 = vrot.lane.b32.xlu0 %v51, 18
    %v236 = vpop.permute.xlu0 %235
    %237 = vrot.lane.b32.xlu0 %v43, 18
    %v238 = vpop.permute.xlu0 %237
    %239 = vrot.lane.b32.xlu0 %v52, 18
    %v240 = vpop.permute.xlu0 %239
    %241 = vrot.lane.b32.xlu0 %v44, 18
    %v242 = vpop.permute.xlu0 %241
    %243 = vrot.lane.b32.xlu0 %v53, 18
    %v244 = vpop.permute.xlu0 %243
    %vm245 = vcmp.lt.s32.totalorder %v70, 18
    %v246 = vsel %vm245, %v242, %v244
    %v247 = vsel %vm245, %v240, %v242
    %v248 = vsel %vm245, %v238, %v240
    %v249 = vsel %vm245, %v236, %v238
    %v250 = vsel %vm245, %v234, %v236
    %v251 = vsel %vm245, %v244, %v234
    %252 = vset.pattern.permute.xlu0 4
    %253 = vperm.xlu0 %252, %v45
    %v254 = vpop.permute.xlu0 %253
    %v256 = vlaneseq
    %v257 = vshrl.u32 %v256, 7
    %v258 = vsub.s32 0, %v257
    %v259 = vrot.slane %v251, %v258
    %v260 = vlaneseq
    %v261 = vshrl.u32 %v260, 7
    %v262 = vsub.s32 0, %v261
    %v263 = vrot.slane %v250, %v262
    %v264 = vlaneseq
    %v265 = vshrl.u32 %v264, 7
    %v266 = vsub.s32 0, %v265
    %v267 = vrot.slane %v249, %v266
    %v268 = vlaneseq
    %v269 = vshrl.u32 %v268, 7
    %v270 = vsub.s32 0, %v269
    %v271 = vrot.slane %v248, %v270
    %v272 = vlaneseq
    %v273 = vshrl.u32 %v272, 7
    %v274 = vsub.s32 0, %v273
    %v275 = vrot.slane %v247, %v274
    %v276 = vlaneseq
    %v277 = vshrl.u32 %v276, 7
    %v278 = vsub.s32 0, %v277
    %v279 = vrot.slane %v246, %v278
    %v280 = vmul.f32 %v254, %v259
    %v281 = vmul.f32 %v254, %v263
    %v282 = vmul.f32 %v254, %v267
    %v283 = vmul.f32 %v254, %v271
    %v284 = vmul.f32 %v254, %v275
    %v285 = vmul.f32 %v254, %v279
    %v286 = vadd.f32 %v227, %v280
    %v287 = vadd.f32 %v228, %v281
    %v288 = vadd.f32 %v229, %v282
    %v289 = vadd.f32 %v230, %v283
    %v290 = vadd.f32 %v231, %v284
    %v291 = vadd.f32 %v232, %v285
    %292 = vset.pattern.permute.xlu0 5
    %293 = vperm.xlu0 %292, %v45
    %v294 = vpop.permute.xlu0 %293
    %v296 = vlaneseq
    %v297 = vshrl.u32 %v296, 7
    %v298 = vsub.s32 1, %v297
    %v299 = vrot.slane %v251, %v298
    %v300 = vlaneseq
    %v301 = vshrl.u32 %v300, 7
    %v302 = vsub.s32 1, %v301
    %v303 = vrot.slane %v250, %v302
    %v304 = vlaneseq
    %v305 = vshrl.u32 %v304, 7
    %v306 = vsub.s32 1, %v305
    %v307 = vrot.slane %v249, %v306
    %v308 = vlaneseq
    %v309 = vshrl.u32 %v308, 7
    %v310 = vsub.s32 1, %v309
    %v311 = vrot.slane %v248, %v310
    %v312 = vlaneseq
    %v313 = vshrl.u32 %v312, 7
    %v314 = vsub.s32 1, %v313
    %v315 = vrot.slane %v247, %v314
    %v316 = vlaneseq
    %v317 = vshrl.u32 %v316, 7
    %v318 = vsub.s32 1, %v317
    %v319 = vrot.slane %v246, %v318
    %v320 = vmul.f32 %v294, %v299
    %v321 = vmul.f32 %v294, %v303
    %v322 = vmul.f32 %v294, %v307
    %v323 = vmul.f32 %v294, %v311
    %v324 = vmul.f32 %v294, %v315
    %v325 = vmul.f32 %v294, %v319
    %v326 = vadd.f32 %v286, %v320
    %v327 = vadd.f32 %v287, %v321
    %v328 = vadd.f32 %v288, %v322
    %v329 = vadd.f32 %v289, %v323
    %v330 = vadd.f32 %v290, %v324
    %v331 = vadd.f32 %v291, %v325
    %332 = vset.pattern.permute.xlu0 6
    %333 = vperm.xlu0 %332, %v45
    %v334 = vpop.permute.xlu0 %333
    %v336 = vlaneseq
    %v337 = vshrl.u32 %v336, 7
    %v338 = vsub.s32 2, %v337
    %v339 = vrot.slane %v251, %v338
    %v340 = vlaneseq
    %v341 = vshrl.u32 %v340, 7
    %v342 = vsub.s32 2, %v341
    %v343 = vrot.slane %v250, %v342
    %v344 = vlaneseq
    %v345 = vshrl.u32 %v344, 7
    %v346 = vsub.s32 2, %v345
    %v347 = vrot.slane %v249, %v346
    %v348 = vlaneseq
    %v349 = vshrl.u32 %v348, 7
    %v350 = vsub.s32 2, %v349
    %v351 = vrot.slane %v248, %v350
    %v352 = vlaneseq
    %v353 = vshrl.u32 %v352, 7
    %v354 = vsub.s32 2, %v353
    %v355 = vrot.slane %v247, %v354
    %v356 = vlaneseq
    %v357 = vshrl.u32 %v356, 7
    %v358 = vsub.s32 2, %v357
    %v359 = vrot.slane %v246, %v358
    %v360 = vmul.f32 %v334, %v339
    %v361 = vmul.f32 %v334, %v343
    %v362 = vmul.f32 %v334, %v347
    %v363 = vmul.f32 %v334, %v351
    %v364 = vmul.f32 %v334, %v355
    %v365 = vmul.f32 %v334, %v359
    %v366 = vadd.f32 %v326, %v360
    %v367 = vadd.f32 %v327, %v361
    %v368 = vadd.f32 %v328, %v362
    %v369 = vadd.f32 %v329, %v363
    %v370 = vadd.f32 %v330, %v364
    %v371 = vadd.f32 %v331, %v365
    %372 = vset.pattern.permute.xlu0 7
    %373 = vperm.xlu0 %372, %v45
    %v374 = vpop.permute.xlu0 %373
    %v376 = vlaneseq
    %v377 = vshrl.u32 %v376, 7
    %v378 = vsub.s32 3, %v377
    %v379 = vrot.slane %v251, %v378
    %v380 = vlaneseq
    %v381 = vshrl.u32 %v380, 7
    %v382 = vsub.s32 3, %v381
    %v383 = vrot.slane %v250, %v382
    %v384 = vlaneseq
    %v385 = vshrl.u32 %v384, 7
    %v386 = vsub.s32 3, %v385
    %v387 = vrot.slane %v249, %v386
    %v388 = vlaneseq
    %v389 = vshrl.u32 %v388, 7
    %v390 = vsub.s32 3, %v389
    %v391 = vrot.slane %v248, %v390
    %v392 = vlaneseq
    %v393 = vshrl.u32 %v392, 7
    %v394 = vsub.s32 3, %v393
    %v395 = vrot.slane %v247, %v394
    %v396 = vlaneseq
    %v397 = vshrl.u32 %v396, 7
    %v398 = vsub.s32 3, %v397
    %v399 = vrot.slane %v246, %v398
    %v400 = vmul.f32 %v374, %v379
    %v401 = vmul.f32 %v374, %v383
    %v402 = vmul.f32 %v374, %v387
    %v403 = vmul.f32 %v374, %v391
    %v404 = vmul.f32 %v374, %v395
    %v405 = vmul.f32 %v374, %v399
    %v406 = vadd.f32 %v366, %v400
    %v407 = vadd.f32 %v367, %v401
    %v408 = vadd.f32 %v368, %v402
    %v409 = vadd.f32 %v369, %v403
    %v410 = vadd.f32 %v370, %v404
    %v411 = vadd.f32 %v371, %v405
    %412 = vrot.lane.b32.xlu0 %v42, 17
    %v413 = vpop.permute.xlu0 %412
    %414 = vrot.lane.b32.xlu0 %v51, 17
    %v415 = vpop.permute.xlu0 %414
    %416 = vrot.lane.b32.xlu0 %v43, 17
    %v417 = vpop.permute.xlu0 %416
    %418 = vrot.lane.b32.xlu0 %v52, 17
    %v419 = vpop.permute.xlu0 %418
    %420 = vrot.lane.b32.xlu0 %v44, 17
    %v421 = vpop.permute.xlu0 %420
    %422 = vrot.lane.b32.xlu0 %v53, 17
    %v423 = vpop.permute.xlu0 %422
    %vm424 = vcmp.lt.s32.totalorder %v70, 17
    %v425 = vsel %vm424, %v421, %v423
    %v426 = vsel %vm424, %v419, %v421
    %v427 = vsel %vm424, %v417, %v419
    %v428 = vsel %vm424, %v415, %v417
    %v429 = vsel %vm424, %v413, %v415
    %v430 = vsel %vm424, %v423, %v413
    %431 = vset.pattern.permute.xlu0 8
    %432 = vperm.xlu0 %431, %v45
    %v433 = vpop.permute.xlu0 %432
    %v435 = vlaneseq
    %v436 = vshrl.u32 %v435, 7
    %v437 = vsub.s32 0, %v436
    %v438 = vrot.slane %v430, %v437
    %v439 = vlaneseq
    %v440 = vshrl.u32 %v439, 7
    %v441 = vsub.s32 0, %v440
    %v442 = vrot.slane %v429, %v441
    %v443 = vlaneseq
    %v444 = vshrl.u32 %v443, 7
    %v445 = vsub.s32 0, %v444
    %v446 = vrot.slane %v428, %v445
    %v447 = vlaneseq
    %v448 = vshrl.u32 %v447, 7
    %v449 = vsub.s32 0, %v448
    %v450 = vrot.slane %v427, %v449
    %v451 = vlaneseq
    %v452 = vshrl.u32 %v451, 7
    %v453 = vsub.s32 0, %v452
    %v454 = vrot.slane %v426, %v453
    %v455 = vlaneseq
    %v456 = vshrl.u32 %v455, 7
    %v457 = vsub.s32 0, %v456
    %v458 = vrot.slane %v425, %v457
    %v459 = vmul.f32 %v433, %v438
    %v460 = vmul.f32 %v433, %v442
    %v461 = vmul.f32 %v433, %v446
    %v462 = vmul.f32 %v433, %v450
    %v463 = vmul.f32 %v433, %v454
    %v464 = vmul.f32 %v433, %v458
    %v465 = vadd.f32 %v406, %v459
    %v466 = vadd.f32 %v407, %v460
    %v467 = vadd.f32 %v408, %v461
    %v468 = vadd.f32 %v409, %v462
    %v469 = vadd.f32 %v410, %v463
    %v470 = vadd.f32 %v411, %v464
    %471 = vset.pattern.permute.xlu0 9
    %472 = vperm.xlu0 %471, %v45
    %v473 = vpop.permute.xlu0 %472
    %v475 = vlaneseq
    %v476 = vshrl.u32 %v475, 7
    %v477 = vsub.s32 1, %v476
    %v478 = vrot.slane %v430, %v477
    %v479 = vlaneseq
    %v480 = vshrl.u32 %v479, 7
    %v481 = vsub.s32 1, %v480
    %v482 = vrot.slane %v429, %v481
    %v483 = vlaneseq
    %v484 = vshrl.u32 %v483, 7
    %v485 = vsub.s32 1, %v484
    %v486 = vrot.slane %v428, %v485
    %v487 = vlaneseq
    %v488 = vshrl.u32 %v487, 7
    %v489 = vsub.s32 1, %v488
    %v490 = vrot.slane %v427, %v489
    %v491 = vlaneseq
    %v492 = vshrl.u32 %v491, 7
    %v493 = vsub.s32 1, %v492
    %v494 = vrot.slane %v426, %v493
    %v495 = vlaneseq
    %v496 = vshrl.u32 %v495, 7
    %v497 = vsub.s32 1, %v496
    %v498 = vrot.slane %v425, %v497
    %v499 = vmul.f32 %v473, %v478
    %v500 = vmul.f32 %v473, %v482
    %v501 = vmul.f32 %v473, %v486
    %v502 = vmul.f32 %v473, %v490
    %v503 = vmul.f32 %v473, %v494
    %v504 = vmul.f32 %v473, %v498
    %v505 = vadd.f32 %v465, %v499
    %v506 = vadd.f32 %v466, %v500
    %v507 = vadd.f32 %v467, %v501
    %v508 = vadd.f32 %v468, %v502
    %v509 = vadd.f32 %v469, %v503
    %v510 = vadd.f32 %v470, %v504
    %511 = vset.pattern.permute.xlu0 10
    %512 = vperm.xlu0 %511, %v45
    %v513 = vpop.permute.xlu0 %512
    %v515 = vlaneseq
    %v516 = vshrl.u32 %v515, 7
    %v517 = vsub.s32 2, %v516
    %v518 = vrot.slane %v430, %v517
    %v519 = vlaneseq
    %v520 = vshrl.u32 %v519, 7
    %v521 = vsub.s32 2, %v520
    %v522 = vrot.slane %v429, %v521
    %v523 = vlaneseq
    %v524 = vshrl.u32 %v523, 7
    %v525 = vsub.s32 2, %v524
    %v526 = vrot.slane %v428, %v525
    %v527 = vlaneseq
    %v528 = vshrl.u32 %v527, 7
    %v529 = vsub.s32 2, %v528
    %v530 = vrot.slane %v427, %v529
    %v531 = vlaneseq
    %v532 = vshrl.u32 %v531, 7
    %v533 = vsub.s32 2, %v532
    %v534 = vrot.slane %v426, %v533
    %v535 = vlaneseq
    %v536 = vshrl.u32 %v535, 7
    %v537 = vsub.s32 2, %v536
    %v538 = vrot.slane %v425, %v537
    %v539 = vmul.f32 %v513, %v518
    %v540 = vmul.f32 %v513, %v522
    %v541 = vmul.f32 %v513, %v526
    %v542 = vmul.f32 %v513, %v530
    %v543 = vmul.f32 %v513, %v534
    %v544 = vmul.f32 %v513, %v538
    %v545 = vadd.f32 %v505, %v539
    %v546 = vadd.f32 %v506, %v540
    %v547 = vadd.f32 %v507, %v541
    %v548 = vadd.f32 %v508, %v542
    %v549 = vadd.f32 %v509, %v543
    %v550 = vadd.f32 %v510, %v544
    %551 = vset.pattern.permute.xlu0 11
    %552 = vperm.xlu0 %551, %v45
    %v553 = vpop.permute.xlu0 %552
    %v555 = vlaneseq
    %v556 = vshrl.u32 %v555, 7
    %v557 = vsub.s32 3, %v556
    %v558 = vrot.slane %v430, %v557
    %v559 = vlaneseq
    %v560 = vshrl.u32 %v559, 7
    %v561 = vsub.s32 3, %v560
    %v562 = vrot.slane %v429, %v561
    %v563 = vlaneseq
    %v564 = vshrl.u32 %v563, 7
    %v565 = vsub.s32 3, %v564
    %v566 = vrot.slane %v428, %v565
    %v567 = vlaneseq
    %v568 = vshrl.u32 %v567, 7
    %v569 = vsub.s32 3, %v568
    %v570 = vrot.slane %v427, %v569
    %v571 = vlaneseq
    %v572 = vshrl.u32 %v571, 7
    %v573 = vsub.s32 3, %v572
    %v574 = vrot.slane %v426, %v573
    %v575 = vlaneseq
    %v576 = vshrl.u32 %v575, 7
    %v577 = vsub.s32 3, %v576
    %v578 = vrot.slane %v425, %v577
    %v579 = vmul.f32 %v553, %v558
    %v580 = vmul.f32 %v553, %v562
    %v581 = vmul.f32 %v553, %v566
    %v582 = vmul.f32 %v553, %v570
    %v583 = vmul.f32 %v553, %v574
    %v584 = vmul.f32 %v553, %v578
    %v585 = vadd.f32 %v545, %v579
    %v586 = vadd.f32 %v546, %v580
    %v587 = vadd.f32 %v547, %v581
    %v588 = vadd.f32 %v548, %v582
    %v589 = vadd.f32 %v549, %v583
    %v590 = vadd.f32 %v550, %v584
    %591 = vrot.lane.b32.xlu0 %v42, 1
    %v592 = vpop.permute.xlu0 %591
    %593 = vrot.lane.b32.xlu0 %v51, 1
    %v594 = vpop.permute.xlu0 %593
    %595 = vrot.lane.b32.xlu0 %v43, 1
    %v596 = vpop.permute.xlu0 %595
    %597 = vrot.lane.b32.xlu0 %v52, 1
    %v598 = vpop.permute.xlu0 %597
    %599 = vrot.lane.b32.xlu0 %v44, 1
    %v600 = vpop.permute.xlu0 %599
    %601 = vrot.lane.b32.xlu0 %v53, 1
    %v602 = vpop.permute.xlu0 %601
    %vm603 = vcmp.lt.s32.totalorder %v70, 1
    %v604 = vsel %vm603, %v600, %v602
    %v605 = vsel %vm603, %v598, %v600
    %v606 = vsel %vm603, %v596, %v598
    %v607 = vsel %vm603, %v594, %v596
    %v608 = vsel %vm603, %v592, %v594
    %v609 = vsel %vm603, %v602, %v592
    %610 = vset.pattern.permute.xlu0 12
    %611 = vperm.xlu0 %610, %v45
    %v612 = vpop.permute.xlu0 %611
    %v614 = vlaneseq
    %v615 = vshrl.u32 %v614, 7
    %v616 = vsub.s32 0, %v615
    %v617 = vrot.slane %v609, %v616
    %v618 = vlaneseq
    %v619 = vshrl.u32 %v618, 7
    %v620 = vsub.s32 0, %v619
    %v621 = vrot.slane %v608, %v620
    %v622 = vlaneseq
    %v623 = vshrl.u32 %v622, 7
    %v624 = vsub.s32 0, %v623
    %v625 = vrot.slane %v607, %v624
    %v626 = vlaneseq
    %v627 = vshrl.u32 %v626, 7
    %v628 = vsub.s32 0, %v627
    %v629 = vrot.slane %v606, %v628
    %v630 = vlaneseq
    %v631 = vshrl.u32 %v630, 7
    %v632 = vsub.s32 0, %v631
    %v633 = vrot.slane %v605, %v632
    %v634 = vlaneseq
    %v635 = vshrl.u32 %v634, 7
    %v636 = vsub.s32 0, %v635
    %v637 = vrot.slane %v604, %v636
    %v638 = vmul.f32 %v612, %v617
    %v639 = vmul.f32 %v612, %v621
    %v640 = vmul.f32 %v612, %v625
    %v641 = vmul.f32 %v612, %v629
    %v642 = vmul.f32 %v612, %v633
    %v643 = vmul.f32 %v612, %v637
    %v644 = vadd.f32 %v585, %v638
    %v645 = vadd.f32 %v586, %v639
    %v646 = vadd.f32 %v587, %v640
    %v647 = vadd.f32 %v588, %v641
    %v648 = vadd.f32 %v589, %v642
    %v649 = vadd.f32 %v590, %v643
    %650 = vset.pattern.permute.xlu0 13
    %651 = vperm.xlu0 %650, %v45
    %v652 = vpop.permute.xlu0 %651
    %v654 = vlaneseq
    %v655 = vshrl.u32 %v654, 7
    %v656 = vsub.s32 1, %v655
    %v657 = vrot.slane %v609, %v656
    %v658 = vlaneseq
    %v659 = vshrl.u32 %v658, 7
    %v660 = vsub.s32 1, %v659
    %v661 = vrot.slane %v608, %v660
    %v662 = vlaneseq
    %v663 = vshrl.u32 %v662, 7
    %v664 = vsub.s32 1, %v663
    %v665 = vrot.slane %v607, %v664
    %v666 = vlaneseq
    %v667 = vshrl.u32 %v666, 7
    %v668 = vsub.s32 1, %v667
    %v669 = vrot.slane %v606, %v668
    %v670 = vlaneseq
    %v671 = vshrl.u32 %v670, 7
    %v672 = vsub.s32 1, %v671
    %v673 = vrot.slane %v605, %v672
    %v674 = vlaneseq
    %v675 = vshrl.u32 %v674, 7
    %v676 = vsub.s32 1, %v675
    %v677 = vrot.slane %v604, %v676
    %v678 = vmul.f32 %v652, %v657
    %v679 = vmul.f32 %v652, %v661
    %v680 = vmul.f32 %v652, %v665
    %v681 = vmul.f32 %v652, %v669
    %v682 = vmul.f32 %v652, %v673
    %v683 = vmul.f32 %v652, %v677
    %v684 = vadd.f32 %v644, %v678
    %v685 = vadd.f32 %v645, %v679
    %v686 = vadd.f32 %v646, %v680
    %v687 = vadd.f32 %v647, %v681
    %v688 = vadd.f32 %v648, %v682
    %v689 = vadd.f32 %v649, %v683
    %690 = vset.pattern.permute.xlu0 14
    %691 = vperm.xlu0 %690, %v45
    %v692 = vpop.permute.xlu0 %691
    %v694 = vlaneseq
    %v695 = vshrl.u32 %v694, 7
    %v696 = vsub.s32 2, %v695
    %v697 = vrot.slane %v609, %v696
    %v698 = vlaneseq
    %v699 = vshrl.u32 %v698, 7
    %v700 = vsub.s32 2, %v699
    %v701 = vrot.slane %v608, %v700
    %v702 = vlaneseq
    %v703 = vshrl.u32 %v702, 7
    %v704 = vsub.s32 2, %v703
    %v705 = vrot.slane %v607, %v704
    %v706 = vlaneseq
    %v707 = vshrl.u32 %v706, 7
    %v708 = vsub.s32 2, %v707
    %v709 = vrot.slane %v606, %v708
    %v710 = vlaneseq
    %v711 = vshrl.u32 %v710, 7
    %v712 = vsub.s32 2, %v711
    %v713 = vrot.slane %v605, %v712
    %v714 = vlaneseq
    %v715 = vshrl.u32 %v714, 7
    %v716 = vsub.s32 2, %v715
    %v717 = vrot.slane %v604, %v716
    %v718 = vmul.f32 %v692, %v697
    %v719 = vmul.f32 %v692, %v701
    %v720 = vmul.f32 %v692, %v705
    %v721 = vmul.f32 %v692, %v709
    %v722 = vmul.f32 %v692, %v713
    %v723 = vmul.f32 %v692, %v717
    %v724 = vadd.f32 %v684, %v718
    %v725 = vadd.f32 %v685, %v719
    %v726 = vadd.f32 %v686, %v720
    %v727 = vadd.f32 %v687, %v721
    %v728 = vadd.f32 %v688, %v722
    %v729 = vadd.f32 %v689, %v723
    %730 = vset.pattern.permute.xlu0 15
    %731 = vperm.xlu0 %730, %v45
    %v732 = vpop.permute.xlu0 %731
    %v734 = vlaneseq
    %v735 = vshrl.u32 %v734, 7
    %v736 = vsub.s32 3, %v735
    %v737 = vrot.slane %v609, %v736
    %v738 = vlaneseq
    %v739 = vshrl.u32 %v738, 7
    %v740 = vsub.s32 3, %v739
    %v741 = vrot.slane %v608, %v740
    %v742 = vlaneseq
    %v743 = vshrl.u32 %v742, 7
    %v744 = vsub.s32 3, %v743
    %v745 = vrot.slane %v607, %v744
    %v746 = vlaneseq
    %v747 = vshrl.u32 %v746, 7
    %v748 = vsub.s32 3, %v747
    %v749 = vrot.slane %v606, %v748
    %v750 = vlaneseq
    %v751 = vshrl.u32 %v750, 7
    %v752 = vsub.s32 3, %v751
    %v753 = vrot.slane %v605, %v752
    %v754 = vlaneseq
    %v755 = vshrl.u32 %v754, 7
    %v756 = vsub.s32 3, %v755
    %v757 = vrot.slane %v604, %v756
    %v758 = vmul.f32 %v732, %v737
    %v759 = vmul.f32 %v732, %v741
    %v760 = vmul.f32 %v732, %v745
    %v761 = vmul.f32 %v732, %v749
    %v762 = vmul.f32 %v732, %v753
    %v763 = vmul.f32 %v732, %v757
    %v764 = vadd.f32 %v724, %v758
    %v765 = vadd.f32 %v725, %v759
    %v766 = vadd.f32 %v726, %v760
    %v767 = vadd.f32 %v727, %v761
    %v768 = vadd.f32 %v728, %v762
    %v769 = vadd.f32 %v729, %v763
    %770 = vset.pattern.permute.xlu0 16
    %771 = vperm.xlu0 %770, %v45
    %v772 = vpop.permute.xlu0 %771
    %v774 = vlaneseq
    %v775 = vshrl.u32 %v774, 7
    %v776 = vsub.s32 0, %v775
    %v777 = vrot.slane %v42, %v776
    %v778 = vlaneseq
    %v779 = vshrl.u32 %v778, 7
    %v780 = vsub.s32 4, %v779
    %v781 = vrot.slane %v42, %v780
    %v782 = vlaneseq
    %v783 = vshrl.u32 %v782, 7
    %v784 = vsub.s32 0, %v783
    %v785 = vrot.slane %v43, %v784
    %v786 = vlaneseq
    %v787 = vshrl.u32 %v786, 7
    %v788 = vsub.s32 4, %v787
    %v789 = vrot.slane %v43, %v788
    %v790 = vlaneseq
    %v791 = vshrl.u32 %v790, 7
    %v792 = vsub.s32 0, %v791
    %v793 = vrot.slane %v44, %v792
    %v794 = vlaneseq
    %v795 = vshrl.u32 %v794, 7
    %v796 = vsub.s32 4, %v795
    %v797 = vrot.slane %v44, %v796
    %v804 = vlaneseq
    %v805 = vshrl.u32 %v804, 7
    %v806 = vsub.s32 0, %v805
    %v807 = vrot.slane %v777, %v806
    %v808 = vlaneseq
    %v809 = vshrl.u32 %v808, 7
    %v810 = vsub.s32 0, %v809
    %v811 = vrot.slane %v781, %v810
    %v812 = vlaneseq
    %v813 = vshrl.u32 %v812, 7
    %v814 = vsub.s32 0, %v813
    %v815 = vrot.slane %v785, %v814
    %v816 = vlaneseq
    %v817 = vshrl.u32 %v816, 7
    %v818 = vsub.s32 0, %v817
    %v819 = vrot.slane %v789, %v818
    %v820 = vlaneseq
    %v821 = vshrl.u32 %v820, 7
    %v822 = vsub.s32 0, %v821
    %v823 = vrot.slane %v793, %v822
    %v824 = vlaneseq
    %v825 = vshrl.u32 %v824, 7
    %v826 = vsub.s32 0, %v825
    %v827 = vrot.slane %v797, %v826
    %v828 = vmul.f32 %v772, %v807
    %v829 = vmul.f32 %v772, %v811
    %v830 = vmul.f32 %v772, %v815
    %v831 = vmul.f32 %v772, %v819
    %v832 = vmul.f32 %v772, %v823
    %v833 = vmul.f32 %v772, %v827
    %v834 = vadd.f32 %v764, %v828
    %v835 = vadd.f32 %v765, %v829
    %v836 = vadd.f32 %v766, %v830
    %v837 = vadd.f32 %v767, %v831
    %v838 = vadd.f32 %v768, %v832
    %v839 = vadd.f32 %v769, %v833
    %840 = vset.pattern.permute.xlu0 17
    %841 = vperm.xlu0 %840, %v45
    %v842 = vpop.permute.xlu0 %841
    %v844 = vlaneseq
    %v845 = vshrl.u32 %v844, 7
    %v846 = vsub.s32 1, %v845
    %v847 = vrot.slane %v42, %v846
    %v848 = vlaneseq
    %v849 = vshrl.u32 %v848, 7
    %v850 = vsub.s32 5, %v849
    %v851 = vrot.slane %v42, %v850
    %v852 = vlaneseq
    %v853 = vshrl.u32 %v852, 7
    %v854 = vsub.s32 1, %v853
    %v855 = vrot.slane %v43, %v854
    %v856 = vlaneseq
    %v857 = vshrl.u32 %v856, 7
    %v858 = vsub.s32 5, %v857
    %v859 = vrot.slane %v43, %v858
    %v860 = vlaneseq
    %v861 = vshrl.u32 %v860, 7
    %v862 = vsub.s32 1, %v861
    %v863 = vrot.slane %v44, %v862
    %v864 = vlaneseq
    %v865 = vshrl.u32 %v864, 7
    %v866 = vsub.s32 5, %v865
    %v867 = vrot.slane %v44, %v866
    %v874 = vlaneseq
    %v875 = vshrl.u32 %v874, 7
    %v876 = vsub.s32 1, %v875
    %v877 = vrot.slane %v847, %v876
    %v878 = vlaneseq
    %v879 = vshrl.u32 %v878, 7
    %v880 = vsub.s32 1, %v879
    %v881 = vrot.slane %v851, %v880
    %v882 = vlaneseq
    %v883 = vshrl.u32 %v882, 7
    %v884 = vsub.s32 1, %v883
    %v885 = vrot.slane %v855, %v884
    %v886 = vlaneseq
    %v887 = vshrl.u32 %v886, 7
    %v888 = vsub.s32 1, %v887
    %v889 = vrot.slane %v859, %v888
    %v890 = vlaneseq
    %v891 = vshrl.u32 %v890, 7
    %v892 = vsub.s32 1, %v891
    %v893 = vrot.slane %v863, %v892
    %v894 = vlaneseq
    %v895 = vshrl.u32 %v894, 7
    %v896 = vsub.s32 1, %v895
    %v897 = vrot.slane %v867, %v896
    %v898 = vmul.f32 %v842, %v877
    %v899 = vmul.f32 %v842, %v881
    %v900 = vmul.f32 %v842, %v885
    %v901 = vmul.f32 %v842, %v889
    %v902 = vmul.f32 %v842, %v893
    %v903 = vmul.f32 %v842, %v897
    %v904 = vadd.f32 %v834, %v898
    %v905 = vadd.f32 %v835, %v899
    %v906 = vadd.f32 %v836, %v900
    %v907 = vadd.f32 %v837, %v901
    %v908 = vadd.f32 %v838, %v902
    %v909 = vadd.f32 %v839, %v903
    %910 = vset.pattern.permute.xlu0 18
    %911 = vperm.xlu0 %910, %v45
    %v912 = vpop.permute.xlu0 %911
    %v914 = vlaneseq
    %v915 = vshrl.u32 %v914, 7
    %v916 = vsub.s32 2, %v915
    %v917 = vrot.slane %v42, %v916
    %v918 = vlaneseq
    %v919 = vshrl.u32 %v918, 7
    %v920 = vsub.s32 6, %v919
    %v921 = vrot.slane %v42, %v920
    %v922 = vlaneseq
    %v923 = vshrl.u32 %v922, 7
    %v924 = vsub.s32 2, %v923
    %v925 = vrot.slane %v43, %v924
    %v926 = vlaneseq
    %v927 = vshrl.u32 %v926, 7
    %v928 = vsub.s32 6, %v927
    %v929 = vrot.slane %v43, %v928
    %v930 = vlaneseq
    %v931 = vshrl.u32 %v930, 7
    %v932 = vsub.s32 2, %v931
    %v933 = vrot.slane %v44, %v932
    %v934 = vlaneseq
    %v935 = vshrl.u32 %v934, 7
    %v936 = vsub.s32 6, %v935
    %v937 = vrot.slane %v44, %v936
    %v944 = vlaneseq
    %v945 = vshrl.u32 %v944, 7
    %v946 = vsub.s32 2, %v945
    %v947 = vrot.slane %v917, %v946
    %v948 = vlaneseq
    %v949 = vshrl.u32 %v948, 7
    %v950 = vsub.s32 2, %v949
    %v951 = vrot.slane %v921, %v950
    %v952 = vlaneseq
    %v953 = vshrl.u32 %v952, 7
    %v954 = vsub.s32 2, %v953
    %v955 = vrot.slane %v925, %v954
    %v956 = vlaneseq
    %v957 = vshrl.u32 %v956, 7
    %v958 = vsub.s32 2, %v957
    %v959 = vrot.slane %v929, %v958
    %v960 = vlaneseq
    %v961 = vshrl.u32 %v960, 7
    %v962 = vsub.s32 2, %v961
    %v963 = vrot.slane %v933, %v962
    %v964 = vlaneseq
    %v965 = vshrl.u32 %v964, 7
    %v966 = vsub.s32 2, %v965
    %v967 = vrot.slane %v937, %v966
    %v968 = vmul.f32 %v912, %v947
    %v969 = vmul.f32 %v912, %v951
    %v970 = vmul.f32 %v912, %v955
    %v971 = vmul.f32 %v912, %v959
    %v972 = vmul.f32 %v912, %v963
    %v973 = vmul.f32 %v912, %v967
    %v974 = vadd.f32 %v904, %v968
    %v975 = vadd.f32 %v905, %v969
    %v976 = vadd.f32 %v906, %v970
    %v977 = vadd.f32 %v907, %v971
    %v978 = vadd.f32 %v908, %v972
    %v979 = vadd.f32 %v909, %v973
    %980 = vset.pattern.permute.xlu0 19
    %981 = vperm.xlu0 %980, %v45
    %v982 = vpop.permute.xlu0 %981
    %v984 = vlaneseq
    %v985 = vshrl.u32 %v984, 7
    %v986 = vsub.s32 3, %v985
    %v987 = vrot.slane %v42, %v986
    %v988 = vlaneseq
    %v989 = vshrl.u32 %v988, 7
    %v990 = vsub.s32 7, %v989
    %v991 = vrot.slane %v42, %v990
    %v992 = vlaneseq
    %v993 = vshrl.u32 %v992, 7
    %v994 = vsub.s32 3, %v993
    %v995 = vrot.slane %v43, %v994
    %v996 = vlaneseq
    %v997 = vshrl.u32 %v996, 7
    %v998 = vsub.s32 7, %v997
    %v999 = vrot.slane %v43, %v998
    %v1000 = vlaneseq
    %v1001 = vshrl.u32 %v1000, 7
    %v1002 = vsub.s32 3, %v1001
    %v1003 = vrot.slane %v44, %v1002
    %v1004 = vlaneseq
    %v1005 = vshrl.u32 %v1004, 7
    %v1006 = vsub.s32 7, %v1005
    %v1007 = vrot.slane %v44, %v1006
    %v1014 = vlaneseq
    %v1015 = vshrl.u32 %v1014, 7
    %v1016 = vsub.s32 3, %v1015
    %v1017 = vrot.slane %v987, %v1016
    %v1018 = vlaneseq
    %v1019 = vshrl.u32 %v1018, 7
    %v1020 = vsub.s32 3, %v1019
    %v1021 = vrot.slane %v991, %v1020
    %v1022 = vlaneseq
    %v1023 = vshrl.u32 %v1022, 7
    %v1024 = vsub.s32 3, %v1023
    %v1025 = vrot.slane %v995, %v1024
    %v1026 = vlaneseq
    %v1027 = vshrl.u32 %v1026, 7
    %v1028 = vsub.s32 3, %v1027
    %v1029 = vrot.slane %v999, %v1028
    %v1030 = vlaneseq
    %v1031 = vshrl.u32 %v1030, 7
    %v1032 = vsub.s32 3, %v1031
    %v1033 = vrot.slane %v1003, %v1032
    %v1034 = vlaneseq
    %v1035 = vshrl.u32 %v1034, 7
    %v1036 = vsub.s32 3, %v1035
    %v1037 = vrot.slane %v1007, %v1036
    %v1038 = vmul.f32 %v982, %v1017
    %v1039 = vmul.f32 %v982, %v1021
    %v1040 = vmul.f32 %v982, %v1025
    %v1041 = vmul.f32 %v982, %v1029
    %v1042 = vmul.f32 %v982, %v1033
    %v1043 = vmul.f32 %v982, %v1037
    %v1044 = vadd.f32 %v974, %v1038
    %v1045 = vadd.f32 %v975, %v1039
    %v1046 = vadd.f32 %v976, %v1040
    %v1047 = vadd.f32 %v977, %v1041
    %v1048 = vadd.f32 %v978, %v1042
    %v1049 = vadd.f32 %v979, %v1043
    %1050 = vrot.lane.b32.xlu0 %v42, 127
    %v1051 = vpop.permute.xlu0 %1050
    %1052 = vrot.lane.b32.xlu0 %v51, 127
    %v1053 = vpop.permute.xlu0 %1052
    %1054 = vrot.lane.b32.xlu0 %v43, 127
    %v1055 = vpop.permute.xlu0 %1054
    %1056 = vrot.lane.b32.xlu0 %v52, 127
    %v1057 = vpop.permute.xlu0 %1056
    %1058 = vrot.lane.b32.xlu0 %v44, 127
    %v1059 = vpop.permute.xlu0 %1058
    %1060 = vrot.lane.b32.xlu0 %v53, 127
    %v1061 = vpop.permute.xlu0 %1060
    %vm1062 = vcmp.lt.s32.totalorder %v70, 127
    %v1063 = vsel %vm1062, %v1059, %v1061
    %v1064 = vsel %vm1062, %v1057, %v1059
    %v1065 = vsel %vm1062, %v1055, %v1057
    %v1066 = vsel %vm1062, %v1053, %v1055
    %v1067 = vsel %vm1062, %v1051, %v1053
    %v1068 = vsel %vm1062, %v1061, %v1051
    %1069 = vset.pattern.permute.xlu0 20
    %1070 = vperm.xlu0 %1069, %v45
    %v1071 = vpop.permute.xlu0 %1070
    %v1073 = vlaneseq
    %v1074 = vshrl.u32 %v1073, 7
    %v1075 = vsub.s32 0, %v1074
    %v1076 = vrot.slane %v1067, %v1075
    %v1077 = vlaneseq
    %v1078 = vshrl.u32 %v1077, 7
    %v1079 = vsub.s32 0, %v1078
    %v1080 = vrot.slane %v1066, %v1079
    %v1081 = vlaneseq
    %v1082 = vshrl.u32 %v1081, 7
    %v1083 = vsub.s32 0, %v1082
    %v1084 = vrot.slane %v1065, %v1083
    %v1085 = vlaneseq
    %v1086 = vshrl.u32 %v1085, 7
    %v1087 = vsub.s32 0, %v1086
    %v1088 = vrot.slane %v1064, %v1087
    %v1089 = vlaneseq
    %v1090 = vshrl.u32 %v1089, 7
    %v1091 = vsub.s32 0, %v1090
    %v1092 = vrot.slane %v1063, %v1091
    %v1093 = vlaneseq
    %v1094 = vshrl.u32 %v1093, 7
    %v1095 = vsub.s32 0, %v1094
    %v1096 = vrot.slane %v1068, %v1095
    %v1097 = vmul.f32 %v1071, %v1076
    %v1098 = vmul.f32 %v1071, %v1080
    %v1099 = vmul.f32 %v1071, %v1084
    %v1100 = vmul.f32 %v1071, %v1088
    %v1101 = vmul.f32 %v1071, %v1092
    %v1102 = vmul.f32 %v1071, %v1096
    %v1103 = vadd.f32 %v1044, %v1097
    %v1104 = vadd.f32 %v1045, %v1098
    %v1105 = vadd.f32 %v1046, %v1099
    %v1106 = vadd.f32 %v1047, %v1100
    %v1107 = vadd.f32 %v1048, %v1101
    %v1108 = vadd.f32 %v1049, %v1102
    %1109 = vset.pattern.permute.xlu0 21
    %1110 = vperm.xlu0 %1109, %v45
    %v1111 = vpop.permute.xlu0 %1110
    %v1113 = vlaneseq
    %v1114 = vshrl.u32 %v1113, 7
    %v1115 = vsub.s32 1, %v1114
    %v1116 = vrot.slane %v1067, %v1115
    %v1117 = vlaneseq
    %v1118 = vshrl.u32 %v1117, 7
    %v1119 = vsub.s32 1, %v1118
    %v1120 = vrot.slane %v1066, %v1119
    %v1121 = vlaneseq
    %v1122 = vshrl.u32 %v1121, 7
    %v1123 = vsub.s32 1, %v1122
    %v1124 = vrot.slane %v1065, %v1123
    %v1125 = vlaneseq
    %v1126 = vshrl.u32 %v1125, 7
    %v1127 = vsub.s32 1, %v1126
    %v1128 = vrot.slane %v1064, %v1127
    %v1129 = vlaneseq
    %v1130 = vshrl.u32 %v1129, 7
    %v1131 = vsub.s32 1, %v1130
    %v1132 = vrot.slane %v1063, %v1131
    %v1133 = vlaneseq
    %v1134 = vshrl.u32 %v1133, 7
    %v1135 = vsub.s32 1, %v1134
    %v1136 = vrot.slane %v1068, %v1135
    %v1137 = vmul.f32 %v1111, %v1116
    %v1138 = vmul.f32 %v1111, %v1120
    %v1139 = vmul.f32 %v1111, %v1124
    %v1140 = vmul.f32 %v1111, %v1128
    %v1141 = vmul.f32 %v1111, %v1132
    %v1142 = vmul.f32 %v1111, %v1136
    %v1143 = vadd.f32 %v1103, %v1137
    %v1144 = vadd.f32 %v1104, %v1138
    %v1145 = vadd.f32 %v1105, %v1139
    %v1146 = vadd.f32 %v1106, %v1140
    %v1147 = vadd.f32 %v1107, %v1141
    %v1148 = vadd.f32 %v1108, %v1142
    %1149 = vset.pattern.permute.xlu0 22
    %1150 = vperm.xlu0 %1149, %v45
    %v1151 = vpop.permute.xlu0 %1150
    %v1153 = vlaneseq
    %v1154 = vshrl.u32 %v1153, 7
    %v1155 = vsub.s32 2, %v1154
    %v1156 = vrot.slane %v1067, %v1155
    %v1157 = vlaneseq
    %v1158 = vshrl.u32 %v1157, 7
    %v1159 = vsub.s32 2, %v1158
    %v1160 = vrot.slane %v1066, %v1159
    %v1161 = vlaneseq
    %v1162 = vshrl.u32 %v1161, 7
    %v1163 = vsub.s32 2, %v1162
    %v1164 = vrot.slane %v1065, %v1163
    %v1165 = vlaneseq
    %v1166 = vshrl.u32 %v1165, 7
    %v1167 = vsub.s32 2, %v1166
    %v1168 = vrot.slane %v1064, %v1167
    %v1169 = vlaneseq
    %v1170 = vshrl.u32 %v1169, 7
    %v1171 = vsub.s32 2, %v1170
    %v1172 = vrot.slane %v1063, %v1171
    %v1173 = vlaneseq
    %v1174 = vshrl.u32 %v1173, 7
    %v1175 = vsub.s32 2, %v1174
    %v1176 = vrot.slane %v1068, %v1175
    %v1177 = vmul.f32 %v1151, %v1156
    %v1178 = vmul.f32 %v1151, %v1160
    %v1179 = vmul.f32 %v1151, %v1164
    %v1180 = vmul.f32 %v1151, %v1168
    %v1181 = vmul.f32 %v1151, %v1172
    %v1182 = vmul.f32 %v1151, %v1176
    %v1183 = vadd.f32 %v1143, %v1177
    %v1184 = vadd.f32 %v1144, %v1178
    %v1185 = vadd.f32 %v1145, %v1179
    %v1186 = vadd.f32 %v1146, %v1180
    %v1187 = vadd.f32 %v1147, %v1181
    %v1188 = vadd.f32 %v1148, %v1182
    %1189 = vset.pattern.permute.xlu0 23
    %1190 = vperm.xlu0 %1189, %v45
    %v1191 = vpop.permute.xlu0 %1190
    %v1193 = vlaneseq
    %v1194 = vshrl.u32 %v1193, 7
    %v1195 = vsub.s32 3, %v1194
    %v1196 = vrot.slane %v1067, %v1195
    %v1197 = vlaneseq
    %v1198 = vshrl.u32 %v1197, 7
    %v1199 = vsub.s32 3, %v1198
    %v1200 = vrot.slane %v1066, %v1199
    %v1201 = vlaneseq
    %v1202 = vshrl.u32 %v1201, 7
    %v1203 = vsub.s32 3, %v1202
    %v1204 = vrot.slane %v1065, %v1203
    %v1205 = vlaneseq
    %v1206 = vshrl.u32 %v1205, 7
    %v1207 = vsub.s32 3, %v1206
    %v1208 = vrot.slane %v1064, %v1207
    %v1209 = vlaneseq
    %v1210 = vshrl.u32 %v1209, 7
    %v1211 = vsub.s32 3, %v1210
    %v1212 = vrot.slane %v1063, %v1211
    %v1213 = vlaneseq
    %v1214 = vshrl.u32 %v1213, 7
    %v1215 = vsub.s32 3, %v1214
    %v1216 = vrot.slane %v1068, %v1215
    %v1217 = vmul.f32 %v1191, %v1196
    %v1218 = vmul.f32 %v1191, %v1200
    %v1219 = vmul.f32 %v1191, %v1204
    %v1220 = vmul.f32 %v1191, %v1208
    %v1221 = vmul.f32 %v1191, %v1212
    %v1222 = vmul.f32 %v1191, %v1216
    %v1223 = vadd.f32 %v1183, %v1217
    %v1224 = vadd.f32 %v1184, %v1218
    %v1225 = vadd.f32 %v1185, %v1219
    %v1226 = vadd.f32 %v1186, %v1220
    %v1227 = vadd.f32 %v1187, %v1221
    %v1228 = vadd.f32 %v1188, %v1222
    %1229 = vrot.lane.b32.xlu0 %v42, 111
    %v1230 = vpop.permute.xlu0 %1229
    %1231 = vrot.lane.b32.xlu0 %v51, 111
    %v1232 = vpop.permute.xlu0 %1231
    %1233 = vrot.lane.b32.xlu0 %v43, 111
    %v1234 = vpop.permute.xlu0 %1233
    %1235 = vrot.lane.b32.xlu0 %v52, 111
    %v1236 = vpop.permute.xlu0 %1235
    %1237 = vrot.lane.b32.xlu0 %v44, 111
    %v1238 = vpop.permute.xlu0 %1237
    %1239 = vrot.lane.b32.xlu0 %v53, 111
    %v1240 = vpop.permute.xlu0 %1239
    %vm1241 = vcmp.lt.s32.totalorder %v70, 111
    %v1242 = vsel %vm1241, %v1238, %v1240
    %v1243 = vsel %vm1241, %v1236, %v1238
    %v1244 = vsel %vm1241, %v1234, %v1236
    %v1245 = vsel %vm1241, %v1232, %v1234
    %v1246 = vsel %vm1241, %v1230, %v1232
    %v1247 = vsel %vm1241, %v1240, %v1230
    %1248 = vset.pattern.permute.xlu0 24
    %1249 = vperm.xlu0 %1248, %v45
    %v1250 = vpop.permute.xlu0 %1249
    %v1252 = vlaneseq
    %v1253 = vshrl.u32 %v1252, 7
    %v1254 = vsub.s32 0, %v1253
    %v1255 = vrot.slane %v1246, %v1254
    %v1256 = vlaneseq
    %v1257 = vshrl.u32 %v1256, 7
    %v1258 = vsub.s32 0, %v1257
    %v1259 = vrot.slane %v1245, %v1258
    %v1260 = vlaneseq
    %v1261 = vshrl.u32 %v1260, 7
    %v1262 = vsub.s32 0, %v1261
    %v1263 = vrot.slane %v1244, %v1262
    %v1264 = vlaneseq
    %v1265 = vshrl.u32 %v1264, 7
    %v1266 = vsub.s32 0, %v1265
    %v1267 = vrot.slane %v1243, %v1266
    %v1268 = vlaneseq
    %v1269 = vshrl.u32 %v1268, 7
    %v1270 = vsub.s32 0, %v1269
    %v1271 = vrot.slane %v1242, %v1270
    %v1272 = vlaneseq
    %v1273 = vshrl.u32 %v1272, 7
    %v1274 = vsub.s32 0, %v1273
    %v1275 = vrot.slane %v1247, %v1274
    %v1276 = vmul.f32 %v1250, %v1255
    %v1277 = vmul.f32 %v1250, %v1259
    %v1278 = vmul.f32 %v1250, %v1263
    %v1279 = vmul.f32 %v1250, %v1267
    %v1280 = vmul.f32 %v1250, %v1271
    %v1281 = vmul.f32 %v1250, %v1275
    %v1282 = vadd.f32 %v1223, %v1276
    %v1283 = vadd.f32 %v1224, %v1277
    %v1284 = vadd.f32 %v1225, %v1278
    %v1285 = vadd.f32 %v1226, %v1279
    %v1286 = vadd.f32 %v1227, %v1280
    %v1287 = vadd.f32 %v1228, %v1281
    %1288 = vset.pattern.permute.xlu0 25
    %1289 = vperm.xlu0 %1288, %v45
    %v1290 = vpop.permute.xlu0 %1289
    %v1292 = vlaneseq
    %v1293 = vshrl.u32 %v1292, 7
    %v1294 = vsub.s32 1, %v1293
    %v1295 = vrot.slane %v1246, %v1294
    %v1296 = vlaneseq
    %v1297 = vshrl.u32 %v1296, 7
    %v1298 = vsub.s32 1, %v1297
    %v1299 = vrot.slane %v1245, %v1298
    %v1300 = vlaneseq
    %v1301 = vshrl.u32 %v1300, 7
    %v1302 = vsub.s32 1, %v1301
    %v1303 = vrot.slane %v1244, %v1302
    %v1304 = vlaneseq
    %v1305 = vshrl.u32 %v1304, 7
    %v1306 = vsub.s32 1, %v1305
    %v1307 = vrot.slane %v1243, %v1306
    %v1308 = vlaneseq
    %v1309 = vshrl.u32 %v1308, 7
    %v1310 = vsub.s32 1, %v1309
    %v1311 = vrot.slane %v1242, %v1310
    %v1312 = vlaneseq
    %v1313 = vshrl.u32 %v1312, 7
    %v1314 = vsub.s32 1, %v1313
    %v1315 = vrot.slane %v1247, %v1314
    %v1316 = vmul.f32 %v1290, %v1295
    %v1317 = vmul.f32 %v1290, %v1299
    %v1318 = vmul.f32 %v1290, %v1303
    %v1319 = vmul.f32 %v1290, %v1307
    %v1320 = vmul.f32 %v1290, %v1311
    %v1321 = vmul.f32 %v1290, %v1315
    %v1322 = vadd.f32 %v1282, %v1316
    %v1323 = vadd.f32 %v1283, %v1317
    %v1324 = vadd.f32 %v1284, %v1318
    %v1325 = vadd.f32 %v1285, %v1319
    %v1326 = vadd.f32 %v1286, %v1320
    %v1327 = vadd.f32 %v1287, %v1321
    %1328 = vset.pattern.permute.xlu0 26
    %1329 = vperm.xlu0 %1328, %v45
    %v1330 = vpop.permute.xlu0 %1329
    %v1332 = vlaneseq
    %v1333 = vshrl.u32 %v1332, 7
    %v1334 = vsub.s32 2, %v1333
    %v1335 = vrot.slane %v1246, %v1334
    %v1336 = vlaneseq
    %v1337 = vshrl.u32 %v1336, 7
    %v1338 = vsub.s32 2, %v1337
    %v1339 = vrot.slane %v1245, %v1338
    %v1340 = vlaneseq
    %v1341 = vshrl.u32 %v1340, 7
    %v1342 = vsub.s32 2, %v1341
    %v1343 = vrot.slane %v1244, %v1342
    %v1344 = vlaneseq
    %v1345 = vshrl.u32 %v1344, 7
    %v1346 = vsub.s32 2, %v1345
    %v1347 = vrot.slane %v1243, %v1346
    %v1348 = vlaneseq
    %v1349 = vshrl.u32 %v1348, 7
    %v1350 = vsub.s32 2, %v1349
    %v1351 = vrot.slane %v1242, %v1350
    %v1352 = vlaneseq
    %v1353 = vshrl.u32 %v1352, 7
    %v1354 = vsub.s32 2, %v1353
    %v1355 = vrot.slane %v1247, %v1354
    %v1356 = vmul.f32 %v1330, %v1335
    %v1357 = vmul.f32 %v1330, %v1339
    %v1358 = vmul.f32 %v1330, %v1343
    %v1359 = vmul.f32 %v1330, %v1347
    %v1360 = vmul.f32 %v1330, %v1351
    %v1361 = vmul.f32 %v1330, %v1355
    %v1362 = vadd.f32 %v1322, %v1356
    %v1363 = vadd.f32 %v1323, %v1357
    %v1364 = vadd.f32 %v1324, %v1358
    %v1365 = vadd.f32 %v1325, %v1359
    %v1366 = vadd.f32 %v1326, %v1360
    %v1367 = vadd.f32 %v1327, %v1361
    %1368 = vset.pattern.permute.xlu0 27
    %1369 = vperm.xlu0 %1368, %v45
    %v1370 = vpop.permute.xlu0 %1369
    %v1372 = vlaneseq
    %v1373 = vshrl.u32 %v1372, 7
    %v1374 = vsub.s32 3, %v1373
    %v1375 = vrot.slane %v1246, %v1374
    %v1376 = vlaneseq
    %v1377 = vshrl.u32 %v1376, 7
    %v1378 = vsub.s32 3, %v1377
    %v1379 = vrot.slane %v1245, %v1378
    %v1380 = vlaneseq
    %v1381 = vshrl.u32 %v1380, 7
    %v1382 = vsub.s32 3, %v1381
    %v1383 = vrot.slane %v1244, %v1382
    %v1384 = vlaneseq
    %v1385 = vshrl.u32 %v1384, 7
    %v1386 = vsub.s32 3, %v1385
    %v1387 = vrot.slane %v1243, %v1386
    %v1388 = vlaneseq
    %v1389 = vshrl.u32 %v1388, 7
    %v1390 = vsub.s32 3, %v1389
    %v1391 = vrot.slane %v1242, %v1390
    %v1392 = vlaneseq
    %v1393 = vshrl.u32 %v1392, 7
    %v1394 = vsub.s32 3, %v1393
    %v1395 = vrot.slane %v1247, %v1394
    %v1396 = vmul.f32 %v1370, %v1375
    %v1397 = vmul.f32 %v1370, %v1379
    %v1398 = vmul.f32 %v1370, %v1383
    %v1399 = vmul.f32 %v1370, %v1387
    %v1400 = vmul.f32 %v1370, %v1391
    %v1401 = vmul.f32 %v1370, %v1395
    %v1402 = vadd.f32 %v1362, %v1396
    %v1403 = vadd.f32 %v1363, %v1397
    %v1404 = vadd.f32 %v1364, %v1398
    %v1405 = vadd.f32 %v1365, %v1399
    %v1406 = vadd.f32 %v1366, %v1400
    %v1407 = vadd.f32 %v1367, %v1401
    %1408 = vrot.lane.b32.xlu0 %v42, 110
    %v1409 = vpop.permute.xlu0 %1408
    %1410 = vrot.lane.b32.xlu0 %v51, 110
    %v1411 = vpop.permute.xlu0 %1410
    %1412 = vrot.lane.b32.xlu0 %v43, 110
    %v1413 = vpop.permute.xlu0 %1412
    %1414 = vrot.lane.b32.xlu0 %v52, 110
    %v1415 = vpop.permute.xlu0 %1414
    %1416 = vrot.lane.b32.xlu0 %v44, 110
    %v1417 = vpop.permute.xlu0 %1416
    %1418 = vrot.lane.b32.xlu0 %v53, 110
    %v1419 = vpop.permute.xlu0 %1418
    %vm1420 = vcmp.lt.s32.totalorder %v70, 110
    %v1421 = vsel %vm1420, %v1417, %v1419
    %v1422 = vsel %vm1420, %v1415, %v1417
    %v1423 = vsel %vm1420, %v1413, %v1415
    %v1424 = vsel %vm1420, %v1411, %v1413
    %v1425 = vsel %vm1420, %v1409, %v1411
    %v1426 = vsel %vm1420, %v1419, %v1409
    %1427 = vset.pattern.permute.xlu0 28
    %1428 = vperm.xlu0 %1427, %v45
    %v1429 = vpop.permute.xlu0 %1428
    %v1431 = vlaneseq
    %v1432 = vshrl.u32 %v1431, 7
    %v1433 = vsub.s32 0, %v1432
    %v1434 = vrot.slane %v1425, %v1433
    %v1435 = vlaneseq
    %v1436 = vshrl.u32 %v1435, 7
    %v1437 = vsub.s32 0, %v1436
    %v1438 = vrot.slane %v1424, %v1437
    %v1439 = vlaneseq
    %v1440 = vshrl.u32 %v1439, 7
    %v1441 = vsub.s32 0, %v1440
    %v1442 = vrot.slane %v1423, %v1441
    %v1443 = vlaneseq
    %v1444 = vshrl.u32 %v1443, 7
    %v1445 = vsub.s32 0, %v1444
    %v1446 = vrot.slane %v1422, %v1445
    %v1447 = vlaneseq
    %v1448 = vshrl.u32 %v1447, 7
    %v1449 = vsub.s32 0, %v1448
    %v1450 = vrot.slane %v1421, %v1449
    %v1451 = vlaneseq
    %v1452 = vshrl.u32 %v1451, 7
    %v1453 = vsub.s32 0, %v1452
    %v1454 = vrot.slane %v1426, %v1453
    %v1455 = vmul.f32 %v1429, %v1434
    %v1456 = vmul.f32 %v1429, %v1438
    %v1457 = vmul.f32 %v1429, %v1442
    %v1458 = vmul.f32 %v1429, %v1446
    %v1459 = vmul.f32 %v1429, %v1450
    %v1460 = vmul.f32 %v1429, %v1454
    %v1461 = vadd.f32 %v1402, %v1455
    %v1462 = vadd.f32 %v1403, %v1456
    %v1463 = vadd.f32 %v1404, %v1457
    %v1464 = vadd.f32 %v1405, %v1458
    %v1465 = vadd.f32 %v1406, %v1459
    %v1466 = vadd.f32 %v1407, %v1460
    %1467 = vset.pattern.permute.xlu0 29
    %1468 = vperm.xlu0 %1467, %v45
    %v1469 = vpop.permute.xlu0 %1468
    %v1471 = vlaneseq
    %v1472 = vshrl.u32 %v1471, 7
    %v1473 = vsub.s32 1, %v1472
    %v1474 = vrot.slane %v1425, %v1473
    %v1475 = vlaneseq
    %v1476 = vshrl.u32 %v1475, 7
    %v1477 = vsub.s32 1, %v1476
    %v1478 = vrot.slane %v1424, %v1477
    %v1479 = vlaneseq
    %v1480 = vshrl.u32 %v1479, 7
    %v1481 = vsub.s32 1, %v1480
    %v1482 = vrot.slane %v1423, %v1481
    %v1483 = vlaneseq
    %v1484 = vshrl.u32 %v1483, 7
    %v1485 = vsub.s32 1, %v1484
    %v1486 = vrot.slane %v1422, %v1485
    %v1487 = vlaneseq
    %v1488 = vshrl.u32 %v1487, 7
    %v1489 = vsub.s32 1, %v1488
    %v1490 = vrot.slane %v1421, %v1489
    %v1491 = vlaneseq
    %v1492 = vshrl.u32 %v1491, 7
    %v1493 = vsub.s32 1, %v1492
    %v1494 = vrot.slane %v1426, %v1493
    %v1495 = vmul.f32 %v1469, %v1474
    %v1496 = vmul.f32 %v1469, %v1478
    %v1497 = vmul.f32 %v1469, %v1482
    %v1498 = vmul.f32 %v1469, %v1486
    %v1499 = vmul.f32 %v1469, %v1490
    %v1500 = vmul.f32 %v1469, %v1494
    %v1501 = vadd.f32 %v1461, %v1495
    %v1502 = vadd.f32 %v1462, %v1496
    %v1503 = vadd.f32 %v1463, %v1497
    %v1504 = vadd.f32 %v1464, %v1498
    %v1505 = vadd.f32 %v1465, %v1499
    %v1506 = vadd.f32 %v1466, %v1500
    %1507 = vset.pattern.permute.xlu0 30
    %1508 = vperm.xlu0 %1507, %v45
    %v1509 = vpop.permute.xlu0 %1508
    %v1511 = vlaneseq
    %v1512 = vshrl.u32 %v1511, 7
    %v1513 = vsub.s32 2, %v1512
    %v1514 = vrot.slane %v1425, %v1513
    %v1515 = vlaneseq
    %v1516 = vshrl.u32 %v1515, 7
    %v1517 = vsub.s32 2, %v1516
    %v1518 = vrot.slane %v1424, %v1517
    %v1519 = vlaneseq
    %v1520 = vshrl.u32 %v1519, 7
    %v1521 = vsub.s32 2, %v1520
    %v1522 = vrot.slane %v1423, %v1521
    %v1523 = vlaneseq
    %v1524 = vshrl.u32 %v1523, 7
    %v1525 = vsub.s32 2, %v1524
    %v1526 = vrot.slane %v1422, %v1525
    %v1527 = vlaneseq
    %v1528 = vshrl.u32 %v1527, 7
    %v1529 = vsub.s32 2, %v1528
    %v1530 = vrot.slane %v1421, %v1529
    %v1531 = vlaneseq
    %v1532 = vshrl.u32 %v1531, 7
    %v1533 = vsub.s32 2, %v1532
    %v1534 = vrot.slane %v1426, %v1533
    %v1535 = vmul.f32 %v1509, %v1514
    %v1536 = vmul.f32 %v1509, %v1518
    %v1537 = vmul.f32 %v1509, %v1522
    %v1538 = vmul.f32 %v1509, %v1526
    %v1539 = vmul.f32 %v1509, %v1530
    %v1540 = vmul.f32 %v1509, %v1534
    %v1541 = vadd.f32 %v1501, %v1535
    %v1542 = vadd.f32 %v1502, %v1536
    %v1543 = vadd.f32 %v1503, %v1537
    %v1544 = vadd.f32 %v1504, %v1538
    %v1545 = vadd.f32 %v1505, %v1539
    %v1546 = vadd.f32 %v1506, %v1540
    %1547 = vset.pattern.permute.xlu0 31
    %1548 = vperm.xlu0 %1547, %v45
    %v1549 = vpop.permute.xlu0 %1548
    %v1551 = vlaneseq
    %v1552 = vshrl.u32 %v1551, 7
    %v1553 = vsub.s32 3, %v1552
    %v1554 = vrot.slane %v1425, %v1553
    %v1555 = vlaneseq
    %v1556 = vshrl.u32 %v1555, 7
    %v1557 = vsub.s32 3, %v1556
    %v1558 = vrot.slane %v1424, %v1557
    %v1559 = vlaneseq
    %v1560 = vshrl.u32 %v1559, 7
    %v1561 = vsub.s32 3, %v1560
    %v1562 = vrot.slane %v1423, %v1561
    %v1563 = vlaneseq
    %v1564 = vshrl.u32 %v1563, 7
    %v1565 = vsub.s32 3, %v1564
    %v1566 = vrot.slane %v1422, %v1565
    %v1567 = vlaneseq
    %v1568 = vshrl.u32 %v1567, 7
    %v1569 = vsub.s32 3, %v1568
    %v1570 = vrot.slane %v1421, %v1569
    %v1571 = vlaneseq
    %v1572 = vshrl.u32 %v1571, 7
    %v1573 = vsub.s32 3, %v1572
    %v1574 = vrot.slane %v1426, %v1573
    %v1575 = vmul.f32 %v1549, %v1554
    %v1576 = vmul.f32 %v1549, %v1558
    %v1577 = vmul.f32 %v1549, %v1562
    %v1578 = vmul.f32 %v1549, %v1566
    %v1579 = vmul.f32 %v1549, %v1570
    %v1580 = vmul.f32 %v1549, %v1574
    %v1581 = vadd.f32 %v1541, %v1575
    %v1582 = vadd.f32 %v1542, %v1576
    %v1583 = vadd.f32 %v1543, %v1577
    %v1584 = vadd.f32 %v1544, %v1578
    %v1585 = vadd.f32 %v1545, %v1579
    %v1586 = vadd.f32 %v1546, %v1580
    %1587 = vrot.lane.b32.xlu0 %v42, 109
    %v1588 = vpop.permute.xlu0 %1587
    %1589 = vrot.lane.b32.xlu0 %v51, 109
    %v1590 = vpop.permute.xlu0 %1589
    %1591 = vrot.lane.b32.xlu0 %v43, 109
    %v1592 = vpop.permute.xlu0 %1591
    %1593 = vrot.lane.b32.xlu0 %v52, 109
    %v1594 = vpop.permute.xlu0 %1593
    %1595 = vrot.lane.b32.xlu0 %v44, 109
    %v1596 = vpop.permute.xlu0 %1595
    %1597 = vrot.lane.b32.xlu0 %v53, 109
    %v1598 = vpop.permute.xlu0 %1597
    %vm1599 = vcmp.lt.s32.totalorder %v70, 109
    %v1600 = vsel %vm1599, %v1596, %v1598
    %v1601 = vsel %vm1599, %v1594, %v1596
    %v1602 = vsel %vm1599, %v1592, %v1594
    %v1603 = vsel %vm1599, %v1590, %v1592
    %v1604 = vsel %vm1599, %v1588, %v1590
    %v1605 = vsel %vm1599, %v1598, %v1588
    %1606 = vset.pattern.permute.xlu0 32
    %1607 = vperm.xlu0 %1606, %v45
    %v1608 = vpop.permute.xlu0 %1607
    %v1610 = vlaneseq
    %v1611 = vshrl.u32 %v1610, 7
    %v1612 = vsub.s32 0, %v1611
    %v1613 = vrot.slane %v1604, %v1612
    %v1614 = vlaneseq
    %v1615 = vshrl.u32 %v1614, 7
    %v1616 = vsub.s32 0, %v1615
    %v1617 = vrot.slane %v1603, %v1616
    %v1618 = vlaneseq
    %v1619 = vshrl.u32 %v1618, 7
    %v1620 = vsub.s32 0, %v1619
    %v1621 = vrot.slane %v1602, %v1620
    %v1622 = vlaneseq
    %v1623 = vshrl.u32 %v1622, 7
    %v1624 = vsub.s32 0, %v1623
    %v1625 = vrot.slane %v1601, %v1624
    %v1626 = vlaneseq
    %v1627 = vshrl.u32 %v1626, 7
    %v1628 = vsub.s32 0, %v1627
    %v1629 = vrot.slane %v1600, %v1628
    %v1630 = vlaneseq
    %v1631 = vshrl.u32 %v1630, 7
    %v1632 = vsub.s32 0, %v1631
    %v1633 = vrot.slane %v1605, %v1632
    %v1634 = vmul.f32 %v1608, %v1613
    %v1635 = vmul.f32 %v1608, %v1617
    %v1636 = vmul.f32 %v1608, %v1621
    %v1637 = vmul.f32 %v1608, %v1625
    %v1638 = vmul.f32 %v1608, %v1629
    %v1639 = vmul.f32 %v1608, %v1633
    %v1640 = vadd.f32 %v1581, %v1634
    %v1641 = vadd.f32 %v1582, %v1635
    %v1642 = vadd.f32 %v1583, %v1636
    %v1643 = vadd.f32 %v1584, %v1637
    %v1644 = vadd.f32 %v1585, %v1638
    %v1645 = vadd.f32 %v1586, %v1639
    %1646 = vset.pattern.permute.xlu0 33
    %1647 = vperm.xlu0 %1646, %v45
    %v1648 = vpop.permute.xlu0 %1647
    %v1650 = vlaneseq
    %v1651 = vshrl.u32 %v1650, 7
    %v1652 = vsub.s32 1, %v1651
    %v1653 = vrot.slane %v1604, %v1652
    %v1654 = vlaneseq
    %v1655 = vshrl.u32 %v1654, 7
    %v1656 = vsub.s32 1, %v1655
    %v1657 = vrot.slane %v1603, %v1656
    %v1658 = vlaneseq
    %v1659 = vshrl.u32 %v1658, 7
    %v1660 = vsub.s32 1, %v1659
    %v1661 = vrot.slane %v1602, %v1660
    %v1662 = vlaneseq
    %v1663 = vshrl.u32 %v1662, 7
    %v1664 = vsub.s32 1, %v1663
    %v1665 = vrot.slane %v1601, %v1664
    %v1666 = vlaneseq
    %v1667 = vshrl.u32 %v1666, 7
    %v1668 = vsub.s32 1, %v1667
    %v1669 = vrot.slane %v1600, %v1668
    %v1670 = vlaneseq
    %v1671 = vshrl.u32 %v1670, 7
    %v1672 = vsub.s32 1, %v1671
    %v1673 = vrot.slane %v1605, %v1672
    %v1674 = vmul.f32 %v1648, %v1653
    %v1675 = vmul.f32 %v1648, %v1657
    %v1676 = vmul.f32 %v1648, %v1661
    %v1677 = vmul.f32 %v1648, %v1665
    %v1678 = vmul.f32 %v1648, %v1669
    %v1679 = vmul.f32 %v1648, %v1673
    %v1680 = vadd.f32 %v1640, %v1674
    %v1681 = vadd.f32 %v1641, %v1675
    %v1682 = vadd.f32 %v1642, %v1676
    %v1683 = vadd.f32 %v1643, %v1677
    %v1684 = vadd.f32 %v1644, %v1678
    %v1685 = vadd.f32 %v1645, %v1679
    %1686 = vset.pattern.permute.xlu0 34
    %1687 = vperm.xlu0 %1686, %v45
    %v1688 = vpop.permute.xlu0 %1687
    %v1690 = vlaneseq
    %v1691 = vshrl.u32 %v1690, 7
    %v1692 = vsub.s32 2, %v1691
    %v1693 = vrot.slane %v1604, %v1692
    %v1694 = vlaneseq
    %v1695 = vshrl.u32 %v1694, 7
    %v1696 = vsub.s32 2, %v1695
    %v1697 = vrot.slane %v1603, %v1696
    %v1698 = vlaneseq
    %v1699 = vshrl.u32 %v1698, 7
    %v1700 = vsub.s32 2, %v1699
    %v1701 = vrot.slane %v1602, %v1700
    %v1702 = vlaneseq
    %v1703 = vshrl.u32 %v1702, 7
    %v1704 = vsub.s32 2, %v1703
    %v1705 = vrot.slane %v1601, %v1704
    %v1706 = vlaneseq
    %v1707 = vshrl.u32 %v1706, 7
    %v1708 = vsub.s32 2, %v1707
    %v1709 = vrot.slane %v1600, %v1708
    %v1710 = vlaneseq
    %v1711 = vshrl.u32 %v1710, 7
    %v1712 = vsub.s32 2, %v1711
    %v1713 = vrot.slane %v1605, %v1712
    %v1714 = vmul.f32 %v1688, %v1693
    %v1715 = vmul.f32 %v1688, %v1697
    %v1716 = vmul.f32 %v1688, %v1701
    %v1717 = vmul.f32 %v1688, %v1705
    %v1718 = vmul.f32 %v1688, %v1709
    %v1719 = vmul.f32 %v1688, %v1713
    %v1720 = vadd.f32 %v1680, %v1714
    %v1721 = vadd.f32 %v1681, %v1715
    %v1722 = vadd.f32 %v1682, %v1716
    %v1723 = vadd.f32 %v1683, %v1717
    %v1724 = vadd.f32 %v1684, %v1718
    %v1725 = vadd.f32 %v1685, %v1719
    %1726 = vset.pattern.permute.xlu0 35
    %1727 = vperm.xlu0 %1726, %v45
    %v1728 = vpop.permute.xlu0 %1727
    %v1730 = vlaneseq
    %v1731 = vshrl.u32 %v1730, 7
    %v1732 = vsub.s32 3, %v1731
    %v1733 = vrot.slane %v1604, %v1732
    %v1734 = vlaneseq
    %v1735 = vshrl.u32 %v1734, 7
    %v1736 = vsub.s32 3, %v1735
    %v1737 = vrot.slane %v1603, %v1736
    %v1738 = vlaneseq
    %v1739 = vshrl.u32 %v1738, 7
    %v1740 = vsub.s32 3, %v1739
    %v1741 = vrot.slane %v1602, %v1740
    %v1742 = vlaneseq
    %v1743 = vshrl.u32 %v1742, 7
    %v1744 = vsub.s32 3, %v1743
    %v1745 = vrot.slane %v1601, %v1744
    %v1746 = vlaneseq
    %v1747 = vshrl.u32 %v1746, 7
    %v1748 = vsub.s32 3, %v1747
    %v1749 = vrot.slane %v1600, %v1748
    %v1750 = vlaneseq
    %v1751 = vshrl.u32 %v1750, 7
    %v1752 = vsub.s32 3, %v1751
    %v1753 = vrot.slane %v1605, %v1752
    %v1754 = vmul.f32 %v1728, %v1733
    %v1755 = vmul.f32 %v1728, %v1737
    %v1756 = vmul.f32 %v1728, %v1741
    %v1757 = vmul.f32 %v1728, %v1745
    %v1758 = vmul.f32 %v1728, %v1749
    %v1759 = vmul.f32 %v1728, %v1753
    %v1760 = vadd.f32 %v1720, %v1754
    %v1761 = vadd.f32 %v1721, %v1755
    %v1762 = vadd.f32 %v1722, %v1756
    %v1763 = vadd.f32 %v1723, %v1757
    %v1764 = vadd.f32 %v1724, %v1758
    %v1765 = vadd.f32 %v1725, %v1759
    %vm1766 = vcmp.gt.f32.partialorder %v1760, 0.0
    %vm1767 = vcmp.gt.f32.partialorder %v1761, 0.0
    %vm1768 = vcmp.gt.f32.partialorder %v1762, 0.0
    %vm1769 = vcmp.gt.f32.partialorder %v1763, 0.0
    %vm1770 = vcmp.gt.f32.partialorder %v1764, 0.0
    %vm1771 = vcmp.gt.f32.partialorder %v1765, 0.0
    %v1772 = vmul.f32 %v1760, 0.1
    %v1773 = vmul.f32 %v1761, 0.1
    %v1774 = vmul.f32 %v1762, 0.1
    %v1775 = vmul.f32 %v1763, 0.1
    %v1776 = vmul.f32 %v1764, 0.1
    %v1777 = vmul.f32 %v1765, 0.1
    %v1778 = vsel %vm1766, %v1760, %v1772
    %v1779 = vsel %vm1767, %v1761, %v1773
    %v1780 = vsel %vm1768, %v1762, %v1774
    %v1781 = vsel %vm1769, %v1763, %v1775
    %v1782 = vsel %vm1770, %v1764, %v1776
    %v1783 = vsel %vm1771, %v1765, %v1777
    %v1785 = vlaneseq
    %v1786 = vshrl.u32 %v1785, 7
    %v1787 = vsub.s32 0, %v1786
    %v1788 = vrot.slane %v47, %v1787
    %v1789 = vlaneseq
    %v1790 = vshrl.u32 %v1789, 7
    %v1791 = vsub.s32 1, %v1790
    %v1792 = vrot.slane %v47, %v1791
    %v1793 = vlaneseq
    %v1794 = vshrl.u32 %v1793, 7
    %v1795 = vsub.s32 2, %v1794
    %v1796 = vrot.slane %v47, %v1795
    %v1797 = vlaneseq
    %v1798 = vshrl.u32 %v1797, 7
    %v1799 = vsub.s32 3, %v1798
    %v1800 = vrot.slane %v47, %v1799
    %v1801 = vlaneseq
    %v1802 = vshrl.u32 %v1801, 7
    %v1803 = vsub.s32 4, %v1802
    %v1804 = vrot.slane %v47, %v1803
    %v1805 = vlaneseq
    %v1806 = vshrl.u32 %v1805, 7
    %v1807 = vsub.s32 5, %v1806
    %v1808 = vrot.slane %v47, %v1807
    %v1815 = vmul.f32 %v1778, %v1788
    %v1816 = vmul.f32 %v1779, %v1792
    %v1817 = vmul.f32 %v1780, %v1796
    %v1818 = vmul.f32 %v1781, %v1800
    %v1819 = vmul.f32 %v1782, %v1804
    %v1820 = vmul.f32 %v1783, %v1808
    %1821 = vrot.lane.b32.xlu0 %v1815, 19
    %v1822 = vpop.permute.xlu0 %1821
    %1823 = vrot.lane.b32.xlu0 %v1816, 19
    %v1824 = vpop.permute.xlu0 %1823
    %1825 = vrot.lane.b32.xlu0 %v1817, 19
    %v1826 = vpop.permute.xlu0 %1825
    %1827 = vrot.lane.b32.xlu0 %v1818, 19
    %v1828 = vpop.permute.xlu0 %1827
    %1829 = vrot.lane.b32.xlu0 %v1819, 19
    %v1830 = vpop.permute.xlu0 %1829
    %1831 = vrot.lane.b32.xlu0 %v1820, 19
    %v1832 = vpop.permute.xlu0 %1831
    %v1833 = vsel %vm71, %v1830, %v1832
    %v1834 = vsel %vm71, %v1828, %v1830
    %v1835 = vsel %vm71, %v1826, %v1828
    %v1836 = vsel %vm71, %v1824, %v1826
    %v1837 = vsel %vm71, %v1822, %v1824
    %v1838 = vsel %vm71, %v1832, %v1822
    %1840 = vset.pattern.permute.xlu0 0
    %1841 = vperm.xlu0 %1840, %v46
    %v1842 = vpop.permute.xlu0 %1841
    %v1844 = vlaneseq
    %v1845 = vshrl.u32 %v1844, 7
    %v1846 = vsub.s32 0, %v1845
    %v1847 = vrot.slane %v1838, %v1846
    %v1848 = vlaneseq
    %v1849 = vshrl.u32 %v1848, 7
    %v1850 = vsub.s32 0, %v1849
    %v1851 = vrot.slane %v1837, %v1850
    %v1852 = vlaneseq
    %v1853 = vshrl.u32 %v1852, 7
    %v1854 = vsub.s32 0, %v1853
    %v1855 = vrot.slane %v1836, %v1854
    %v1856 = vlaneseq
    %v1857 = vshrl.u32 %v1856, 7
    %v1858 = vsub.s32 0, %v1857
    %v1859 = vrot.slane %v1835, %v1858
    %v1860 = vlaneseq
    %v1861 = vshrl.u32 %v1860, 7
    %v1862 = vsub.s32 0, %v1861
    %v1863 = vrot.slane %v1834, %v1862
    %v1864 = vlaneseq
    %v1865 = vshrl.u32 %v1864, 7
    %v1866 = vsub.s32 0, %v1865
    %v1867 = vrot.slane %v1833, %v1866
    %v1868 = vmul.f32 %v1842, %v1847
    %v1869 = vmul.f32 %v1842, %v1851
    %v1870 = vmul.f32 %v1842, %v1855
    %v1871 = vmul.f32 %v1842, %v1859
    %v1872 = vmul.f32 %v1842, %v1863
    %v1873 = vmul.f32 %v1842, %v1867
    %1874 = vset.pattern.permute.xlu0 1
    %1875 = vperm.xlu0 %1874, %v46
    %v1876 = vpop.permute.xlu0 %1875
    %v1878 = vlaneseq
    %v1879 = vshrl.u32 %v1878, 7
    %v1880 = vsub.s32 1, %v1879
    %v1881 = vrot.slane %v1838, %v1880
    %v1882 = vlaneseq
    %v1883 = vshrl.u32 %v1882, 7
    %v1884 = vsub.s32 1, %v1883
    %v1885 = vrot.slane %v1837, %v1884
    %v1886 = vlaneseq
    %v1887 = vshrl.u32 %v1886, 7
    %v1888 = vsub.s32 1, %v1887
    %v1889 = vrot.slane %v1836, %v1888
    %v1890 = vlaneseq
    %v1891 = vshrl.u32 %v1890, 7
    %v1892 = vsub.s32 1, %v1891
    %v1893 = vrot.slane %v1835, %v1892
    %v1894 = vlaneseq
    %v1895 = vshrl.u32 %v1894, 7
    %v1896 = vsub.s32 1, %v1895
    %v1897 = vrot.slane %v1834, %v1896
    %v1898 = vlaneseq
    %v1899 = vshrl.u32 %v1898, 7
    %v1900 = vsub.s32 1, %v1899
    %v1901 = vrot.slane %v1833, %v1900
    %v1902 = vmul.f32 %v1876, %v1881
    %v1903 = vmul.f32 %v1876, %v1885
    %v1904 = vmul.f32 %v1876, %v1889
    %v1905 = vmul.f32 %v1876, %v1893
    %v1906 = vmul.f32 %v1876, %v1897
    %v1907 = vmul.f32 %v1876, %v1901
    %v1908 = vadd.f32 %v1868, %v1902
    %v1909 = vadd.f32 %v1869, %v1903
    %v1910 = vadd.f32 %v1870, %v1904
    %v1911 = vadd.f32 %v1871, %v1905
    %v1912 = vadd.f32 %v1872, %v1906
    %v1913 = vadd.f32 %v1873, %v1907
    %1914 = vset.pattern.permute.xlu0 2
    %1915 = vperm.xlu0 %1914, %v46
    %v1916 = vpop.permute.xlu0 %1915
    %v1918 = vlaneseq
    %v1919 = vshrl.u32 %v1918, 7
    %v1920 = vsub.s32 2, %v1919
    %v1921 = vrot.slane %v1838, %v1920
    %v1922 = vlaneseq
    %v1923 = vshrl.u32 %v1922, 7
    %v1924 = vsub.s32 2, %v1923
    %v1925 = vrot.slane %v1837, %v1924
    %v1926 = vlaneseq
    %v1927 = vshrl.u32 %v1926, 7
    %v1928 = vsub.s32 2, %v1927
    %v1929 = vrot.slane %v1836, %v1928
    %v1930 = vlaneseq
    %v1931 = vshrl.u32 %v1930, 7
    %v1932 = vsub.s32 2, %v1931
    %v1933 = vrot.slane %v1835, %v1932
    %v1934 = vlaneseq
    %v1935 = vshrl.u32 %v1934, 7
    %v1936 = vsub.s32 2, %v1935
    %v1937 = vrot.slane %v1834, %v1936
    %v1938 = vlaneseq
    %v1939 = vshrl.u32 %v1938, 7
    %v1940 = vsub.s32 2, %v1939
    %v1941 = vrot.slane %v1833, %v1940
    %v1942 = vmul.f32 %v1916, %v1921
    %v1943 = vmul.f32 %v1916, %v1925
    %v1944 = vmul.f32 %v1916, %v1929
    %v1945 = vmul.f32 %v1916, %v1933
    %v1946 = vmul.f32 %v1916, %v1937
    %v1947 = vmul.f32 %v1916, %v1941
    %v1948 = vadd.f32 %v1908, %v1942
    %v1949 = vadd.f32 %v1909, %v1943
    %v1950 = vadd.f32 %v1910, %v1944
    %v1951 = vadd.f32 %v1911, %v1945
    %v1952 = vadd.f32 %v1912, %v1946
    %v1953 = vadd.f32 %v1913, %v1947
    %1954 = vset.pattern.permute.xlu0 3
    %1955 = vperm.xlu0 %1954, %v46
    %v1956 = vpop.permute.xlu0 %1955
    %v1958 = vlaneseq
    %v1959 = vshrl.u32 %v1958, 7
    %v1960 = vsub.s32 3, %v1959
    %v1961 = vrot.slane %v1838, %v1960
    %v1962 = vlaneseq
    %v1963 = vshrl.u32 %v1962, 7
    %v1964 = vsub.s32 3, %v1963
    %v1965 = vrot.slane %v1837, %v1964
    %v1966 = vlaneseq
    %v1967 = vshrl.u32 %v1966, 7
    %v1968 = vsub.s32 3, %v1967
    %v1969 = vrot.slane %v1836, %v1968
    %v1970 = vlaneseq
    %v1971 = vshrl.u32 %v1970, 7
    %v1972 = vsub.s32 3, %v1971
    %v1973 = vrot.slane %v1835, %v1972
    %v1974 = vlaneseq
    %v1975 = vshrl.u32 %v1974, 7
    %v1976 = vsub.s32 3, %v1975
    %v1977 = vrot.slane %v1834, %v1976
    %v1978 = vlaneseq
    %v1979 = vshrl.u32 %v1978, 7
    %v1980 = vsub.s32 3, %v1979
    %v1981 = vrot.slane %v1833, %v1980
    %v1982 = vmul.f32 %v1956, %v1961
    %v1983 = vmul.f32 %v1956, %v1965
    %v1984 = vmul.f32 %v1956, %v1969
    %v1985 = vmul.f32 %v1956, %v1973
    %v1986 = vmul.f32 %v1956, %v1977
    %v1987 = vmul.f32 %v1956, %v1981
    %v1988 = vadd.f32 %v1948, %v1982
    %v1989 = vadd.f32 %v1949, %v1983
    %v1990 = vadd.f32 %v1950, %v1984
    %v1991 = vadd.f32 %v1951, %v1985
    %v1992 = vadd.f32 %v1952, %v1986
    %v1993 = vadd.f32 %v1953, %v1987
    %1994 = vrot.lane.b32.xlu0 %v1815, 18
    %v1995 = vpop.permute.xlu0 %1994
    %1996 = vrot.lane.b32.xlu0 %v1816, 18
    %v1997 = vpop.permute.xlu0 %1996
    %1998 = vrot.lane.b32.xlu0 %v1817, 18
    %v1999 = vpop.permute.xlu0 %1998
    %2000 = vrot.lane.b32.xlu0 %v1818, 18
    %v2001 = vpop.permute.xlu0 %2000
    %2002 = vrot.lane.b32.xlu0 %v1819, 18
    %v2003 = vpop.permute.xlu0 %2002
    %2004 = vrot.lane.b32.xlu0 %v1820, 18
    %v2005 = vpop.permute.xlu0 %2004
    %v2006 = vsel %vm245, %v2003, %v2005
    %v2007 = vsel %vm245, %v2001, %v2003
    %v2008 = vsel %vm245, %v1999, %v2001
    %v2009 = vsel %vm245, %v1997, %v1999
    %v2010 = vsel %vm245, %v1995, %v1997
    %v2011 = vsel %vm245, %v2005, %v1995
    %2012 = vset.pattern.permute.xlu0 4
    %2013 = vperm.xlu0 %2012, %v46
    %v2014 = vpop.permute.xlu0 %2013
    %v2016 = vlaneseq
    %v2017 = vshrl.u32 %v2016, 7
    %v2018 = vsub.s32 0, %v2017
    %v2019 = vrot.slane %v2011, %v2018
    %v2020 = vlaneseq
    %v2021 = vshrl.u32 %v2020, 7
    %v2022 = vsub.s32 0, %v2021
    %v2023 = vrot.slane %v2010, %v2022
    %v2024 = vlaneseq
    %v2025 = vshrl.u32 %v2024, 7
    %v2026 = vsub.s32 0, %v2025
    %v2027 = vrot.slane %v2009, %v2026
    %v2028 = vlaneseq
    %v2029 = vshrl.u32 %v2028, 7
    %v2030 = vsub.s32 0, %v2029
    %v2031 = vrot.slane %v2008, %v2030
    %v2032 = vlaneseq
    %v2033 = vshrl.u32 %v2032, 7
    %v2034 = vsub.s32 0, %v2033
    %v2035 = vrot.slane %v2007, %v2034
    %v2036 = vlaneseq
    %v2037 = vshrl.u32 %v2036, 7
    %v2038 = vsub.s32 0, %v2037
    %v2039 = vrot.slane %v2006, %v2038
    %v2040 = vmul.f32 %v2014, %v2019
    %v2041 = vmul.f32 %v2014, %v2023
    %v2042 = vmul.f32 %v2014, %v2027
    %v2043 = vmul.f32 %v2014, %v2031
    %v2044 = vmul.f32 %v2014, %v2035
    %v2045 = vmul.f32 %v2014, %v2039
    %v2046 = vadd.f32 %v1988, %v2040
    %v2047 = vadd.f32 %v1989, %v2041
    %v2048 = vadd.f32 %v1990, %v2042
    %v2049 = vadd.f32 %v1991, %v2043
    %v2050 = vadd.f32 %v1992, %v2044
    %v2051 = vadd.f32 %v1993, %v2045
    %2052 = vset.pattern.permute.xlu0 5
    %2053 = vperm.xlu0 %2052, %v46
    %v2054 = vpop.permute.xlu0 %2053
    %v2056 = vlaneseq
    %v2057 = vshrl.u32 %v2056, 7
    %v2058 = vsub.s32 1, %v2057
    %v2059 = vrot.slane %v2011, %v2058
    %v2060 = vlaneseq
    %v2061 = vshrl.u32 %v2060, 7
    %v2062 = vsub.s32 1, %v2061
    %v2063 = vrot.slane %v2010, %v2062
    %v2064 = vlaneseq
    %v2065 = vshrl.u32 %v2064, 7
    %v2066 = vsub.s32 1, %v2065
    %v2067 = vrot.slane %v2009, %v2066
    %v2068 = vlaneseq
    %v2069 = vshrl.u32 %v2068, 7
    %v2070 = vsub.s32 1, %v2069
    %v2071 = vrot.slane %v2008, %v2070
    %v2072 = vlaneseq
    %v2073 = vshrl.u32 %v2072, 7
    %v2074 = vsub.s32 1, %v2073
    %v2075 = vrot.slane %v2007, %v2074
    %v2076 = vlaneseq
    %v2077 = vshrl.u32 %v2076, 7
    %v2078 = vsub.s32 1, %v2077
    %v2079 = vrot.slane %v2006, %v2078
    %v2080 = vmul.f32 %v2054, %v2059
    %v2081 = vmul.f32 %v2054, %v2063
    %v2082 = vmul.f32 %v2054, %v2067
    %v2083 = vmul.f32 %v2054, %v2071
    %v2084 = vmul.f32 %v2054, %v2075
    %v2085 = vmul.f32 %v2054, %v2079
    %v2086 = vadd.f32 %v2046, %v2080
    %v2087 = vadd.f32 %v2047, %v2081
    %v2088 = vadd.f32 %v2048, %v2082
    %v2089 = vadd.f32 %v2049, %v2083
    %v2090 = vadd.f32 %v2050, %v2084
    %v2091 = vadd.f32 %v2051, %v2085
    %2092 = vset.pattern.permute.xlu0 6
    %2093 = vperm.xlu0 %2092, %v46
    %v2094 = vpop.permute.xlu0 %2093
    %v2096 = vlaneseq
    %v2097 = vshrl.u32 %v2096, 7
    %v2098 = vsub.s32 2, %v2097
    %v2099 = vrot.slane %v2011, %v2098
    %v2100 = vlaneseq
    %v2101 = vshrl.u32 %v2100, 7
    %v2102 = vsub.s32 2, %v2101
    %v2103 = vrot.slane %v2010, %v2102
    %v2104 = vlaneseq
    %v2105 = vshrl.u32 %v2104, 7
    %v2106 = vsub.s32 2, %v2105
    %v2107 = vrot.slane %v2009, %v2106
    %v2108 = vlaneseq
    %v2109 = vshrl.u32 %v2108, 7
    %v2110 = vsub.s32 2, %v2109
    %v2111 = vrot.slane %v2008, %v2110
    %v2112 = vlaneseq
    %v2113 = vshrl.u32 %v2112, 7
    %v2114 = vsub.s32 2, %v2113
    %v2115 = vrot.slane %v2007, %v2114
    %v2116 = vlaneseq
    %v2117 = vshrl.u32 %v2116, 7
    %v2118 = vsub.s32 2, %v2117
    %v2119 = vrot.slane %v2006, %v2118
    %v2120 = vmul.f32 %v2094, %v2099
    %v2121 = vmul.f32 %v2094, %v2103
    %v2122 = vmul.f32 %v2094, %v2107
    %v2123 = vmul.f32 %v2094, %v2111
    %v2124 = vmul.f32 %v2094, %v2115
    %v2125 = vmul.f32 %v2094, %v2119
    %v2126 = vadd.f32 %v2086, %v2120
    %v2127 = vadd.f32 %v2087, %v2121
    %v2128 = vadd.f32 %v2088, %v2122
    %v2129 = vadd.f32 %v2089, %v2123
    %v2130 = vadd.f32 %v2090, %v2124
    %v2131 = vadd.f32 %v2091, %v2125
    %2132 = vset.pattern.permute.xlu0 7
    %2133 = vperm.xlu0 %2132, %v46
    %v2134 = vpop.permute.xlu0 %2133
    %v2136 = vlaneseq
    %v2137 = vshrl.u32 %v2136, 7
    %v2138 = vsub.s32 3, %v2137
    %v2139 = vrot.slane %v2011, %v2138
    %v2140 = vlaneseq
    %v2141 = vshrl.u32 %v2140, 7
    %v2142 = vsub.s32 3, %v2141
    %v2143 = vrot.slane %v2010, %v2142
    %v2144 = vlaneseq
    %v2145 = vshrl.u32 %v2144, 7
    %v2146 = vsub.s32 3, %v2145
    %v2147 = vrot.slane %v2009, %v2146
    %v2148 = vlaneseq
    %v2149 = vshrl.u32 %v2148, 7
    %v2150 = vsub.s32 3, %v2149
    %v2151 = vrot.slane %v2008, %v2150
    %v2152 = vlaneseq
    %v2153 = vshrl.u32 %v2152, 7
    %v2154 = vsub.s32 3, %v2153
    %v2155 = vrot.slane %v2007, %v2154
    %v2156 = vlaneseq
    %v2157 = vshrl.u32 %v2156, 7
    %v2158 = vsub.s32 3, %v2157
    %v2159 = vrot.slane %v2006, %v2158
    %v2160 = vmul.f32 %v2134, %v2139
    %v2161 = vmul.f32 %v2134, %v2143
    %v2162 = vmul.f32 %v2134, %v2147
    %v2163 = vmul.f32 %v2134, %v2151
    %v2164 = vmul.f32 %v2134, %v2155
    %v2165 = vmul.f32 %v2134, %v2159
    %v2166 = vadd.f32 %v2126, %v2160
    %v2167 = vadd.f32 %v2127, %v2161
    %v2168 = vadd.f32 %v2128, %v2162
    %v2169 = vadd.f32 %v2129, %v2163
    %v2170 = vadd.f32 %v2130, %v2164
    %v2171 = vadd.f32 %v2131, %v2165
    %2172 = vrot.lane.b32.xlu0 %v1815, 17
    %v2173 = vpop.permute.xlu0 %2172
    %2174 = vrot.lane.b32.xlu0 %v1816, 17
    %v2175 = vpop.permute.xlu0 %2174
    %2176 = vrot.lane.b32.xlu0 %v1817, 17
    %v2177 = vpop.permute.xlu0 %2176
    %2178 = vrot.lane.b32.xlu0 %v1818, 17
    %v2179 = vpop.permute.xlu0 %2178
    %2180 = vrot.lane.b32.xlu0 %v1819, 17
    %v2181 = vpop.permute.xlu0 %2180
    %2182 = vrot.lane.b32.xlu0 %v1820, 17
    %v2183 = vpop.permute.xlu0 %2182
    %v2184 = vsel %vm424, %v2181, %v2183
    %v2185 = vsel %vm424, %v2179, %v2181
    %v2186 = vsel %vm424, %v2177, %v2179
    %v2187 = vsel %vm424, %v2175, %v2177
    %v2188 = vsel %vm424, %v2173, %v2175
    %v2189 = vsel %vm424, %v2183, %v2173
    %2190 = vset.pattern.permute.xlu0 8
    %2191 = vperm.xlu0 %2190, %v46
    %v2192 = vpop.permute.xlu0 %2191
    %v2194 = vlaneseq
    %v2195 = vshrl.u32 %v2194, 7
    %v2196 = vsub.s32 0, %v2195
    %v2197 = vrot.slane %v2189, %v2196
    %v2198 = vlaneseq
    %v2199 = vshrl.u32 %v2198, 7
    %v2200 = vsub.s32 0, %v2199
    %v2201 = vrot.slane %v2188, %v2200
    %v2202 = vlaneseq
    %v2203 = vshrl.u32 %v2202, 7
    %v2204 = vsub.s32 0, %v2203
    %v2205 = vrot.slane %v2187, %v2204
    %v2206 = vlaneseq
    %v2207 = vshrl.u32 %v2206, 7
    %v2208 = vsub.s32 0, %v2207
    %v2209 = vrot.slane %v2186, %v2208
    %v2210 = vlaneseq
    %v2211 = vshrl.u32 %v2210, 7
    %v2212 = vsub.s32 0, %v2211
    %v2213 = vrot.slane %v2185, %v2212
    %v2214 = vlaneseq
    %v2215 = vshrl.u32 %v2214, 7
    %v2216 = vsub.s32 0, %v2215
    %v2217 = vrot.slane %v2184, %v2216
    %v2218 = vmul.f32 %v2192, %v2197
    %v2219 = vmul.f32 %v2192, %v2201
    %v2220 = vmul.f32 %v2192, %v2205
    %v2221 = vmul.f32 %v2192, %v2209
    %v2222 = vmul.f32 %v2192, %v2213
    %v2223 = vmul.f32 %v2192, %v2217
    %v2224 = vadd.f32 %v2166, %v2218
    %v2225 = vadd.f32 %v2167, %v2219
    %v2226 = vadd.f32 %v2168, %v2220
    %v2227 = vadd.f32 %v2169, %v2221
    %v2228 = vadd.f32 %v2170, %v2222
    %v2229 = vadd.f32 %v2171, %v2223
    %2230 = vset.pattern.permute.xlu0 9
    %2231 = vperm.xlu0 %2230, %v46
    %v2232 = vpop.permute.xlu0 %2231
    %v2234 = vlaneseq
    %v2235 = vshrl.u32 %v2234, 7
    %v2236 = vsub.s32 1, %v2235
    %v2237 = vrot.slane %v2189, %v2236
    %v2238 = vlaneseq
    %v2239 = vshrl.u32 %v2238, 7
    %v2240 = vsub.s32 1, %v2239
    %v2241 = vrot.slane %v2188, %v2240
    %v2242 = vlaneseq
    %v2243 = vshrl.u32 %v2242, 7
    %v2244 = vsub.s32 1, %v2243
    %v2245 = vrot.slane %v2187, %v2244
    %v2246 = vlaneseq
    %v2247 = vshrl.u32 %v2246, 7
    %v2248 = vsub.s32 1, %v2247
    %v2249 = vrot.slane %v2186, %v2248
    %v2250 = vlaneseq
    %v2251 = vshrl.u32 %v2250, 7
    %v2252 = vsub.s32 1, %v2251
    %v2253 = vrot.slane %v2185, %v2252
    %v2254 = vlaneseq
    %v2255 = vshrl.u32 %v2254, 7
    %v2256 = vsub.s32 1, %v2255
    %v2257 = vrot.slane %v2184, %v2256
    %v2258 = vmul.f32 %v2232, %v2237
    %v2259 = vmul.f32 %v2232, %v2241
    %v2260 = vmul.f32 %v2232, %v2245
    %v2261 = vmul.f32 %v2232, %v2249
    %v2262 = vmul.f32 %v2232, %v2253
    %v2263 = vmul.f32 %v2232, %v2257
    %v2264 = vadd.f32 %v2224, %v2258
    %v2265 = vadd.f32 %v2225, %v2259
    %v2266 = vadd.f32 %v2226, %v2260
    %v2267 = vadd.f32 %v2227, %v2261
    %v2268 = vadd.f32 %v2228, %v2262
    %v2269 = vadd.f32 %v2229, %v2263
    %2270 = vset.pattern.permute.xlu0 10
    %2271 = vperm.xlu0 %2270, %v46
    %v2272 = vpop.permute.xlu0 %2271
    %v2274 = vlaneseq
    %v2275 = vshrl.u32 %v2274, 7
    %v2276 = vsub.s32 2, %v2275
    %v2277 = vrot.slane %v2189, %v2276
    %v2278 = vlaneseq
    %v2279 = vshrl.u32 %v2278, 7
    %v2280 = vsub.s32 2, %v2279
    %v2281 = vrot.slane %v2188, %v2280
    %v2282 = vlaneseq
    %v2283 = vshrl.u32 %v2282, 7
    %v2284 = vsub.s32 2, %v2283
    %v2285 = vrot.slane %v2187, %v2284
    %v2286 = vlaneseq
    %v2287 = vshrl.u32 %v2286, 7
    %v2288 = vsub.s32 2, %v2287
    %v2289 = vrot.slane %v2186, %v2288
    %v2290 = vlaneseq
    %v2291 = vshrl.u32 %v2290, 7
    %v2292 = vsub.s32 2, %v2291
    %v2293 = vrot.slane %v2185, %v2292
    %v2294 = vlaneseq
    %v2295 = vshrl.u32 %v2294, 7
    %v2296 = vsub.s32 2, %v2295
    %v2297 = vrot.slane %v2184, %v2296
    %v2298 = vmul.f32 %v2272, %v2277
    %v2299 = vmul.f32 %v2272, %v2281
    %v2300 = vmul.f32 %v2272, %v2285
    %v2301 = vmul.f32 %v2272, %v2289
    %v2302 = vmul.f32 %v2272, %v2293
    %v2303 = vmul.f32 %v2272, %v2297
    %v2304 = vadd.f32 %v2264, %v2298
    %v2305 = vadd.f32 %v2265, %v2299
    %v2306 = vadd.f32 %v2266, %v2300
    %v2307 = vadd.f32 %v2267, %v2301
    %v2308 = vadd.f32 %v2268, %v2302
    %v2309 = vadd.f32 %v2269, %v2303
    %2310 = vset.pattern.permute.xlu0 11
    %2311 = vperm.xlu0 %2310, %v46
    %v2312 = vpop.permute.xlu0 %2311
    %v2314 = vlaneseq
    %v2315 = vshrl.u32 %v2314, 7
    %v2316 = vsub.s32 3, %v2315
    %v2317 = vrot.slane %v2189, %v2316
    %v2318 = vlaneseq
    %v2319 = vshrl.u32 %v2318, 7
    %v2320 = vsub.s32 3, %v2319
    %v2321 = vrot.slane %v2188, %v2320
    %v2322 = vlaneseq
    %v2323 = vshrl.u32 %v2322, 7
    %v2324 = vsub.s32 3, %v2323
    %v2325 = vrot.slane %v2187, %v2324
    %v2326 = vlaneseq
    %v2327 = vshrl.u32 %v2326, 7
    %v2328 = vsub.s32 3, %v2327
    %v2329 = vrot.slane %v2186, %v2328
    %v2330 = vlaneseq
    %v2331 = vshrl.u32 %v2330, 7
    %v2332 = vsub.s32 3, %v2331
    %v2333 = vrot.slane %v2185, %v2332
    %v2334 = vlaneseq
    %v2335 = vshrl.u32 %v2334, 7
    %v2336 = vsub.s32 3, %v2335
    %v2337 = vrot.slane %v2184, %v2336
    %v2338 = vmul.f32 %v2312, %v2317
    %v2339 = vmul.f32 %v2312, %v2321
    %v2340 = vmul.f32 %v2312, %v2325
    %v2341 = vmul.f32 %v2312, %v2329
    %v2342 = vmul.f32 %v2312, %v2333
    %v2343 = vmul.f32 %v2312, %v2337
    %v2344 = vadd.f32 %v2304, %v2338
    %v2345 = vadd.f32 %v2305, %v2339
    %v2346 = vadd.f32 %v2306, %v2340
    %v2347 = vadd.f32 %v2307, %v2341
    %v2348 = vadd.f32 %v2308, %v2342
    %v2349 = vadd.f32 %v2309, %v2343
    %2350 = vrot.lane.b32.xlu0 %v1815, 1
    %v2351 = vpop.permute.xlu0 %2350
    %2352 = vrot.lane.b32.xlu0 %v1816, 1
    %v2353 = vpop.permute.xlu0 %2352
    %2354 = vrot.lane.b32.xlu0 %v1817, 1
    %v2355 = vpop.permute.xlu0 %2354
    %2356 = vrot.lane.b32.xlu0 %v1818, 1
    %v2357 = vpop.permute.xlu0 %2356
    %2358 = vrot.lane.b32.xlu0 %v1819, 1
    %v2359 = vpop.permute.xlu0 %2358
    %2360 = vrot.lane.b32.xlu0 %v1820, 1
    %v2361 = vpop.permute.xlu0 %2360
    %v2362 = vsel %vm603, %v2359, %v2361
    %v2363 = vsel %vm603, %v2357, %v2359
    %v2364 = vsel %vm603, %v2355, %v2357
    %v2365 = vsel %vm603, %v2353, %v2355
    %v2366 = vsel %vm603, %v2351, %v2353
    %v2367 = vsel %vm603, %v2361, %v2351
    %2368 = vset.pattern.permute.xlu0 12
    %2369 = vperm.xlu0 %2368, %v46
    %v2370 = vpop.permute.xlu0 %2369
    %v2372 = vlaneseq
    %v2373 = vshrl.u32 %v2372, 7
    %v2374 = vsub.s32 0, %v2373
    %v2375 = vrot.slane %v2367, %v2374
    %v2376 = vlaneseq
    %v2377 = vshrl.u32 %v2376, 7
    %v2378 = vsub.s32 0, %v2377
    %v2379 = vrot.slane %v2366, %v2378
    %v2380 = vlaneseq
    %v2381 = vshrl.u32 %v2380, 7
    %v2382 = vsub.s32 0, %v2381
    %v2383 = vrot.slane %v2365, %v2382
    %v2384 = vlaneseq
    %v2385 = vshrl.u32 %v2384, 7
    %v2386 = vsub.s32 0, %v2385
    %v2387 = vrot.slane %v2364, %v2386
    %v2388 = vlaneseq
    %v2389 = vshrl.u32 %v2388, 7
    %v2390 = vsub.s32 0, %v2389
    %v2391 = vrot.slane %v2363, %v2390
    %v2392 = vlaneseq
    %v2393 = vshrl.u32 %v2392, 7
    %v2394 = vsub.s32 0, %v2393
    %v2395 = vrot.slane %v2362, %v2394
    %v2396 = vmul.f32 %v2370, %v2375
    %v2397 = vmul.f32 %v2370, %v2379
    %v2398 = vmul.f32 %v2370, %v2383
    %v2399 = vmul.f32 %v2370, %v2387
    %v2400 = vmul.f32 %v2370, %v2391
    %v2401 = vmul.f32 %v2370, %v2395
    %v2402 = vadd.f32 %v2344, %v2396
    %v2403 = vadd.f32 %v2345, %v2397
    %v2404 = vadd.f32 %v2346, %v2398
    %v2405 = vadd.f32 %v2347, %v2399
    %v2406 = vadd.f32 %v2348, %v2400
    %v2407 = vadd.f32 %v2349, %v2401
    %2408 = vset.pattern.permute.xlu0 13
    %2409 = vperm.xlu0 %2408, %v46
    %v2410 = vpop.permute.xlu0 %2409
    %v2412 = vlaneseq
    %v2413 = vshrl.u32 %v2412, 7
    %v2414 = vsub.s32 1, %v2413
    %v2415 = vrot.slane %v2367, %v2414
    %v2416 = vlaneseq
    %v2417 = vshrl.u32 %v2416, 7
    %v2418 = vsub.s32 1, %v2417
    %v2419 = vrot.slane %v2366, %v2418
    %v2420 = vlaneseq
    %v2421 = vshrl.u32 %v2420, 7
    %v2422 = vsub.s32 1, %v2421
    %v2423 = vrot.slane %v2365, %v2422
    %v2424 = vlaneseq
    %v2425 = vshrl.u32 %v2424, 7
    %v2426 = vsub.s32 1, %v2425
    %v2427 = vrot.slane %v2364, %v2426
    %v2428 = vlaneseq
    %v2429 = vshrl.u32 %v2428, 7
    %v2430 = vsub.s32 1, %v2429
    %v2431 = vrot.slane %v2363, %v2430
    %v2432 = vlaneseq
    %v2433 = vshrl.u32 %v2432, 7
    %v2434 = vsub.s32 1, %v2433
    %v2435 = vrot.slane %v2362, %v2434
    %v2436 = vmul.f32 %v2410, %v2415
    %v2437 = vmul.f32 %v2410, %v2419
    %v2438 = vmul.f32 %v2410, %v2423
    %v2439 = vmul.f32 %v2410, %v2427
    %v2440 = vmul.f32 %v2410, %v2431
    %v2441 = vmul.f32 %v2410, %v2435
    %v2442 = vadd.f32 %v2402, %v2436
    %v2443 = vadd.f32 %v2403, %v2437
    %v2444 = vadd.f32 %v2404, %v2438
    %v2445 = vadd.f32 %v2405, %v2439
    %v2446 = vadd.f32 %v2406, %v2440
    %v2447 = vadd.f32 %v2407, %v2441
    %2448 = vset.pattern.permute.xlu0 14
    %2449 = vperm.xlu0 %2448, %v46
    %v2450 = vpop.permute.xlu0 %2449
    %v2452 = vlaneseq
    %v2453 = vshrl.u32 %v2452, 7
    %v2454 = vsub.s32 2, %v2453
    %v2455 = vrot.slane %v2367, %v2454
    %v2456 = vlaneseq
    %v2457 = vshrl.u32 %v2456, 7
    %v2458 = vsub.s32 2, %v2457
    %v2459 = vrot.slane %v2366, %v2458
    %v2460 = vlaneseq
    %v2461 = vshrl.u32 %v2460, 7
    %v2462 = vsub.s32 2, %v2461
    %v2463 = vrot.slane %v2365, %v2462
    %v2464 = vlaneseq
    %v2465 = vshrl.u32 %v2464, 7
    %v2466 = vsub.s32 2, %v2465
    %v2467 = vrot.slane %v2364, %v2466
    %v2468 = vlaneseq
    %v2469 = vshrl.u32 %v2468, 7
    %v2470 = vsub.s32 2, %v2469
    %v2471 = vrot.slane %v2363, %v2470
    %v2472 = vlaneseq
    %v2473 = vshrl.u32 %v2472, 7
    %v2474 = vsub.s32 2, %v2473
    %v2475 = vrot.slane %v2362, %v2474
    %v2476 = vmul.f32 %v2450, %v2455
    %v2477 = vmul.f32 %v2450, %v2459
    %v2478 = vmul.f32 %v2450, %v2463
    %v2479 = vmul.f32 %v2450, %v2467
    %v2480 = vmul.f32 %v2450, %v2471
    %v2481 = vmul.f32 %v2450, %v2475
    %v2482 = vadd.f32 %v2442, %v2476
    %v2483 = vadd.f32 %v2443, %v2477
    %v2484 = vadd.f32 %v2444, %v2478
    %v2485 = vadd.f32 %v2445, %v2479
    %v2486 = vadd.f32 %v2446, %v2480
    %v2487 = vadd.f32 %v2447, %v2481
    %2488 = vset.pattern.permute.xlu0 15
    %2489 = vperm.xlu0 %2488, %v46
    %v2490 = vpop.permute.xlu0 %2489
    %v2492 = vlaneseq
    %v2493 = vshrl.u32 %v2492, 7
    %v2494 = vsub.s32 3, %v2493
    %v2495 = vrot.slane %v2367, %v2494
    %v2496 = vlaneseq
    %v2497 = vshrl.u32 %v2496, 7
    %v2498 = vsub.s32 3, %v2497
    %v2499 = vrot.slane %v2366, %v2498
    %v2500 = vlaneseq
    %v2501 = vshrl.u32 %v2500, 7
    %v2502 = vsub.s32 3, %v2501
    %v2503 = vrot.slane %v2365, %v2502
    %v2504 = vlaneseq
    %v2505 = vshrl.u32 %v2504, 7
    %v2506 = vsub.s32 3, %v2505
    %v2507 = vrot.slane %v2364, %v2506
    %v2508 = vlaneseq
    %v2509 = vshrl.u32 %v2508, 7
    %v2510 = vsub.s32 3, %v2509
    %v2511 = vrot.slane %v2363, %v2510
    %v2512 = vlaneseq
    %v2513 = vshrl.u32 %v2512, 7
    %v2514 = vsub.s32 3, %v2513
    %v2515 = vrot.slane %v2362, %v2514
    %v2516 = vmul.f32 %v2490, %v2495
    %v2517 = vmul.f32 %v2490, %v2499
    %v2518 = vmul.f32 %v2490, %v2503
    %v2519 = vmul.f32 %v2490, %v2507
    %v2520 = vmul.f32 %v2490, %v2511
    %v2521 = vmul.f32 %v2490, %v2515
    %v2522 = vadd.f32 %v2482, %v2516
    %v2523 = vadd.f32 %v2483, %v2517
    %v2524 = vadd.f32 %v2484, %v2518
    %v2525 = vadd.f32 %v2485, %v2519
    %v2526 = vadd.f32 %v2486, %v2520
    %v2527 = vadd.f32 %v2487, %v2521
    %2528 = vset.pattern.permute.xlu0 16
    %2529 = vperm.xlu0 %2528, %v46
    %v2530 = vpop.permute.xlu0 %2529
    %v2532 = vlaneseq
    %v2533 = vshrl.u32 %v2532, 7
    %v2534 = vsub.s32 0, %v2533
    %v2535 = vrot.slane %v1815, %v2534
    %v2536 = vlaneseq
    %v2537 = vshrl.u32 %v2536, 7
    %v2538 = vsub.s32 0, %v2537
    %v2539 = vrot.slane %v1816, %v2538
    %v2540 = vlaneseq
    %v2541 = vshrl.u32 %v2540, 7
    %v2542 = vsub.s32 0, %v2541
    %v2543 = vrot.slane %v1817, %v2542
    %v2544 = vlaneseq
    %v2545 = vshrl.u32 %v2544, 7
    %v2546 = vsub.s32 0, %v2545
    %v2547 = vrot.slane %v1818, %v2546
    %v2548 = vlaneseq
    %v2549 = vshrl.u32 %v2548, 7
    %v2550 = vsub.s32 0, %v2549
    %v2551 = vrot.slane %v1819, %v2550
    %v2552 = vlaneseq
    %v2553 = vshrl.u32 %v2552, 7
    %v2554 = vsub.s32 0, %v2553
    %v2555 = vrot.slane %v1820, %v2554
    %v2556 = vmul.f32 %v2530, %v2535
    %v2557 = vmul.f32 %v2530, %v2539
    %v2558 = vmul.f32 %v2530, %v2543
    %v2559 = vmul.f32 %v2530, %v2547
    %v2560 = vmul.f32 %v2530, %v2551
    %v2561 = vmul.f32 %v2530, %v2555
    %v2562 = vadd.f32 %v2522, %v2556
    %v2563 = vadd.f32 %v2523, %v2557
    %v2564 = vadd.f32 %v2524, %v2558
    %v2565 = vadd.f32 %v2525, %v2559
    %v2566 = vadd.f32 %v2526, %v2560
    %v2567 = vadd.f32 %v2527, %v2561
    %2568 = vset.pattern.permute.xlu0 17
    %2569 = vperm.xlu0 %2568, %v46
    %v2570 = vpop.permute.xlu0 %2569
    %v2572 = vlaneseq
    %v2573 = vshrl.u32 %v2572, 7
    %v2574 = vsub.s32 1, %v2573
    %v2575 = vrot.slane %v1815, %v2574
    %v2576 = vlaneseq
    %v2577 = vshrl.u32 %v2576, 7
    %v2578 = vsub.s32 1, %v2577
    %v2579 = vrot.slane %v1816, %v2578
    %v2580 = vlaneseq
    %v2581 = vshrl.u32 %v2580, 7
    %v2582 = vsub.s32 1, %v2581
    %v2583 = vrot.slane %v1817, %v2582
    %v2584 = vlaneseq
    %v2585 = vshrl.u32 %v2584, 7
    %v2586 = vsub.s32 1, %v2585
    %v2587 = vrot.slane %v1818, %v2586
    %v2588 = vlaneseq
    %v2589 = vshrl.u32 %v2588, 7
    %v2590 = vsub.s32 1, %v2589
    %v2591 = vrot.slane %v1819, %v2590
    %v2592 = vlaneseq
    %v2593 = vshrl.u32 %v2592, 7
    %v2594 = vsub.s32 1, %v2593
    %v2595 = vrot.slane %v1820, %v2594
    %v2596 = vmul.f32 %v2570, %v2575
    %v2597 = vmul.f32 %v2570, %v2579
    %v2598 = vmul.f32 %v2570, %v2583
    %v2599 = vmul.f32 %v2570, %v2587
    %v2600 = vmul.f32 %v2570, %v2591
    %v2601 = vmul.f32 %v2570, %v2595
    %v2602 = vadd.f32 %v2562, %v2596
    %v2603 = vadd.f32 %v2563, %v2597
    %v2604 = vadd.f32 %v2564, %v2598
    %v2605 = vadd.f32 %v2565, %v2599
    %v2606 = vadd.f32 %v2566, %v2600
    %v2607 = vadd.f32 %v2567, %v2601
    %2608 = vset.pattern.permute.xlu0 18
    %2609 = vperm.xlu0 %2608, %v46
    %v2610 = vpop.permute.xlu0 %2609
    %v2612 = vlaneseq
    %v2613 = vshrl.u32 %v2612, 7
    %v2614 = vsub.s32 2, %v2613
    %v2615 = vrot.slane %v1815, %v2614
    %v2616 = vlaneseq
    %v2617 = vshrl.u32 %v2616, 7
    %v2618 = vsub.s32 2, %v2617
    %v2619 = vrot.slane %v1816, %v2618
    %v2620 = vlaneseq
    %v2621 = vshrl.u32 %v2620, 7
    %v2622 = vsub.s32 2, %v2621
    %v2623 = vrot.slane %v1817, %v2622
    %v2624 = vlaneseq
    %v2625 = vshrl.u32 %v2624, 7
    %v2626 = vsub.s32 2, %v2625
    %v2627 = vrot.slane %v1818, %v2626
    %v2628 = vlaneseq
    %v2629 = vshrl.u32 %v2628, 7
    %v2630 = vsub.s32 2, %v2629
    %v2631 = vrot.slane %v1819, %v2630
    %v2632 = vlaneseq
    %v2633 = vshrl.u32 %v2632, 7
    %v2634 = vsub.s32 2, %v2633
    %v2635 = vrot.slane %v1820, %v2634
    %v2636 = vmul.f32 %v2610, %v2615
    %v2637 = vmul.f32 %v2610, %v2619
    %v2638 = vmul.f32 %v2610, %v2623
    %v2639 = vmul.f32 %v2610, %v2627
    %v2640 = vmul.f32 %v2610, %v2631
    %v2641 = vmul.f32 %v2610, %v2635
    %v2642 = vadd.f32 %v2602, %v2636
    %v2643 = vadd.f32 %v2603, %v2637
    %v2644 = vadd.f32 %v2604, %v2638
    %v2645 = vadd.f32 %v2605, %v2639
    %v2646 = vadd.f32 %v2606, %v2640
    %v2647 = vadd.f32 %v2607, %v2641
    %2648 = vset.pattern.permute.xlu0 19
    %2649 = vperm.xlu0 %2648, %v46
    %v2650 = vpop.permute.xlu0 %2649
    %v2652 = vlaneseq
    %v2653 = vshrl.u32 %v2652, 7
    %v2654 = vsub.s32 3, %v2653
    %v2655 = vrot.slane %v1815, %v2654
    %v2656 = vlaneseq
    %v2657 = vshrl.u32 %v2656, 7
    %v2658 = vsub.s32 3, %v2657
    %v2659 = vrot.slane %v1816, %v2658
    %v2660 = vlaneseq
    %v2661 = vshrl.u32 %v2660, 7
    %v2662 = vsub.s32 3, %v2661
    %v2663 = vrot.slane %v1817, %v2662
    %v2664 = vlaneseq
    %v2665 = vshrl.u32 %v2664, 7
    %v2666 = vsub.s32 3, %v2665
    %v2667 = vrot.slane %v1818, %v2666
    %v2668 = vlaneseq
    %v2669 = vshrl.u32 %v2668, 7
    %v2670 = vsub.s32 3, %v2669
    %v2671 = vrot.slane %v1819, %v2670
    %v2672 = vlaneseq
    %v2673 = vshrl.u32 %v2672, 7
    %v2674 = vsub.s32 3, %v2673
    %v2675 = vrot.slane %v1820, %v2674
    %v2676 = vmul.f32 %v2650, %v2655
    %v2677 = vmul.f32 %v2650, %v2659
    %v2678 = vmul.f32 %v2650, %v2663
    %v2679 = vmul.f32 %v2650, %v2667
    %v2680 = vmul.f32 %v2650, %v2671
    %v2681 = vmul.f32 %v2650, %v2675
    %v2682 = vadd.f32 %v2642, %v2676
    %v2683 = vadd.f32 %v2643, %v2677
    %v2684 = vadd.f32 %v2644, %v2678
    %v2685 = vadd.f32 %v2645, %v2679
    %v2686 = vadd.f32 %v2646, %v2680
    %v2687 = vadd.f32 %v2647, %v2681
    %2688 = vrot.lane.b32.xlu0 %v1815, 127
    %v2689 = vpop.permute.xlu0 %2688
    %2690 = vrot.lane.b32.xlu0 %v1816, 127
    %v2691 = vpop.permute.xlu0 %2690
    %2692 = vrot.lane.b32.xlu0 %v1817, 127
    %v2693 = vpop.permute.xlu0 %2692
    %2694 = vrot.lane.b32.xlu0 %v1818, 127
    %v2695 = vpop.permute.xlu0 %2694
    %2696 = vrot.lane.b32.xlu0 %v1819, 127
    %v2697 = vpop.permute.xlu0 %2696
    %2698 = vrot.lane.b32.xlu0 %v1820, 127
    %v2699 = vpop.permute.xlu0 %2698
    %v2700 = vsel %vm1062, %v2697, %v2699
    %v2701 = vsel %vm1062, %v2695, %v2697
    %v2702 = vsel %vm1062, %v2693, %v2695
    %v2703 = vsel %vm1062, %v2691, %v2693
    %v2704 = vsel %vm1062, %v2689, %v2691
    %v2705 = vsel %vm1062, %v2699, %v2689
    %2706 = vset.pattern.permute.xlu0 20
    %2707 = vperm.xlu0 %2706, %v46
    %v2708 = vpop.permute.xlu0 %2707
    %v2710 = vlaneseq
    %v2711 = vshrl.u32 %v2710, 7
    %v2712 = vsub.s32 0, %v2711
    %v2713 = vrot.slane %v2704, %v2712
    %v2714 = vlaneseq
    %v2715 = vshrl.u32 %v2714, 7
    %v2716 = vsub.s32 0, %v2715
    %v2717 = vrot.slane %v2703, %v2716
    %v2718 = vlaneseq
    %v2719 = vshrl.u32 %v2718, 7
    %v2720 = vsub.s32 0, %v2719
    %v2721 = vrot.slane %v2702, %v2720
    %v2722 = vlaneseq
    %v2723 = vshrl.u32 %v2722, 7
    %v2724 = vsub.s32 0, %v2723
    %v2725 = vrot.slane %v2701, %v2724
    %v2726 = vlaneseq
    %v2727 = vshrl.u32 %v2726, 7
    %v2728 = vsub.s32 0, %v2727
    %v2729 = vrot.slane %v2700, %v2728
    %v2730 = vlaneseq
    %v2731 = vshrl.u32 %v2730, 7
    %v2732 = vsub.s32 0, %v2731
    %v2733 = vrot.slane %v2705, %v2732
    %v2734 = vmul.f32 %v2708, %v2713
    %v2735 = vmul.f32 %v2708, %v2717
    %v2736 = vmul.f32 %v2708, %v2721
    %v2737 = vmul.f32 %v2708, %v2725
    %v2738 = vmul.f32 %v2708, %v2729
    %v2739 = vmul.f32 %v2708, %v2733
    %v2740 = vadd.f32 %v2682, %v2734
    %v2741 = vadd.f32 %v2683, %v2735
    %v2742 = vadd.f32 %v2684, %v2736
    %v2743 = vadd.f32 %v2685, %v2737
    %v2744 = vadd.f32 %v2686, %v2738
    %v2745 = vadd.f32 %v2687, %v2739
    %2746 = vset.pattern.permute.xlu0 21
    %2747 = vperm.xlu0 %2746, %v46
    %v2748 = vpop.permute.xlu0 %2747
    %v2750 = vlaneseq
    %v2751 = vshrl.u32 %v2750, 7
    %v2752 = vsub.s32 1, %v2751
    %v2753 = vrot.slane %v2704, %v2752
    %v2754 = vlaneseq
    %v2755 = vshrl.u32 %v2754, 7
    %v2756 = vsub.s32 1, %v2755
    %v2757 = vrot.slane %v2703, %v2756
    %v2758 = vlaneseq
    %v2759 = vshrl.u32 %v2758, 7
    %v2760 = vsub.s32 1, %v2759
    %v2761 = vrot.slane %v2702, %v2760
    %v2762 = vlaneseq
    %v2763 = vshrl.u32 %v2762, 7
    %v2764 = vsub.s32 1, %v2763
    %v2765 = vrot.slane %v2701, %v2764
    %v2766 = vlaneseq
    %v2767 = vshrl.u32 %v2766, 7
    %v2768 = vsub.s32 1, %v2767
    %v2769 = vrot.slane %v2700, %v2768
    %v2770 = vlaneseq
    %v2771 = vshrl.u32 %v2770, 7
    %v2772 = vsub.s32 1, %v2771
    %v2773 = vrot.slane %v2705, %v2772
    %v2774 = vmul.f32 %v2748, %v2753
    %v2775 = vmul.f32 %v2748, %v2757
    %v2776 = vmul.f32 %v2748, %v2761
    %v2777 = vmul.f32 %v2748, %v2765
    %v2778 = vmul.f32 %v2748, %v2769
    %v2779 = vmul.f32 %v2748, %v2773
    %v2780 = vadd.f32 %v2740, %v2774
    %v2781 = vadd.f32 %v2741, %v2775
    %v2782 = vadd.f32 %v2742, %v2776
    %v2783 = vadd.f32 %v2743, %v2777
    %v2784 = vadd.f32 %v2744, %v2778
    %v2785 = vadd.f32 %v2745, %v2779
    %2786 = vset.pattern.permute.xlu0 22
    %2787 = vperm.xlu0 %2786, %v46
    %v2788 = vpop.permute.xlu0 %2787
    %v2790 = vlaneseq
    %v2791 = vshrl.u32 %v2790, 7
    %v2792 = vsub.s32 2, %v2791
    %v2793 = vrot.slane %v2704, %v2792
    %v2794 = vlaneseq
    %v2795 = vshrl.u32 %v2794, 7
    %v2796 = vsub.s32 2, %v2795
    %v2797 = vrot.slane %v2703, %v2796
    %v2798 = vlaneseq
    %v2799 = vshrl.u32 %v2798, 7
    %v2800 = vsub.s32 2, %v2799
    %v2801 = vrot.slane %v2702, %v2800
    %v2802 = vlaneseq
    %v2803 = vshrl.u32 %v2802, 7
    %v2804 = vsub.s32 2, %v2803
    %v2805 = vrot.slane %v2701, %v2804
    %v2806 = vlaneseq
    %v2807 = vshrl.u32 %v2806, 7
    %v2808 = vsub.s32 2, %v2807
    %v2809 = vrot.slane %v2700, %v2808
    %v2810 = vlaneseq
    %v2811 = vshrl.u32 %v2810, 7
    %v2812 = vsub.s32 2, %v2811
    %v2813 = vrot.slane %v2705, %v2812
    %v2814 = vmul.f32 %v2788, %v2793
    %v2815 = vmul.f32 %v2788, %v2797
    %v2816 = vmul.f32 %v2788, %v2801
    %v2817 = vmul.f32 %v2788, %v2805
    %v2818 = vmul.f32 %v2788, %v2809
    %v2819 = vmul.f32 %v2788, %v2813
    %v2820 = vadd.f32 %v2780, %v2814
    %v2821 = vadd.f32 %v2781, %v2815
    %v2822 = vadd.f32 %v2782, %v2816
    %v2823 = vadd.f32 %v2783, %v2817
    %v2824 = vadd.f32 %v2784, %v2818
    %v2825 = vadd.f32 %v2785, %v2819
    %2826 = vset.pattern.permute.xlu0 23
    %2827 = vperm.xlu0 %2826, %v46
    %v2828 = vpop.permute.xlu0 %2827
    %v2830 = vlaneseq
    %v2831 = vshrl.u32 %v2830, 7
    %v2832 = vsub.s32 3, %v2831
    %v2833 = vrot.slane %v2704, %v2832
    %v2834 = vlaneseq
    %v2835 = vshrl.u32 %v2834, 7
    %v2836 = vsub.s32 3, %v2835
    %v2837 = vrot.slane %v2703, %v2836
    %v2838 = vlaneseq
    %v2839 = vshrl.u32 %v2838, 7
    %v2840 = vsub.s32 3, %v2839
    %v2841 = vrot.slane %v2702, %v2840
    %v2842 = vlaneseq
    %v2843 = vshrl.u32 %v2842, 7
    %v2844 = vsub.s32 3, %v2843
    %v2845 = vrot.slane %v2701, %v2844
    %v2846 = vlaneseq
    %v2847 = vshrl.u32 %v2846, 7
    %v2848 = vsub.s32 3, %v2847
    %v2849 = vrot.slane %v2700, %v2848
    %v2850 = vlaneseq
    %v2851 = vshrl.u32 %v2850, 7
    %v2852 = vsub.s32 3, %v2851
    %v2853 = vrot.slane %v2705, %v2852
    %v2854 = vmul.f32 %v2828, %v2833
    %v2855 = vmul.f32 %v2828, %v2837
    %v2856 = vmul.f32 %v2828, %v2841
    %v2857 = vmul.f32 %v2828, %v2845
    %v2858 = vmul.f32 %v2828, %v2849
    %v2859 = vmul.f32 %v2828, %v2853
    %v2860 = vadd.f32 %v2820, %v2854
    %v2861 = vadd.f32 %v2821, %v2855
    %v2862 = vadd.f32 %v2822, %v2856
    %v2863 = vadd.f32 %v2823, %v2857
    %v2864 = vadd.f32 %v2824, %v2858
    %v2865 = vadd.f32 %v2825, %v2859
    %2866 = vrot.lane.b32.xlu0 %v1815, 111
    %v2867 = vpop.permute.xlu0 %2866
    %2868 = vrot.lane.b32.xlu0 %v1816, 111
    %v2869 = vpop.permute.xlu0 %2868
    %2870 = vrot.lane.b32.xlu0 %v1817, 111
    %v2871 = vpop.permute.xlu0 %2870
    %2872 = vrot.lane.b32.xlu0 %v1818, 111
    %v2873 = vpop.permute.xlu0 %2872
    %2874 = vrot.lane.b32.xlu0 %v1819, 111
    %v2875 = vpop.permute.xlu0 %2874
    %2876 = vrot.lane.b32.xlu0 %v1820, 111
    %v2877 = vpop.permute.xlu0 %2876
    %v2878 = vsel %vm1241, %v2875, %v2877
    %v2879 = vsel %vm1241, %v2873, %v2875
    %v2880 = vsel %vm1241, %v2871, %v2873
    %v2881 = vsel %vm1241, %v2869, %v2871
    %v2882 = vsel %vm1241, %v2867, %v2869
    %v2883 = vsel %vm1241, %v2877, %v2867
    %2884 = vset.pattern.permute.xlu0 24
    %2885 = vperm.xlu0 %2884, %v46
    %v2886 = vpop.permute.xlu0 %2885
    %v2888 = vlaneseq
    %v2889 = vshrl.u32 %v2888, 7
    %v2890 = vsub.s32 0, %v2889
    %v2891 = vrot.slane %v2882, %v2890
    %v2892 = vlaneseq
    %v2893 = vshrl.u32 %v2892, 7
    %v2894 = vsub.s32 0, %v2893
    %v2895 = vrot.slane %v2881, %v2894
    %v2896 = vlaneseq
    %v2897 = vshrl.u32 %v2896, 7
    %v2898 = vsub.s32 0, %v2897
    %v2899 = vrot.slane %v2880, %v2898
    %v2900 = vlaneseq
    %v2901 = vshrl.u32 %v2900, 7
    %v2902 = vsub.s32 0, %v2901
    %v2903 = vrot.slane %v2879, %v2902
    %v2904 = vlaneseq
    %v2905 = vshrl.u32 %v2904, 7
    %v2906 = vsub.s32 0, %v2905
    %v2907 = vrot.slane %v2878, %v2906
    %v2908 = vlaneseq
    %v2909 = vshrl.u32 %v2908, 7
    %v2910 = vsub.s32 0, %v2909
    %v2911 = vrot.slane %v2883, %v2910
    %v2912 = vmul.f32 %v2886, %v2891
    %v2913 = vmul.f32 %v2886, %v2895
    %v2914 = vmul.f32 %v2886, %v2899
    %v2915 = vmul.f32 %v2886, %v2903
    %v2916 = vmul.f32 %v2886, %v2907
    %v2917 = vmul.f32 %v2886, %v2911
    %v2918 = vadd.f32 %v2860, %v2912
    %v2919 = vadd.f32 %v2861, %v2913
    %v2920 = vadd.f32 %v2862, %v2914
    %v2921 = vadd.f32 %v2863, %v2915
    %v2922 = vadd.f32 %v2864, %v2916
    %v2923 = vadd.f32 %v2865, %v2917
    %2924 = vset.pattern.permute.xlu0 25
    %2925 = vperm.xlu0 %2924, %v46
    %v2926 = vpop.permute.xlu0 %2925
    %v2928 = vlaneseq
    %v2929 = vshrl.u32 %v2928, 7
    %v2930 = vsub.s32 1, %v2929
    %v2931 = vrot.slane %v2882, %v2930
    %v2932 = vlaneseq
    %v2933 = vshrl.u32 %v2932, 7
    %v2934 = vsub.s32 1, %v2933
    %v2935 = vrot.slane %v2881, %v2934
    %v2936 = vlaneseq
    %v2937 = vshrl.u32 %v2936, 7
    %v2938 = vsub.s32 1, %v2937
    %v2939 = vrot.slane %v2880, %v2938
    %v2940 = vlaneseq
    %v2941 = vshrl.u32 %v2940, 7
    %v2942 = vsub.s32 1, %v2941
    %v2943 = vrot.slane %v2879, %v2942
    %v2944 = vlaneseq
    %v2945 = vshrl.u32 %v2944, 7
    %v2946 = vsub.s32 1, %v2945
    %v2947 = vrot.slane %v2878, %v2946
    %v2948 = vlaneseq
    %v2949 = vshrl.u32 %v2948, 7
    %v2950 = vsub.s32 1, %v2949
    %v2951 = vrot.slane %v2883, %v2950
    %v2952 = vmul.f32 %v2926, %v2931
    %v2953 = vmul.f32 %v2926, %v2935
    %v2954 = vmul.f32 %v2926, %v2939
    %v2955 = vmul.f32 %v2926, %v2943
    %v2956 = vmul.f32 %v2926, %v2947
    %v2957 = vmul.f32 %v2926, %v2951
    %v2958 = vadd.f32 %v2918, %v2952
    %v2959 = vadd.f32 %v2919, %v2953
    %v2960 = vadd.f32 %v2920, %v2954
    %v2961 = vadd.f32 %v2921, %v2955
    %v2962 = vadd.f32 %v2922, %v2956
    %v2963 = vadd.f32 %v2923, %v2957
    %2964 = vset.pattern.permute.xlu0 26
    %2965 = vperm.xlu0 %2964, %v46
    %v2966 = vpop.permute.xlu0 %2965
    %v2968 = vlaneseq
    %v2969 = vshrl.u32 %v2968, 7
    %v2970 = vsub.s32 2, %v2969
    %v2971 = vrot.slane %v2882, %v2970
    %v2972 = vlaneseq
    %v2973 = vshrl.u32 %v2972, 7
    %v2974 = vsub.s32 2, %v2973
    %v2975 = vrot.slane %v2881, %v2974
    %v2976 = vlaneseq
    %v2977 = vshrl.u32 %v2976, 7
    %v2978 = vsub.s32 2, %v2977
    %v2979 = vrot.slane %v2880, %v2978
    %v2980 = vlaneseq
    %v2981 = vshrl.u32 %v2980, 7
    %v2982 = vsub.s32 2, %v2981
    %v2983 = vrot.slane %v2879, %v2982
    %v2984 = vlaneseq
    %v2985 = vshrl.u32 %v2984, 7
    %v2986 = vsub.s32 2, %v2985
    %v2987 = vrot.slane %v2878, %v2986
    %v2988 = vlaneseq
    %v2989 = vshrl.u32 %v2988, 7
    %v2990 = vsub.s32 2, %v2989
    %v2991 = vrot.slane %v2883, %v2990
    %v2992 = vmul.f32 %v2966, %v2971
    %v2993 = vmul.f32 %v2966, %v2975
    %v2994 = vmul.f32 %v2966, %v2979
    %v2995 = vmul.f32 %v2966, %v2983
    %v2996 = vmul.f32 %v2966, %v2987
    %v2997 = vmul.f32 %v2966, %v2991
    %v2998 = vadd.f32 %v2958, %v2992
    %v2999 = vadd.f32 %v2959, %v2993
    %v3000 = vadd.f32 %v2960, %v2994
    %v3001 = vadd.f32 %v2961, %v2995
    %v3002 = vadd.f32 %v2962, %v2996
    %v3003 = vadd.f32 %v2963, %v2997
    %3004 = vset.pattern.permute.xlu0 27
    %3005 = vperm.xlu0 %3004, %v46
    %v3006 = vpop.permute.xlu0 %3005
    %v3008 = vlaneseq
    %v3009 = vshrl.u32 %v3008, 7
    %v3010 = vsub.s32 3, %v3009
    %v3011 = vrot.slane %v2882, %v3010
    %v3012 = vlaneseq
    %v3013 = vshrl.u32 %v3012, 7
    %v3014 = vsub.s32 3, %v3013
    %v3015 = vrot.slane %v2881, %v3014
    %v3016 = vlaneseq
    %v3017 = vshrl.u32 %v3016, 7
    %v3018 = vsub.s32 3, %v3017
    %v3019 = vrot.slane %v2880, %v3018
    %v3020 = vlaneseq
    %v3021 = vshrl.u32 %v3020, 7
    %v3022 = vsub.s32 3, %v3021
    %v3023 = vrot.slane %v2879, %v3022
    %v3024 = vlaneseq
    %v3025 = vshrl.u32 %v3024, 7
    %v3026 = vsub.s32 3, %v3025
    %v3027 = vrot.slane %v2878, %v3026
    %v3028 = vlaneseq
    %v3029 = vshrl.u32 %v3028, 7
    %v3030 = vsub.s32 3, %v3029
    %v3031 = vrot.slane %v2883, %v3030
    %v3032 = vmul.f32 %v3006, %v3011
    %v3033 = vmul.f32 %v3006, %v3015
    %v3034 = vmul.f32 %v3006, %v3019
    %v3035 = vmul.f32 %v3006, %v3023
    %v3036 = vmul.f32 %v3006, %v3027
    %v3037 = vmul.f32 %v3006, %v3031
    %v3038 = vadd.f32 %v2998, %v3032
    %v3039 = vadd.f32 %v2999, %v3033
    %v3040 = vadd.f32 %v3000, %v3034
    %v3041 = vadd.f32 %v3001, %v3035
    %v3042 = vadd.f32 %v3002, %v3036
    %v3043 = vadd.f32 %v3003, %v3037
    %3044 = vrot.lane.b32.xlu0 %v1815, 110
    %v3045 = vpop.permute.xlu0 %3044
    %3046 = vrot.lane.b32.xlu0 %v1816, 110
    %v3047 = vpop.permute.xlu0 %3046
    %3048 = vrot.lane.b32.xlu0 %v1817, 110
    %v3049 = vpop.permute.xlu0 %3048
    %3050 = vrot.lane.b32.xlu0 %v1818, 110
    %v3051 = vpop.permute.xlu0 %3050
    %3052 = vrot.lane.b32.xlu0 %v1819, 110
    %v3053 = vpop.permute.xlu0 %3052
    %3054 = vrot.lane.b32.xlu0 %v1820, 110
    %v3055 = vpop.permute.xlu0 %3054
    %v3056 = vsel %vm1420, %v3053, %v3055
    %v3057 = vsel %vm1420, %v3051, %v3053
    %v3058 = vsel %vm1420, %v3049, %v3051
    %v3059 = vsel %vm1420, %v3047, %v3049
    %v3060 = vsel %vm1420, %v3045, %v3047
    %v3061 = vsel %vm1420, %v3055, %v3045
    %3062 = vset.pattern.permute.xlu0 28
    %3063 = vperm.xlu0 %3062, %v46
    %v3064 = vpop.permute.xlu0 %3063
    %v3066 = vlaneseq
    %v3067 = vshrl.u32 %v3066, 7
    %v3068 = vsub.s32 0, %v3067
    %v3069 = vrot.slane %v3060, %v3068
    %v3070 = vlaneseq
    %v3071 = vshrl.u32 %v3070, 7
    %v3072 = vsub.s32 0, %v3071
    %v3073 = vrot.slane %v3059, %v3072
    %v3074 = vlaneseq
    %v3075 = vshrl.u32 %v3074, 7
    %v3076 = vsub.s32 0, %v3075
    %v3077 = vrot.slane %v3058, %v3076
    %v3078 = vlaneseq
    %v3079 = vshrl.u32 %v3078, 7
    %v3080 = vsub.s32 0, %v3079
    %v3081 = vrot.slane %v3057, %v3080
    %v3082 = vlaneseq
    %v3083 = vshrl.u32 %v3082, 7
    %v3084 = vsub.s32 0, %v3083
    %v3085 = vrot.slane %v3056, %v3084
    %v3086 = vlaneseq
    %v3087 = vshrl.u32 %v3086, 7
    %v3088 = vsub.s32 0, %v3087
    %v3089 = vrot.slane %v3061, %v3088
    %v3090 = vmul.f32 %v3064, %v3069
    %v3091 = vmul.f32 %v3064, %v3073
    %v3092 = vmul.f32 %v3064, %v3077
    %v3093 = vmul.f32 %v3064, %v3081
    %v3094 = vmul.f32 %v3064, %v3085
    %v3095 = vmul.f32 %v3064, %v3089
    %v3096 = vadd.f32 %v3038, %v3090
    %v3097 = vadd.f32 %v3039, %v3091
    %v3098 = vadd.f32 %v3040, %v3092
    %v3099 = vadd.f32 %v3041, %v3093
    %v3100 = vadd.f32 %v3042, %v3094
    %v3101 = vadd.f32 %v3043, %v3095
    %3102 = vset.pattern.permute.xlu0 29
    %3103 = vperm.xlu0 %3102, %v46
    %v3104 = vpop.permute.xlu0 %3103
    %v3106 = vlaneseq
    %v3107 = vshrl.u32 %v3106, 7
    %v3108 = vsub.s32 1, %v3107
    %v3109 = vrot.slane %v3060, %v3108
    %v3110 = vlaneseq
    %v3111 = vshrl.u32 %v3110, 7
    %v3112 = vsub.s32 1, %v3111
    %v3113 = vrot.slane %v3059, %v3112
    %v3114 = vlaneseq
    %v3115 = vshrl.u32 %v3114, 7
    %v3116 = vsub.s32 1, %v3115
    %v3117 = vrot.slane %v3058, %v3116
    %v3118 = vlaneseq
    %v3119 = vshrl.u32 %v3118, 7
    %v3120 = vsub.s32 1, %v3119
    %v3121 = vrot.slane %v3057, %v3120
    %v3122 = vlaneseq
    %v3123 = vshrl.u32 %v3122, 7
    %v3124 = vsub.s32 1, %v3123
    %v3125 = vrot.slane %v3056, %v3124
    %v3126 = vlaneseq
    %v3127 = vshrl.u32 %v3126, 7
    %v3128 = vsub.s32 1, %v3127
    %v3129 = vrot.slane %v3061, %v3128
    %v3130 = vmul.f32 %v3104, %v3109
    %v3131 = vmul.f32 %v3104, %v3113
    %v3132 = vmul.f32 %v3104, %v3117
    %v3133 = vmul.f32 %v3104, %v3121
    %v3134 = vmul.f32 %v3104, %v3125
    %v3135 = vmul.f32 %v3104, %v3129
    %v3136 = vadd.f32 %v3096, %v3130
    %v3137 = vadd.f32 %v3097, %v3131
    %v3138 = vadd.f32 %v3098, %v3132
    %v3139 = vadd.f32 %v3099, %v3133
    %v3140 = vadd.f32 %v3100, %v3134
    %v3141 = vadd.f32 %v3101, %v3135
    %3142 = vset.pattern.permute.xlu0 30
    %3143 = vperm.xlu0 %3142, %v46
    %v3144 = vpop.permute.xlu0 %3143
    %v3146 = vlaneseq
    %v3147 = vshrl.u32 %v3146, 7
    %v3148 = vsub.s32 2, %v3147
    %v3149 = vrot.slane %v3060, %v3148
    %v3150 = vlaneseq
    %v3151 = vshrl.u32 %v3150, 7
    %v3152 = vsub.s32 2, %v3151
    %v3153 = vrot.slane %v3059, %v3152
    %v3154 = vlaneseq
    %v3155 = vshrl.u32 %v3154, 7
    %v3156 = vsub.s32 2, %v3155
    %v3157 = vrot.slane %v3058, %v3156
    %v3158 = vlaneseq
    %v3159 = vshrl.u32 %v3158, 7
    %v3160 = vsub.s32 2, %v3159
    %v3161 = vrot.slane %v3057, %v3160
    %v3162 = vlaneseq
    %v3163 = vshrl.u32 %v3162, 7
    %v3164 = vsub.s32 2, %v3163
    %v3165 = vrot.slane %v3056, %v3164
    %v3166 = vlaneseq
    %v3167 = vshrl.u32 %v3166, 7
    %v3168 = vsub.s32 2, %v3167
    %v3169 = vrot.slane %v3061, %v3168
    %v3170 = vmul.f32 %v3144, %v3149
    %v3171 = vmul.f32 %v3144, %v3153
    %v3172 = vmul.f32 %v3144, %v3157
    %v3173 = vmul.f32 %v3144, %v3161
    %v3174 = vmul.f32 %v3144, %v3165
    %v3175 = vmul.f32 %v3144, %v3169
    %v3176 = vadd.f32 %v3136, %v3170
    %v3177 = vadd.f32 %v3137, %v3171
    %v3178 = vadd.f32 %v3138, %v3172
    %v3179 = vadd.f32 %v3139, %v3173
    %v3180 = vadd.f32 %v3140, %v3174
    %v3181 = vadd.f32 %v3141, %v3175
    %3182 = vset.pattern.permute.xlu0 31
    %3183 = vperm.xlu0 %3182, %v46
    %v3184 = vpop.permute.xlu0 %3183
    %v3186 = vlaneseq
    %v3187 = vshrl.u32 %v3186, 7
    %v3188 = vsub.s32 3, %v3187
    %v3189 = vrot.slane %v3060, %v3188
    %v3190 = vlaneseq
    %v3191 = vshrl.u32 %v3190, 7
    %v3192 = vsub.s32 3, %v3191
    %v3193 = vrot.slane %v3059, %v3192
    %v3194 = vlaneseq
    %v3195 = vshrl.u32 %v3194, 7
    %v3196 = vsub.s32 3, %v3195
    %v3197 = vrot.slane %v3058, %v3196
    %v3198 = vlaneseq
    %v3199 = vshrl.u32 %v3198, 7
    %v3200 = vsub.s32 3, %v3199
    %v3201 = vrot.slane %v3057, %v3200
    %v3202 = vlaneseq
    %v3203 = vshrl.u32 %v3202, 7
    %v3204 = vsub.s32 3, %v3203
    %v3205 = vrot.slane %v3056, %v3204
    %v3206 = vlaneseq
    %v3207 = vshrl.u32 %v3206, 7
    %v3208 = vsub.s32 3, %v3207
    %v3209 = vrot.slane %v3061, %v3208
    %v3210 = vmul.f32 %v3184, %v3189
    %v3211 = vmul.f32 %v3184, %v3193
    %v3212 = vmul.f32 %v3184, %v3197
    %v3213 = vmul.f32 %v3184, %v3201
    %v3214 = vmul.f32 %v3184, %v3205
    %v3215 = vmul.f32 %v3184, %v3209
    %v3216 = vadd.f32 %v3176, %v3210
    %v3217 = vadd.f32 %v3177, %v3211
    %v3218 = vadd.f32 %v3178, %v3212
    %v3219 = vadd.f32 %v3179, %v3213
    %v3220 = vadd.f32 %v3180, %v3214
    %v3221 = vadd.f32 %v3181, %v3215
    %3222 = vrot.lane.b32.xlu0 %v1815, 109
    %v3223 = vpop.permute.xlu0 %3222
    %3224 = vrot.lane.b32.xlu0 %v1816, 109
    %v3225 = vpop.permute.xlu0 %3224
    %3226 = vrot.lane.b32.xlu0 %v1817, 109
    %v3227 = vpop.permute.xlu0 %3226
    %3228 = vrot.lane.b32.xlu0 %v1818, 109
    %v3229 = vpop.permute.xlu0 %3228
    %3230 = vrot.lane.b32.xlu0 %v1819, 109
    %v3231 = vpop.permute.xlu0 %3230
    %3232 = vrot.lane.b32.xlu0 %v1820, 109
    %v3233 = vpop.permute.xlu0 %3232
    %v3234 = vsel %vm1599, %v3231, %v3233
    %v3235 = vsel %vm1599, %v3229, %v3231
    %v3236 = vsel %vm1599, %v3227, %v3229
    %v3237 = vsel %vm1599, %v3225, %v3227
    %v3238 = vsel %vm1599, %v3223, %v3225
    %v3239 = vsel %vm1599, %v3233, %v3223
    %3240 = vset.pattern.permute.xlu0 32
    %3241 = vperm.xlu0 %3240, %v46
    %v3242 = vpop.permute.xlu0 %3241
    %v3244 = vlaneseq
    %v3245 = vshrl.u32 %v3244, 7
    %v3246 = vsub.s32 0, %v3245
    %v3247 = vrot.slane %v3238, %v3246
    %v3248 = vlaneseq
    %v3249 = vshrl.u32 %v3248, 7
    %v3250 = vsub.s32 0, %v3249
    %v3251 = vrot.slane %v3237, %v3250
    %v3252 = vlaneseq
    %v3253 = vshrl.u32 %v3252, 7
    %v3254 = vsub.s32 0, %v3253
    %v3255 = vrot.slane %v3236, %v3254
    %v3256 = vlaneseq
    %v3257 = vshrl.u32 %v3256, 7
    %v3258 = vsub.s32 0, %v3257
    %v3259 = vrot.slane %v3235, %v3258
    %v3260 = vlaneseq
    %v3261 = vshrl.u32 %v3260, 7
    %v3262 = vsub.s32 0, %v3261
    %v3263 = vrot.slane %v3234, %v3262
    %v3264 = vlaneseq
    %v3265 = vshrl.u32 %v3264, 7
    %v3266 = vsub.s32 0, %v3265
    %v3267 = vrot.slane %v3239, %v3266
    %v3268 = vmul.f32 %v3242, %v3247
    %v3269 = vmul.f32 %v3242, %v3251
    %v3270 = vmul.f32 %v3242, %v3255
    %v3271 = vmul.f32 %v3242, %v3259
    %v3272 = vmul.f32 %v3242, %v3263
    %v3273 = vmul.f32 %v3242, %v3267
    %v3274 = vadd.f32 %v3216, %v3268
    %v3275 = vadd.f32 %v3217, %v3269
    %v3276 = vadd.f32 %v3218, %v3270
    %v3277 = vadd.f32 %v3219, %v3271
    %v3278 = vadd.f32 %v3220, %v3272
    %v3279 = vadd.f32 %v3221, %v3273
    %3280 = vset.pattern.permute.xlu0 33
    %3281 = vperm.xlu0 %3280, %v46
    %v3282 = vpop.permute.xlu0 %3281
    %v3284 = vlaneseq
    %v3285 = vshrl.u32 %v3284, 7
    %v3286 = vsub.s32 1, %v3285
    %v3287 = vrot.slane %v3238, %v3286
    %v3288 = vlaneseq
    %v3289 = vshrl.u32 %v3288, 7
    %v3290 = vsub.s32 1, %v3289
    %v3291 = vrot.slane %v3237, %v3290
    %v3292 = vlaneseq
    %v3293 = vshrl.u32 %v3292, 7
    %v3294 = vsub.s32 1, %v3293
    %v3295 = vrot.slane %v3236, %v3294
    %v3296 = vlaneseq
    %v3297 = vshrl.u32 %v3296, 7
    %v3298 = vsub.s32 1, %v3297
    %v3299 = vrot.slane %v3235, %v3298
    %v3300 = vlaneseq
    %v3301 = vshrl.u32 %v3300, 7
    %v3302 = vsub.s32 1, %v3301
    %v3303 = vrot.slane %v3234, %v3302
    %v3304 = vlaneseq
    %v3305 = vshrl.u32 %v3304, 7
    %v3306 = vsub.s32 1, %v3305
    %v3307 = vrot.slane %v3239, %v3306
    %v3308 = vmul.f32 %v3282, %v3287
    %v3309 = vmul.f32 %v3282, %v3291
    %v3310 = vmul.f32 %v3282, %v3295
    %v3311 = vmul.f32 %v3282, %v3299
    %v3312 = vmul.f32 %v3282, %v3303
    %v3313 = vmul.f32 %v3282, %v3307
    %v3314 = vadd.f32 %v3274, %v3308
    %v3315 = vadd.f32 %v3275, %v3309
    %v3316 = vadd.f32 %v3276, %v3310
    %v3317 = vadd.f32 %v3277, %v3311
    %v3318 = vadd.f32 %v3278, %v3312
    %v3319 = vadd.f32 %v3279, %v3313
    %3320 = vset.pattern.permute.xlu0 34
    %3321 = vperm.xlu0 %3320, %v46
    %v3322 = vpop.permute.xlu0 %3321
    %v3324 = vlaneseq
    %v3325 = vshrl.u32 %v3324, 7
    %v3326 = vsub.s32 2, %v3325
    %v3327 = vrot.slane %v3238, %v3326
    %v3328 = vlaneseq
    %v3329 = vshrl.u32 %v3328, 7
    %v3330 = vsub.s32 2, %v3329
    %v3331 = vrot.slane %v3237, %v3330
    %v3332 = vlaneseq
    %v3333 = vshrl.u32 %v3332, 7
    %v3334 = vsub.s32 2, %v3333
    %v3335 = vrot.slane %v3236, %v3334
    %v3336 = vlaneseq
    %v3337 = vshrl.u32 %v3336, 7
    %v3338 = vsub.s32 2, %v3337
    %v3339 = vrot.slane %v3235, %v3338
    %v3340 = vlaneseq
    %v3341 = vshrl.u32 %v3340, 7
    %v3342 = vsub.s32 2, %v3341
    %v3343 = vrot.slane %v3234, %v3342
    %v3344 = vlaneseq
    %v3345 = vshrl.u32 %v3344, 7
    %v3346 = vsub.s32 2, %v3345
    %v3347 = vrot.slane %v3239, %v3346
    %v3348 = vmul.f32 %v3322, %v3327
    %v3349 = vmul.f32 %v3322, %v3331
    %v3350 = vmul.f32 %v3322, %v3335
    %v3351 = vmul.f32 %v3322, %v3339
    %v3352 = vmul.f32 %v3322, %v3343
    %v3353 = vmul.f32 %v3322, %v3347
    %v3354 = vadd.f32 %v3314, %v3348
    %v3355 = vadd.f32 %v3315, %v3349
    %v3356 = vadd.f32 %v3316, %v3350
    %v3357 = vadd.f32 %v3317, %v3351
    %v3358 = vadd.f32 %v3318, %v3352
    %v3359 = vadd.f32 %v3319, %v3353
    %3360 = vset.pattern.permute.xlu0 35
    %3361 = vperm.xlu0 %3360, %v46
    %v3362 = vpop.permute.xlu0 %3361
    %v3364 = vlaneseq
    %v3365 = vshrl.u32 %v3364, 7
    %v3366 = vsub.s32 3, %v3365
    %v3367 = vrot.slane %v3238, %v3366
    %v3368 = vlaneseq
    %v3369 = vshrl.u32 %v3368, 7
    %v3370 = vsub.s32 3, %v3369
    %v3371 = vrot.slane %v3237, %v3370
    %v3372 = vlaneseq
    %v3373 = vshrl.u32 %v3372, 7
    %v3374 = vsub.s32 3, %v3373
    %v3375 = vrot.slane %v3236, %v3374
    %v3376 = vlaneseq
    %v3377 = vshrl.u32 %v3376, 7
    %v3378 = vsub.s32 3, %v3377
    %v3379 = vrot.slane %v3235, %v3378
    %v3380 = vlaneseq
    %v3381 = vshrl.u32 %v3380, 7
    %v3382 = vsub.s32 3, %v3381
    %v3383 = vrot.slane %v3234, %v3382
    %v3384 = vlaneseq
    %v3385 = vshrl.u32 %v3384, 7
    %v3386 = vsub.s32 3, %v3385
    %v3387 = vrot.slane %v3239, %v3386
    %v3388 = vmul.f32 %v3362, %v3367
    %v3389 = vmul.f32 %v3362, %v3371
    %v3390 = vmul.f32 %v3362, %v3375
    %v3391 = vmul.f32 %v3362, %v3379
    %v3392 = vmul.f32 %v3362, %v3383
    %v3393 = vmul.f32 %v3362, %v3387
    %v3394 = vadd.f32 %v3354, %v3388
    %v3395 = vadd.f32 %v3355, %v3389
    %v3396 = vadd.f32 %v3356, %v3390
    %v3397 = vadd.f32 %v3357, %v3391
    %v3398 = vadd.f32 %v3358, %v3392
    %v3399 = vadd.f32 %v3359, %v3393
    %v3400 = vadd.f32 %v3394, %v42
    %v3401 = vadd.f32 %v3395, %v51
    %v3402 = vadd.f32 %v3396, %v43
    %v3403 = vadd.f32 %v3397, %v52
    %v3404 = vadd.f32 %v3398, %v44
    %v3405 = vadd.f32 %v3399, %v53
    %v3412 = vcombine.low %v3400, %v3401
    %v3413 = vcombine.low %v3402, %v3403
    %v3414 = vcombine.low %v3404, %v3405
    %3418 = vst [vmem:[#allocation7] sm:$0xff] %v3412
    %3419 = vst [vmem:[#allocation7 + $0x8] sm:$0xff] %v3413
    %3420 = vst [vmem:[#allocation7 + $0x10] sm:$0xff] %v3414
    // Predicated region
    $region26: #{tpu_custom_call.1} parent=1 // pred_check
      _
    $region27: #{tpu_custom_call.1} parent=1 // pred_check_branch
      %3422 = sbr.rel (0) target = $region29
    $region28: #{tpu_custom_call.1} parent=1 // pred_region
      %s3424 = ssub.s32 384, 384
      %3425 = vsyncadd [#allocation4], %s3424
      %s3427 = sshll.u32 [#allocation7], 4
      %s3428 = int_to_ptr.vmem [resolvable:$true] %s3427
      %3430 = dma.vmem_to_hbm [thread:$0]  %s3428, 384, %s4, [#allocation4]
    $region29: #{tpu_custom_call.1} parent=1 // pred_fallthru
      _
    // Predicated region
    $region30: #{tpu_custom_call.1} parent=1 // pred_check
      _
    $region31: #{tpu_custom_call.1} parent=1 // pred_check_branch
      %3432 = sbr.rel (0) target = $region33
    $region32: #{tpu_custom_call.1} parent=1 // pred_region
      %3433 = dma.done [#allocation4], 384
    $region33: #{tpu_custom_call.1} parent=1 // pred_fallthru
      _
    %3434 = vsyncpa [#allocation3], 1
    %3435 = vsyncpa [#allocation6], 1
    %3436 = vsyncpa [#allocation4], 1

</llo_original>
